<compile_context>
chip_gen: v7x
topology: tpu7x:2x2x1
jax: 0.10.0
libtpu: 0.0.40
codegen_flags: <defaults>
</compile_context>

<pallas_src>
import functools

import jax
import jax.numpy as jnp
from jax.experimental import pallas as pl
from jax.experimental.pallas import tpu as pltpu

EPS = 1e-5
LANES = 128    # final-output lane width (unmasked lane-dense stores; wrapper slices :Cout)
CK_MIN = 16    # conv2 reduction-dim padding (small, per review) -- NOT 128


# ---------------------------------------------------------------------------
# Fused ResBlock kernel (B images per grid step)
# ---------------------------------------------------------------------------
def _resblock_kernel(x_ref, wc_ref, b1_ref, w2_ref, bc_ref, o_ref,
                     y1p_ref, acc_ref, *, B, Ho, Wo, Ck):
    """
    x_ref   : (1, M, K1)          bf16  conv1 im2col, M = B*Ho*Wo, K1 = 9*Cin
    wc_ref  : (K1, 2*LANES)       bf16  combined stage-1 weights:
                                          cols [0:Cout)           -> 1x1 s2 shortcut (BN folded)
                                          cols [LANES:LANES+Cout) -> conv1 (BN folded)
    b1_ref  : (1, Ck)             f32   conv1 bias (BN folded), zero-padded
    w2_ref  : (9, Ck, LANES)      bf16  conv2 weights (BN folded), K padded only to Ck
    bc_ref  : (1, LANES)          f32   b2 + b_shortcut (BN folded), zero-padded
    o_ref   : (1, M, LANES)       bf16  lane-dense output block
    y1p_ref : (B, Ho+2, Wo+2, Ck) bf16  scratch: conv1 activation with zero border
    acc_ref : (M, LANES)          f32   VMEM accumulator
    """
    M = B * Ho * Wo

    # ---- stage 1: ONE MXU pass = all 9 conv1 taps (K = 9*Cin) + the 1x1 stride-2
    # projection shortcut (its weights occupy the centre-tap rows of the same RHS).
    r = jnp.dot(x_ref[0], wc_ref[...],
                preferred_element_type=jnp.float32)          # (M, 2*LANES)

    # Shortcut + folded (b2 + bs) pre-load the conv2 accumulator (review: fold the
    # residual into acc2 init instead of a separate z + s add at the end).
    acc_ref[...] = r[:, :LANES] + bc_ref[...]

    # conv1 + BN1 + ReLU; channel width stays Ck (= conv2's reduction dim, not 128).
    y1 = jnp.maximum(r[:, LANES:LANES + Ck] + b1_ref[...], 0.0).astype(jnp.bfloat16)

    # Stage y1 with a zero spatial border for conv2 (padding=1).  Per-step zero-fill is
    # kept because a program_id==0 one-time init is unsafe under megacore sharding of the
    # parallel grid axis; it is 16x cheaper than before (Ck=16 bf16 vs 128-lane f32).
    y1p_ref[...] = jnp.zeros_like(y1p_ref)
    y1p_ref[:, 1:Ho + 1, 1:Wo + 1, :] = y1.reshape(B, Ho, Wo, Ck)

    # ---- conv2: 3x3 stride 1 (+ folded BN2), 9 tap matmuls with K = Ck only ----------
    for kh in range(3):
        for kw in range(3):
            tap = y1p_ref[:, kh:kh + Ho, kw:kw + Wo, :].reshape(M, Ck)
            acc_ref[...] += jnp.dot(tap, w2_ref[kh * 3 + kw],
                                    preferred_element_type=jnp.float32)

    # residual already folded in; final ReLU, single unmasked lane-dense bf16 store
    o_ref[0] = jnp.maximum(acc_ref[...], 0.0).astype(o_ref.dtype)


# ---------------------------------------------------------------------------
# Wrapper: BN folding, im2col, weight packing, pallas_call plumbing
# ---------------------------------------------------------------------------
def _fold_bn(w, b, g, beta, mu, var):
    """Eval-mode BN folded into conv:  BN(conv(x, w) + b) == conv(x, w') + b'."""
    scale = g * jax.lax.rsqrt(var + EPS)                 # (Cout,)
    return w * scale, (b - mu) * scale + beta


def _vmem_limit_bytes():
    # Per-generation VMEM budget (v7x has half the VMEM of v5e/v6e); fall back to default.
    try:
        cap = pltpu.get_tpu_info().vmem_capacity_bytes
    except Exception:
        return None
    return int(min(cap // 2, 64 * 1024 * 1024))


@jax.jit
def resblock_pallas(x_nchw, p):
    """ResBlock(Cin, Cout, mapping='B') forward, eval-mode BN.  NCHW in / NCHW out."""
    N, Cin, H, W = x_nchw.shape
    Cout = p["w1"].shape[-1]
    assert H % 2 == 0 and W % 2 == 0, "stride-2 block expects even H, W"
    assert Cout <= LANES and Cin != Cout

    Ho, Wo = H // 2, W // 2
    M_img = Ho * Wo
    K1 = 9 * Cin
    Ck = max(CK_MIN, ((Cout + 7) // 8) * 8)              # conv2 reduction width (small)

    # Images per grid step: fill the MXU's M dim without blowing up live vregs.
    B = 1
    for cand in range(N, 0, -1):
        if N % cand == 0 and cand * M_img <= 256:
            B = cand
            break
    G = N // B
    Mstep = B * M_img

    # ---- XLA-side prep: NHWC, pad, conv1 im2col (stride 2), bf16 --------------------
    x = jnp.transpose(x_nchw, (0, 2, 3, 1))              # NHWC (channels -> minor)
    xp = jnp.pad(x, ((0, 0), (1, 1), (1, 1), (0, 0)))    # (N, H+2, W+2, Cin)
    taps = [xp[:, kh:kh + 2 * Ho:2, kw:kw + 2 * Wo:2, :]  # tap t = kh*3+kw
            for kh in range(3) for kw in range(3)]
    x_im = jnp.stack(taps, axis=3).reshape(N, M_img, K1)  # (N, M_img, 9*Cin)
    x_im = x_im.reshape(G, Mstep, K1).astype(jnp.bfloat16)

    # ---- fold eval-mode BatchNorm into conv weights / biases ------------------------
    w1f, b1f = _fold_bn(p["w1"], p["b1"], p["g1"], p["beta1"], p["mu1"], p["var1"])
    w2f, b2f = _fold_bn(p["w2"], p["b2"], p["g2"], p["beta2"], p["mu2"], p["var2"])
    wsf, bsf = _fold_bn(p["ws"], p["bs"], p["gs"], p["betas"], p["mus"], p["vars"])

    # Combined stage-1 RHS: shortcut weights in the output-aligned lane group [0:LANES),
    # conv1 weights in [LANES:LANES+Cout).  The shortcut input pixel x[2i,2j] is exactly
    # conv1's centre tap (t=4), so its weights occupy rows [4*Cin:5*Cin) of the im2col K.
    w1s = w1f.reshape(K1, Cout)
    wc = jnp.zeros((K1, 2 * LANES), jnp.float32)
    wc = wc.at[4 * Cin:5 * Cin, :Cout].set(wsf.reshape(Cin, Cout))
    wc = wc.at[:, LANES:LANES + Cout].set(w1s)
    wc = wc.astype(jnp.bfloat16)

    w2p = jnp.pad(w2f.reshape(9, Cout, Cout),
                  ((0, 0), (0, Ck - Cout), (0, LANES - Cout))).astype(jnp.bfloat16)
    b1p = jnp.pad(b1f, (0, Ck - Cout)).reshape(1, Ck)
    bcp = jnp.pad(b2f + bsf, (0, LANES - Cout)).reshape(1, LANES)

    kernel = functools.partial(_resblock_kernel, B=B, Ho=Ho, Wo=Wo, Ck=Ck)

    flops = G * Mstep * 2 * (K1 * 2 * LANES + 9 * Ck * LANES)
    bytes_accessed = (x_im.size * 2 + wc.size * 2 + w2p.size * 2
                      + (b1p.size + bcp.size) * 4 + G * Mstep * LANES * 2)

    out = pl.pallas_call(
        kernel,
        out_shape=jax.ShapeDtypeStruct((G, Mstep, LANES), jnp.bfloat16),
        grid_spec=pltpu.PrefetchScalarGridSpec(
            num_scalar_prefetch=0,
            grid=(G,),                                            # B images per grid step
            in_specs=[
                pl.BlockSpec((1, Mstep, K1), lambda g: (g, 0, 0)),
                pl.BlockSpec((K1, 2 * LANES), lambda g: (0, 0)),  # resident weights
                pl.BlockSpec((1, Ck), lambda g: (0, 0)),
                pl.BlockSpec((9, Ck, LANES), lambda g: (0, 0, 0)),
                pl.BlockSpec((1, LANES), lambda g: (0, 0)),
            ],
            out_specs=pl.BlockSpec((1, Mstep, LANES), lambda g: (g, 0, 0)),
            scratch_shapes=[
                pltpu.VMEM((B, Ho + 2, Wo + 2, Ck), jnp.bfloat16),  # padded y1
                pltpu.VMEM((Mstep, LANES), jnp.float32),            # conv2 accumulator
            ],
        ),
        compiler_params=pltpu.CompilerParams(
            dimension_semantics=("parallel",),       # steps are independent (distinct blocks)
            vmem_limit_bytes=_vmem_limit_bytes(),
        ),
        cost_estimate=pl.CostEstimate(
            flops=int(flops), transcendentals=0, bytes_accessed=int(bytes_accessed)),
    )(x_im, wc, b1p, w2p, bcp)

    # Drop channel padding, restore spatial layout, back to NCHW / f32.
    out = out.reshape(N, M_img, LANES)[:, :, :Cout].reshape(N, Ho, Wo, Cout)
    return jnp.transpose(out.astype(jnp.float32), (0, 3, 1, 2))


# ---------------------------------------------------------------------------
# Deterministic parameters (eval-mode BN running stats are synthetic)
# ---------------------------------------------------------------------------
def make_params(key, cin, cout):
    ks = jax.random.split(key, 12)
    scale = 0.1
    p = {}
    p["w1"] = scale * jax.random.normal(ks[0], (3, 3, cin, cout), jnp.float32)
    p["b1"] = scale * jax.random.normal(ks[1], (cout,), jnp.float32)
    p["g1"] = 1.0 + scale * jax.random.normal(ks[2], (cout,), jnp.float32)
    p["beta1"] = scale * jax.random.normal(ks[3], (cout,), jnp.float32)
    p["mu1"] = scale * jax.random.normal(ks[4], (cout,), jnp.float32)
    p["var1"] = 1.0 + 0.05 * jax.random.uniform(ks[5], (cout,), jnp.float32)
    p["w2"] = scale * jax.random.normal(ks[6], (3, 3, cout, cout), jnp.float32)
    p["b2"] = scale * jax.random.normal(ks[7], (cout,), jnp.float32)
    p["g2"] = 1.0 + scale * jax.random.normal(ks[8], (cout,), jnp.float32)
    p["beta2"] = scale * jax.random.normal(ks[9], (cout,), jnp.float32)
    p["mu2"] = scale * jax.random.normal(ks[10], (cout,), jnp.float32)
    p["var2"] = 1.0 + 0.05 * jax.random.uniform(ks[11], (cout,), jnp.float32)
    ks2 = jax.random.split(ks[0], 6)
    p["ws"] = scale * jax.random.normal(ks2[0], (1, 1, cin, cout), jnp.float32)
    p["bs"] = scale * jax.random.normal(ks2[1], (cout,), jnp.float32)
    p["gs"] = 1.0 + scale * jax.random.normal(ks2[2], (cout,), jnp.float32)
    p["betas"] = scale * jax.random.normal(ks2[3], (cout,), jnp.float32)
    p["mus"] = scale * jax.random.normal(ks2[4], (cout,), jnp.float32)
    p["vars"] = 1.0 + 0.05 * jax.random.uniform(ks2[5], (cout,), jnp.float32)
    return p


# ---------------------------------------------------------------------------
# Pure-JAX f32 reference (lax.conv) for the sanity check
# ---------------------------------------------------------------------------
def _conv(x, w, b, stride, pad):
    y = jax.lax.conv_general_dilated(
        x, w, window_strides=(stride, stride),
        padding=((pad, pad), (pad, pad)),
        dimension_numbers=("NHWC", "HWIO", "NHWC"))
    return y + b


def _bn(x, g, beta, mu, var):
    return (x - mu) * g / jnp.sqrt(var + EPS) + beta


def resblock_ref(x_nchw, p):
    x = jnp.transpose(x_nchw, (0, 2, 3, 1))
    y = jnp.maximum(_bn(_conv(x, p["w1"], p["b1"], 2, 1),
                        p["g1"], p["beta1"], p["mu1"], p["var1"]), 0.0)
    y = _bn(_conv(y, p["w2"], p["b2"], 1, 1),
            p["g2"], p["beta2"], p["mu2"], p["var2"])
    s = _bn(_conv(x, p["ws"], p["bs"], 2, 0),
            p["gs"], p["betas"], p["mus"], p["vars"])
    out = jnp.maximum(y + s, 0.0)
    return jnp.transpose(out, (0, 3, 1, 2))


if __name__ == "__main__":
    key = jax.random.PRNGKey(0)
    k_x, k_p = jax.random.split(key)

    N, Cin, Cout, H, W = 2, 4, 8, 16, 16   # ResBlock(4, 8, mapping='B')
    x = jax.random.normal(k_x, (N, Cin, H, W), jnp.float32)
    params = make_params(k_p, Cin, Cout)

    out = jax.block_until_ready(resblock_pallas(x, params))
    ref = jax.block_until_ready(resblock_ref(x, params))

    assert out.shape == (N, Cout, H // 2, W // 2), out.shape
    max_err = float(jnp.max(jnp.abs(out - ref)))
    # bf16 MXU operands with f32 accumulation (as before, < ~5e-3) plus the NEW bf16 final
    # store: half-ulp at |out| <= 4 is 2^-7 = 0.008.  4e-2 leaves >2x margin.
    assert max_err < 4e-2, f"max abs err {max_err}"

    print("KERNEL_OK")
</pallas_src>

<mosaic_0001>
module attributes {stable_mosaic.version = 11 : i64} {
  func.func @_resblock_kernel(%arg0: i32, %arg1: memref<1x128x36xbf16, #tpu.memory_space<vmem>>, %arg2: memref<36x256xbf16, #tpu.memory_space<vmem>>, %arg3: memref<1x16xf32, #tpu.memory_space<vmem>>, %arg4: memref<9x16x128xbf16, #tpu.memory_space<vmem>>, %arg5: memref<1x128xf32, #tpu.memory_space<vmem>>, %arg6: memref<1x128x128xbf16, #tpu.memory_space<vmem>>, %arg7: memref<2x10x10x16xbf16, #tpu.memory_space<vmem>>, %arg8: memref<128x128xf32, #tpu.memory_space<vmem>>) attributes {dimension_semantics = [#tpu.dimension_semantics<parallel>], iteration_bounds = array<i64: 1>, scalar_prefetch = 0 : i64, scratch_operands = 2 : i64, tpu.core_type = #tpu.core_type<tc>, window_params = [{transform_indices = @transform_0, window_bounds = array<i64: 1, 128, 36>}, {pipeline_mode = #tpu.pipeline_mode<synchronous>, transform_indices = @transform_1, window_bounds = array<i64: 36, 256>}, {pipeline_mode = #tpu.pipeline_mode<synchronous>, transform_indices = @transform_2, window_bounds = array<i64: 1, 16>}, {pipeline_mode = #tpu.pipeline_mode<synchronous>, transform_indices = @transform_3, window_bounds = array<i64: 9, 16, 128>}, {pipeline_mode = #tpu.pipeline_mode<synchronous>, transform_indices = @transform_4, window_bounds = array<i64: 1, 128>}, {transform_indices = @transform_5, window_bounds = array<i64: 1, 128, 128>}]} {
    %c0 = arith.constant 0 : index
    %c0_0 = arith.constant 0 : index
    %c0_1 = arith.constant 0 : index
    %0 = vector.load %arg1[%c0, %c0_0, %c0_1] : memref<1x128x36xbf16, #tpu.memory_space<vmem>>, vector<1x128x36xbf16>
    %1 = vector.shape_cast %0 : vector<1x128x36xbf16> to vector<128x36xbf16>
    %c0_2 = arith.constant 0 : index
    %c0_3 = arith.constant 0 : index
    %2 = vector.load %arg2[%c0_2, %c0_3] : memref<36x256xbf16, #tpu.memory_space<vmem>>, vector<36x256xbf16>
    %cst = arith.constant dense<0.000000e+00> : vector<128x256xf32>
    %3 = tpu.matmul %1, %2, %cst {dimension_numbers = #tpu.dot_dimension_numbers<[1], [0], [0], [1], [0, 0, 1, 1], [], []>} : vector<128x36xbf16>, vector<36x256xbf16>, vector<128x256xf32> -> vector<128x256xf32>
    %4 = vector.extract_strided_slice %3 {offsets = [0, 0], sizes = [128, 128], strides = [1, 1]} : vector<128x256xf32> to vector<128x128xf32>
    %c0_4 = arith.constant 0 : index
    %c0_5 = arith.constant 0 : index
    %5 = vector.load %arg5[%c0_4, %c0_5] : memref<1x128xf32, #tpu.memory_space<vmem>>, vector<1x128xf32>
    %6 = vector.broadcast %5 : vector<1x128xf32> to vector<128x128xf32>
    %7 = arith.addf %4, %6 : vector<128x128xf32>
    %c0_6 = arith.constant 0 : index
    %c0_7 = arith.constant 0 : index
    %8 = vector.load %arg8[%c0_6, %c0_7] : memref<128x128xf32, #tpu.memory_space<vmem>>, vector<128x128xf32>
    tpu.vector_store %arg8[%c0_6, %c0_7], %7 {strides = array<i32>} : memref<128x128xf32, #tpu.memory_space<vmem>>, vector<128x128xf32>,
    %9 = vector.extract_strided_slice %3 {offsets = [0, 128], sizes = [128, 16], strides = [1, 1]} : vector<128x256xf32> to vector<128x16xf32>
    %c0_8 = arith.constant 0 : index
    %c0_9 = arith.constant 0 : index
    %10 = vector.load %arg3[%c0_8, %c0_9] : memref<1x16xf32, #tpu.memory_space<vmem>>, vector<1x16xf32>
    %11 = vector.broadcast %10 : vector<1x16xf32> to vector<128x16xf32>
    %12 = arith.addf %9, %11 : vector<128x16xf32>
    %cst_10 = arith.constant 0.000000e+00 : f32
    %13 = vector.broadcast %cst_10 : f32 to vector<128x16xf32>
    %14 = arith.maximumf %12, %13 : vector<128x16xf32>
    %15 = arith.truncf %14 : vector<128x16xf32> to vector<128x16xbf16>
    %cst_11 = arith.constant 0.000000e+00 : bf16
    %16 = vector.broadcast %cst_11 : bf16 to vector<2x10x10x16xbf16>
    %c0_12 = arith.constant 0 : index
    %c0_13 = arith.constant 0 : index
    %c0_14 = arith.constant 0 : index
    %c0_15 = arith.constant 0 : index
    %17 = vector.load %arg7[%c0_12, %c0_13, %c0_14, %c0_15] : memref<2x10x10x16xbf16, #tpu.memory_space<vmem>>, vector<2x10x10x16xbf16>
    tpu.vector_store %arg7[%c0_12, %c0_13, %c0_14, %c0_15], %16 {strides = array<i32>} : memref<2x10x10x16xbf16, #tpu.memory_space<vmem>>, vector<2x10x10x16xbf16>,
    %18 = vector.shape_cast %15 : vector<128x16xbf16> to vector<2x8x8x16xbf16>
    %c0_16 = arith.constant 0 : index
    %c1 = arith.constant 1 : index
    %c1_17 = arith.constant 1 : index
    %c0_18 = arith.constant 0 : index
    %19 = vector.load %arg7[%c0_16, %c1, %c1_17, %c0_18] : memref<2x10x10x16xbf16, #tpu.memory_space<vmem>>, vector<2x8x8x16xbf16>
    tpu.vector_store %arg7[%c0_16, %c1, %c1_17, %c0_18], %18 {strides = array<i32>} : memref<2x10x10x16xbf16, #tpu.memory_space<vmem>>, vector<2x8x8x16xbf16>,
    %c0_19 = arith.constant 0 : index
    %c0_20 = arith.constant 0 : index
    %c0_21 = arith.constant 0 : index
    %c0_22 = arith.constant 0 : index
    %20 = vector.load %arg7[%c0_19, %c0_20, %c0_21, %c0_22] : memref<2x10x10x16xbf16, #tpu.memory_space<vmem>>, vector<2x8x8x16xbf16>
    %21 = vector.shape_cast %20 : vector<2x8x8x16xbf16> to vector<128x16xbf16>
    %c0_23 = arith.constant 0 : index
    %c0_24 = arith.constant 0 : index
    %22 = vector.load %arg8[%c0_23, %c0_24] : memref<128x128xf32, #tpu.memory_space<vmem>>, vector<128x128xf32>
    %c0_25 = arith.constant 0 : index
    %c0_26 = arith.constant 0 : index
    %c0_27 = arith.constant 0 : index
    %23 = vector.load %arg4[%c0_25, %c0_26, %c0_27] : memref<9x16x128xbf16, #tpu.memory_space<vmem>>, vector<1x16x128xbf16>
    %24 = vector.shape_cast %23 : vector<1x16x128xbf16> to vector<16x128xbf16>
    %cst_28 = arith.constant dense<0.000000e+00> : vector<128x128xf32>
    %25 = tpu.matmul %21, %24, %cst_28 {dimension_numbers = #tpu.dot_dimension_numbers<[1], [0], [0], [1], [0, 0, 1, 1], [], []>} : vector<128x16xbf16>, vector<16x128xbf16>, vector<128x128xf32> -> vector<128x128xf32>
    %26 = arith.addf %22, %25 : vector<128x128xf32>
    %c0_29 = arith.constant 0 : index
    %c0_30 = arith.constant 0 : index
    %27 = vector.load %arg8[%c0_29, %c0_30] : memref<128x128xf32, #tpu.memory_space<vmem>>, vector<128x128xf32>
    tpu.vector_store %arg8[%c0_29, %c0_30], %26 {strides = array<i32>} : memref<128x128xf32, #tpu.memory_space<vmem>>, vector<128x128xf32>,
    %c0_31 = arith.constant 0 : index
    %c0_32 = arith.constant 0 : index
    %c1_33 = arith.constant 1 : index
    %c0_34 = arith.constant 0 : index
    %28 = vector.load %arg7[%c0_31, %c0_32, %c1_33, %c0_34] : memref<2x10x10x16xbf16, #tpu.memory_space<vmem>>, vector<2x8x8x16xbf16>
    %29 = vector.shape_cast %28 : vector<2x8x8x16xbf16> to vector<128x16xbf16>
    %c0_35 = arith.constant 0 : index
    %c0_36 = arith.constant 0 : index
    %30 = vector.load %arg8[%c0_35, %c0_36] : memref<128x128xf32, #tpu.memory_space<vmem>>, vector<128x128xf32>
    %c1_37 = arith.constant 1 : index
    %c0_38 = arith.constant 0 : index
    %c0_39 = arith.constant 0 : index
    %31 = vector.load %arg4[%c1_37, %c0_38, %c0_39] : memref<9x16x128xbf16, #tpu.memory_space<vmem>>, vector<1x16x128xbf16>
    %32 = vector.shape_cast %31 : vector<1x16x128xbf16> to vector<16x128xbf16>
    %cst_40 = arith.constant dense<0.000000e+00> : vector<128x128xf32>
    %33 = tpu.matmul %29, %32, %cst_40 {dimension_numbers = #tpu.dot_dimension_numbers<[1], [0], [0], [1], [0, 0, 1, 1], [], []>} : vector<128x16xbf16>, vector<16x128xbf16>, vector<128x128xf32> -> vector<128x128xf32>
    %34 = arith.addf %30, %33 : vector<128x128xf32>
    %c0_41 = arith.constant 0 : index
    %c0_42 = arith.constant 0 : index
    %35 = vector.load %arg8[%c0_41, %c0_42] : memref<128x128xf32, #tpu.memory_space<vmem>>, vector<128x128xf32>
    tpu.vector_store %arg8[%c0_41, %c0_42], %34 {strides = array<i32>} : memref<128x128xf32, #tpu.memory_space<vmem>>, vector<128x128xf32>,
    %c0_43 = arith.constant 0 : index
    %c0_44 = arith.constant 0 : index
    %c2 = arith.constant 2 : index
    %c0_45 = arith.constant 0 : index
    %36 = vector.load %arg7[%c0_43, %c0_44, %c2, %c0_45] : memref<2x10x10x16xbf16, #tpu.memory_space<vmem>>, vector<2x8x8x16xbf16>
    %37 = vector.shape_cast %36 : vector<2x8x8x16xbf16> to vector<128x16xbf16>
    %c0_46 = arith.constant 0 : index
    %c0_47 = arith.constant 0 : index
    %38 = vector.load %arg8[%c0_46, %c0_47] : memref<128x128xf32, #tpu.memory_space<vmem>>, vector<128x128xf32>
    %c2_48 = arith.constant 2 : index
    %c0_49 = arith.constant 0 : index
    %c0_50 = arith.constant 0 : index
    %39 = vector.load %arg4[%c2_48, %c0_49, %c0_50] : memref<9x16x128xbf16, #tpu.memory_space<vmem>>, vector<1x16x128xbf16>
    %40 = vector.shape_cast %39 : vector<1x16x128xbf16> to vector<16x128xbf16>
    %cst_51 = arith.constant dense<0.000000e+00> : vector<128x128xf32>
    %41 = tpu.matmul %37, %40, %cst_51 {dimension_numbers = #tpu.dot_dimension_numbers<[1], [0], [0], [1], [0, 0, 1, 1], [], []>} : vector<128x16xbf16>, vector<16x128xbf16>, vector<128x128xf32> -> vector<128x128xf32>
    %42 = arith.addf %38, %41 : vector<128x128xf32>
    %c0_52 = arith.constant 0 : index
    %c0_53 = arith.constant 0 : index
    %43 = vector.load %arg8[%c0_52, %c0_53] : memref<128x128xf32, #tpu.memory_space<vmem>>, vector<128x128xf32>
    tpu.vector_store %arg8[%c0_52, %c0_53], %42 {strides = array<i32>} : memref<128x128xf32, #tpu.memory_space<vmem>>, vector<128x128xf32>,
    %c0_54 = arith.constant 0 : index
    %c1_55 = arith.constant 1 : index
    %c0_56 = arith.constant 0 : index
    %c0_57 = arith.constant 0 : index
    %44 = vector.load %arg7[%c0_54, %c1_55, %c0_56, %c0_57] : memref<2x10x10x16xbf16, #tpu.memory_space<vmem>>, vector<2x8x8x16xbf16>
    %45 = vector.shape_cast %44 : vector<2x8x8x16xbf16> to vector<128x16xbf16>
    %c0_58 = arith.constant 0 : index
    %c0_59 = arith.constant 0 : index
    %46 = vector.load %arg8[%c0_58, %c0_59] : memref<128x128xf32, #tpu.memory_space<vmem>>, vector<128x128xf32>
    %c3 = arith.constant 3 : index
    %c0_60 = arith.constant 0 : index
    %c0_61 = arith.constant 0 : index
    %47 = vector.load %arg4[%c3, %c0_60, %c0_61] : memref<9x16x128xbf16, #tpu.memory_space<vmem>>, vector<1x16x128xbf16>
    %48 = vector.shape_cast %47 : vector<1x16x128xbf16> to vector<16x128xbf16>
    %cst_62 = arith.constant dense<0.000000e+00> : vector<128x128xf32>
    %49 = tpu.matmul %45, %48, %cst_62 {dimension_numbers = #tpu.dot_dimension_numbers<[1], [0], [0], [1], [0, 0, 1, 1], [], []>} : vector<128x16xbf16>, vector<16x128xbf16>, vector<128x128xf32> -> vector<128x128xf32>
    %50 = arith.addf %46, %49 : vector<128x128xf32>
    %c0_63 = arith.constant 0 : index
    %c0_64 = arith.constant 0 : index
    %51 = vector.load %arg8[%c0_63, %c0_64] : memref<128x128xf32, #tpu.memory_space<vmem>>, vector<128x128xf32>
    tpu.vector_store %arg8[%c0_63, %c0_64], %50 {strides = array<i32>} : memref<128x128xf32, #tpu.memory_space<vmem>>, vector<128x128xf32>,
    %c0_65 = arith.constant 0 : index
    %c1_66 = arith.constant 1 : index
    %c1_67 = arith.constant 1 : index
    %c0_68 = arith.constant 0 : index
    %52 = vector.load %arg7[%c0_65, %c1_66, %c1_67, %c0_68] : memref<2x10x10x16xbf16, #tpu.memory_space<vmem>>, vector<2x8x8x16xbf16>
    %53 = vector.shape_cast %52 : vector<2x8x8x16xbf16> to vector<128x16xbf16>
    %c0_69 = arith.constant 0 : index
    %c0_70 = arith.constant 0 : index
    %54 = vector.load %arg8[%c0_69, %c0_70] : memref<128x128xf32, #tpu.memory_space<vmem>>, vector<128x128xf32>
    %c4 = arith.constant 4 : index
    %c0_71 = arith.constant 0 : index
    %c0_72 = arith.constant 0 : index
    %55 = vector.load %arg4[%c4, %c0_71, %c0_72] : memref<9x16x128xbf16, #tpu.memory_space<vmem>>, vector<1x16x128xbf16>
    %56 = vector.shape_cast %55 : vector<1x16x128xbf16> to vector<16x128xbf16>
    %cst_73 = arith.constant dense<0.000000e+00> : vector<128x128xf32>
    %57 = tpu.matmul %53, %56, %cst_73 {dimension_numbers = #tpu.dot_dimension_numbers<[1], [0], [0], [1], [0, 0, 1, 1], [], []>} : vector<128x16xbf16>, vector<16x128xbf16>, vector<128x128xf32> -> vector<128x128xf32>
    %58 = arith.addf %54, %57 : vector<128x128xf32>
    %c0_74 = arith.constant 0 : index
    %c0_75 = arith.constant 0 : index
    %59 = vector.load %arg8[%c0_74, %c0_75] : memref<128x128xf32, #tpu.memory_space<vmem>>, vector<128x128xf32>
    tpu.vector_store %arg8[%c0_74, %c0_75], %58 {strides = array<i32>} : memref<128x128xf32, #tpu.memory_space<vmem>>, vector<128x128xf32>,
    %c0_76 = arith.constant 0 : index
    %c1_77 = arith.constant 1 : index
    %c2_78 = arith.constant 2 : index
    %c0_79 = arith.constant 0 : index
    %60 = vector.load %arg7[%c0_76, %c1_77, %c2_78, %c0_79] : memref<2x10x10x16xbf16, #tpu.memory_space<vmem>>, vector<2x8x8x16xbf16>
    %61 = vector.shape_cast %60 : vector<2x8x8x16xbf16> to vector<128x16xbf16>
    %c0_80 = arith.constant 0 : index
    %c0_81 = arith.constant 0 : index
    %62 = vector.load %arg8[%c0_80, %c0_81] : memref<128x128xf32, #tpu.memory_space<vmem>>, vector<128x128xf32>
    %c5 = arith.constant 5 : index
    %c0_82 = arith.constant 0 : index
    %c0_83 = arith.constant 0 : index
    %63 = vector.load %arg4[%c5, %c0_82, %c0_83] : memref<9x16x128xbf16, #tpu.memory_space<vmem>>, vector<1x16x128xbf16>
    %64 = vector.shape_cast %63 : vector<1x16x128xbf16> to vector<16x128xbf16>
    %cst_84 = arith.constant dense<0.000000e+00> : vector<128x128xf32>
    %65 = tpu.matmul %61, %64, %cst_84 {dimension_numbers = #tpu.dot_dimension_numbers<[1], [0], [0], [1], [0, 0, 1, 1], [], []>} : vector<128x16xbf16>, vector<16x128xbf16>, vector<128x128xf32> -> vector<128x128xf32>
    %66 = arith.addf %62, %65 : vector<128x128xf32>
    %c0_85 = arith.constant 0 : index
    %c0_86 = arith.constant 0 : index
    %67 = vector.load %arg8[%c0_85, %c0_86] : memref<128x128xf32, #tpu.memory_space<vmem>>, vector<128x128xf32>
    tpu.vector_store %arg8[%c0_85, %c0_86], %66 {strides = array<i32>} : memref<128x128xf32, #tpu.memory_space<vmem>>, vector<128x128xf32>,
    %c0_87 = arith.constant 0 : index
    %c2_88 = arith.constant 2 : index
    %c0_89 = arith.constant 0 : index
    %c0_90 = arith.constant 0 : index
    %68 = vector.load %arg7[%c0_87, %c2_88, %c0_89, %c0_90] : memref<2x10x10x16xbf16, #tpu.memory_space<vmem>>, vector<2x8x8x16xbf16>
    %69 = vector.shape_cast %68 : vector<2x8x8x16xbf16> to vector<128x16xbf16>
    %c0_91 = arith.constant 0 : index
    %c0_92 = arith.constant 0 : index
    %70 = vector.load %arg8[%c0_91, %c0_92] : memref<128x128xf32, #tpu.memory_space<vmem>>, vector<128x128xf32>
    %c6 = arith.constant 6 : index
    %c0_93 = arith.constant 0 : index
    %c0_94 = arith.constant 0 : index
    %71 = vector.load %arg4[%c6, %c0_93, %c0_94] : memref<9x16x128xbf16, #tpu.memory_space<vmem>>, vector<1x16x128xbf16>
    %72 = vector.shape_cast %71 : vector<1x16x128xbf16> to vector<16x128xbf16>
    %cst_95 = arith.constant dense<0.000000e+00> : vector<128x128xf32>
    %73 = tpu.matmul %69, %72, %cst_95 {dimension_numbers = #tpu.dot_dimension_numbers<[1], [0], [0], [1], [0, 0, 1, 1], [], []>} : vector<128x16xbf16>, vector<16x128xbf16>, vector<128x128xf32> -> vector<128x128xf32>
    %74 = arith.addf %70, %73 : vector<128x128xf32>
    %c0_96 = arith.constant 0 : index
    %c0_97 = arith.constant 0 : index
    %75 = vector.load %arg8[%c0_96, %c0_97] : memref<128x128xf32, #tpu.memory_space<vmem>>, vector<128x128xf32>
    tpu.vector_store %arg8[%c0_96, %c0_97], %74 {strides = array<i32>} : memref<128x128xf32, #tpu.memory_space<vmem>>, vector<128x128xf32>,
    %c0_98 = arith.constant 0 : index
    %c2_99 = arith.constant 2 : index
    %c1_100 = arith.constant 1 : index
    %c0_101 = arith.constant 0 : index
    %76 = vector.load %arg7[%c0_98, %c2_99, %c1_100, %c0_101] : memref<2x10x10x16xbf16, #tpu.memory_space<vmem>>, vector<2x8x8x16xbf16>
    %77 = vector.shape_cast %76 : vector<2x8x8x16xbf16> to vector<128x16xbf16>
    %c0_102 = arith.constant 0 : index
    %c0_103 = arith.constant 0 : index
    %78 = vector.load %arg8[%c0_102, %c0_103] : memref<128x128xf32, #tpu.memory_space<vmem>>, vector<128x128xf32>
    %c7 = arith.constant 7 : index
    %c0_104 = arith.constant 0 : index
    %c0_105 = arith.constant 0 : index
    %79 = vector.load %arg4[%c7, %c0_104, %c0_105] : memref<9x16x128xbf16, #tpu.memory_space<vmem>>, vector<1x16x128xbf16>
    %80 = vector.shape_cast %79 : vector<1x16x128xbf16> to vector<16x128xbf16>
    %cst_106 = arith.constant dense<0.000000e+00> : vector<128x128xf32>
    %81 = tpu.matmul %77, %80, %cst_106 {dimension_numbers = #tpu.dot_dimension_numbers<[1], [0], [0], [1], [0, 0, 1, 1], [], []>} : vector<128x16xbf16>, vector<16x128xbf16>, vector<128x128xf32> -> vector<128x128xf32>
    %82 = arith.addf %78, %81 : vector<128x128xf32>
    %c0_107 = arith.constant 0 : index
    %c0_108 = arith.constant 0 : index
    %83 = vector.load %arg8[%c0_107, %c0_108] : memref<128x128xf32, #tpu.memory_space<vmem>>, vector<128x128xf32>
    tpu.vector_store %arg8[%c0_107, %c0_108], %82 {strides = array<i32>} : memref<128x128xf32, #tpu.memory_space<vmem>>, vector<128x128xf32>,
    %c0_109 = arith.constant 0 : index
    %c2_110 = arith.constant 2 : index
    %c2_111 = arith.constant 2 : index
    %c0_112 = arith.constant 0 : index
    %84 = vector.load %arg7[%c0_109, %c2_110, %c2_111, %c0_112] : memref<2x10x10x16xbf16, #tpu.memory_space<vmem>>, vector<2x8x8x16xbf16>
    %85 = vector.shape_cast %84 : vector<2x8x8x16xbf16> to vector<128x16xbf16>
    %c0_113 = arith.constant 0 : index
    %c0_114 = arith.constant 0 : index
    %86 = vector.load %arg8[%c0_113, %c0_114] : memref<128x128xf32, #tpu.memory_space<vmem>>, vector<128x128xf32>
    %c8 = arith.constant 8 : index
    %c0_115 = arith.constant 0 : index
    %c0_116 = arith.constant 0 : index
    %87 = vector.load %arg4[%c8, %c0_115, %c0_116] : memref<9x16x128xbf16, #tpu.memory_space<vmem>>, vector<1x16x128xbf16>
    %88 = vector.shape_cast %87 : vector<1x16x128xbf16> to vector<16x128xbf16>
    %cst_117 = arith.constant dense<0.000000e+00> : vector<128x128xf32>
    %89 = tpu.matmul %85, %88, %cst_117 {dimension_numbers = #tpu.dot_dimension_numbers<[1], [0], [0], [1], [0, 0, 1, 1], [], []>} : vector<128x16xbf16>, vector<16x128xbf16>, vector<128x128xf32> -> vector<128x128xf32>
    %90 = arith.addf %86, %89 : vector<128x128xf32>
    %c0_118 = arith.constant 0 : index
    %c0_119 = arith.constant 0 : index
    %91 = vector.load %arg8[%c0_118, %c0_119] : memref<128x128xf32, #tpu.memory_space<vmem>>, vector<128x128xf32>
    tpu.vector_store %arg8[%c0_118, %c0_119], %90 {strides = array<i32>} : memref<128x128xf32, #tpu.memory_space<vmem>>, vector<128x128xf32>,
    %c0_120 = arith.constant 0 : index
    %c0_121 = arith.constant 0 : index
    %92 = vector.load %arg8[%c0_120, %c0_121] : memref<128x128xf32, #tpu.memory_space<vmem>>, vector<128x128xf32>
    %cst_122 = arith.constant 0.000000e+00 : f32
    %93 = vector.broadcast %cst_122 : f32 to vector<128x128xf32>
    %94 = arith.maximumf %92, %93 : vector<128x128xf32>
    %95 = arith.truncf %94 : vector<128x128xf32> to vector<128x128xbf16>
    %c0_123 = arith.constant 0 : index
    %c0_124 = arith.constant 0 : index
    %c0_125 = arith.constant 0 : index
    %96 = vector.load %arg6[%c0_123, %c0_124, %c0_125] : memref<1x128x128xbf16, #tpu.memory_space<vmem>>, vector<1x128x128xbf16>
    %97 = vector.shape_cast %96 : vector<1x128x128xbf16> to vector<128x128xbf16>
    %98 = vector.shape_cast %95 : vector<128x128xbf16> to vector<1x128x128xbf16>
    tpu.vector_store %arg6[%c0_123, %c0_124, %c0_125], %98 {strides = array<i32>} : memref<1x128x128xbf16, #tpu.memory_space<vmem>>, vector<1x128x128xbf16>,
    return
  }
  func.func @transform_0(%arg0: i32) -> (i32, i32, i32) {
    %c0_i32 = arith.constant 0 : i32
    %c0_i32_0 = arith.constant 0 : i32
    %c0_i32_1 = arith.constant 0 : i32
    return %arg0, %c0_i32, %c0_i32_0 : i32, i32, i32
  }
  func.func @transform_1(%arg0: i32) -> (i32, i32) {
    %c0_i32 = arith.constant 0 : i32
    %c0_i32_0 = arith.constant 0 : i32
    %c0_i32_1 = arith.constant 0 : i32
    return %c0_i32, %c0_i32_0 : i32, i32
  }
  func.func @transform_2(%arg0: i32) -> (i32, i32) {
    %c0_i32 = arith.constant 0 : i32
    %c0_i32_0 = arith.constant 0 : i32
    %c0_i32_1 = arith.constant 0 : i32
    return %c0_i32, %c0_i32_0 : i32, i32
  }
  func.func @transform_3(%arg0: i32) -> (i32, i32, i32) {
    %c0_i32 = arith.constant 0 : i32
    %c0_i32_0 = arith.constant 0 : i32
    %c0_i32_1 = arith.constant 0 : i32
    %c0_i32_2 = arith.constant 0 : i32
    return %c0_i32, %c0_i32_0, %c0_i32_1 : i32, i32, i32
  }
  func.func @transform_4(%arg0: i32) -> (i32, i32) {
    %c0_i32 = arith.constant 0 : i32
    %c0_i32_0 = arith.constant 0 : i32
    %c0_i32_1 = arith.constant 0 : i32
    return %c0_i32, %c0_i32_0 : i32, i32
  }
  func.func @transform_5(%arg0: i32) -> (i32, i32, i32) {
    %c0_i32 = arith.constant 0 : i32
    %c0_i32_0 = arith.constant 0 : i32
    %c0_i32_1 = arith.constant 0 : i32
    return %arg0, %c0_i32, %c0_i32_0 : i32, i32, i32
  }
}

</mosaic_0001>

<llo_original>
// kernel: resblock_pallas.1
$region0: #{resblock_pallas.1}
  #allocation0 [shape = 'u32[]', space=smem, size = 0x4, offset = 0x4, fixed_abs, tag = 'smem constant byte address 0x4 - core index']
  #allocation1 [shape = 'u32[144,128]{1,0:T(1,128)}', space=vmem, size = 0x12000, scoped, tag = 'internal scratch']
  #allocation2 [shape = 'bf16[2,10,10,16]{3,2,1,0:T(8,128)(2,1)}', space=vmem, size = 0x14000, scoped, tag = 'scratch operand']
  #allocation3 [shape = 'f32[128,128]{1,0:T(8,128)}', space=vmem, size = 0x10000, scoped, tag = 'scratch operand']
  %s0 = inlined_call_operand.vmem [shape: bf16[1,128,36], index: 0, kind: input, shape index: {}]
  %s1 = inlined_call_operand.vmem [shape: bf16[36,256], index: 1, kind: input, shape index: {}]
  %s2 = inlined_call_operand.vmem [shape: f32[1,16], index: 2, kind: input, shape index: {}]
  %s3 = inlined_call_operand.vmem [shape: bf16[9,16,128], index: 3, kind: input, shape index: {}]
  %s4 = inlined_call_operand.vmem [shape: f32[1,128], index: 4, kind: input, shape index: {}]
  %s5 = inlined_call_operand.vmem [shape: bf16[1,128,128], index: 5, kind: output, shape index: {}]
  %s6 = sld [smem:[#allocation0]]
  $region30: #{resblock_pallas.1} parent=0
    _
  %s8 = ssub.s32 1, %s6
  %s9 = scalar_select 0, %s8, %s6
  // Predicated region
  $region2: #{resblock_pallas.1} parent=0 // pred_check
    _
  $region3: #{resblock_pallas.1} parent=0 // pred_check_branch
    %11 = sbr.rel (0) target = $region5
  $region4: #{resblock_pallas.1} parent=0 // pred_region
    _
  $region5: #{resblock_pallas.1} parent=0 // pred_fallthru
    _
  // Predicated region
  $region6: #{resblock_pallas.1} parent=0 // pred_check
    _
  $region7: #{resblock_pallas.1} parent=0 // pred_check_branch
    %13 = sbr.rel (0) target = $region9
  $region8: #{resblock_pallas.1} parent=0 // pred_region
    _
  $region9: #{resblock_pallas.1} parent=0 // pred_fallthru
    _
  // Predicated region
  $region10: #{resblock_pallas.1} parent=0 // pred_check
    _
  $region11: #{resblock_pallas.1} parent=0 // pred_check_branch
    %15 = sbr.rel (0) target = $region13
  $region12: #{resblock_pallas.1} parent=0 // pred_region
    _
  $region13: #{resblock_pallas.1} parent=0 // pred_fallthru
    _
  // Predicated region
  $region14: #{resblock_pallas.1} parent=0 // pred_check
    _
  $region15: #{resblock_pallas.1} parent=0 // pred_check_branch
    %17 = sbr.rel (0) target = $region17
  $region16: #{resblock_pallas.1} parent=0 // pred_region
    _
  $region17: #{resblock_pallas.1} parent=0 // pred_fallthru
    _
  // Predicated region
  $region18: #{resblock_pallas.1} parent=0 // pred_check
    _
  $region19: #{resblock_pallas.1} parent=0 // pred_check_branch
    %19 = sbr.rel (0) target = $region21
  $region20: #{resblock_pallas.1} parent=0 // pred_region
    _
  $region21: #{resblock_pallas.1} parent=0 // pred_fallthru
    _
  %v21 = vld [vmem:[%s0] sm:$0xf]
  %v22 = vld [vmem:[%s0 + $0x4] sm:$0xf]
  %v23 = vld [vmem:[%s0 + $0x8] sm:$0xf]
  %v24 = vld [vmem:[%s0 + $0xc] sm:$0xf]
  %v25 = vld [vmem:[%s0 + $0x10] sm:$0xf]
  %v26 = vld [vmem:[%s0 + $0x14] sm:$0xf]
  %v27 = vld [vmem:[%s0 + $0x18] sm:$0xf]
  %v28 = vld [vmem:[%s0 + $0x1c] sm:$0xf]
  %v29 = vld [vmem:[%s0 + $0x20] sm:$0xf]
  %v30 = vld [vmem:[%s0 + $0x24] sm:$0xf]
  %v31 = vld [vmem:[%s0 + $0x28] sm:$0xf]
  %v32 = vld [vmem:[%s0 + $0x2c] sm:$0xf]
  %v33 = vld [vmem:[%s0 + $0x30] sm:$0xf]
  %v34 = vld [vmem:[%s0 + $0x34] sm:$0xf]
  %v35 = vld [vmem:[%s0 + $0x38] sm:$0xf]
  %v36 = vld [vmem:[%s0 + $0x3c] sm:$0xf]
  %v37 = vld [vmem:[%s1] sm:$0xff]
  %v38 = vld [vmem:[%s1 + $0x8] sm:$0xff]
  %v39 = vld [vmem:[%s1 + $0x10] sm:$0xff]
  %v40 = vld [vmem:[%s1 + $0x18] sm:$0xff]
  %v41 = vld [vmem:[%s1 + $0x20] sm:$0x33]
  %v58 = vunpack.c.l.b16 %v21
  %v59 = vunpack.c.l.b16 %v22
  %v60 = vunpack.c.l.b16 %v23
  %v61 = vunpack.c.l.b16 %v24
  %v62 = vunpack.c.l.b16 %v25
  %v63 = vunpack.c.l.b16 %v26
  %v64 = vunpack.c.l.b16 %v27
  %v65 = vunpack.c.l.b16 %v28
  %v66 = vunpack.c.l.b16 %v29
  %v67 = vunpack.c.l.b16 %v30
  %v68 = vunpack.c.l.b16 %v31
  %v69 = vunpack.c.l.b16 %v32
  %v70 = vunpack.c.l.b16 %v33
  %v71 = vunpack.c.l.b16 %v34
  %v72 = vunpack.c.l.b16 %v35
  %v73 = vunpack.c.l.b16 %v36
  %v74 = vpack.c.b16 %v59, %v58
  %v75 = vpack.c.b16 %v61, %v60
  %v76 = vpack.c.b16 %v63, %v62
  %v77 = vpack.c.b16 %v65, %v64
  %v78 = vpack.c.b16 %v67, %v66
  %v79 = vpack.c.b16 %v69, %v68
  %v80 = vpack.c.b16 %v71, %v70
  %v81 = vpack.c.b16 %v73, %v72
  %v87 = vunpack.c.l.b16 %v37
  %v88 = vunpack.c.h.b16 %v37
  %v89 = vunpack.c.l.b16 %v38
  %v90 = vunpack.c.h.b16 %v38
  %v91 = vunpack.c.l.b16 %v39
  %v92 = vunpack.c.h.b16 %v39
  %v93 = vunpack.c.l.b16 %v40
  %v94 = vunpack.c.h.b16 %v40
  %v95 = vunpack.c.l.b16 %v41
  %v96 = vunpack.c.h.b16 %v41
  %v97 = vpack.c.b16 %v89, %v87
  %v98 = vpack.c.b16 %v90, %v88
  %v99 = vpack.c.b16 %v93, %v91
  %v100 = vpack.c.b16 %v94, %v92
  %v101 = vpack.c.b16 %v95, %v95
  %v102 = vpack.c.b16 %v96, %v96
  %vm107 = vcmask 293888
  %v109 = vsel %vm107, %v74, 0
  %v112 = vsel %vm107, %v75, 0
  %v115 = vsel %vm107, %v76, 0
  %v118 = vsel %vm107, %v77, 0
  %v121 = vsel %vm107, %v78, 0
  %v124 = vsel %vm107, %v79, 0
  %v127 = vsel %vm107, %v80, 0
  %v130 = vsel %vm107, %v81, 0
  %vm132 = vcmask 1041408
  %v134 = vsel %vm132, %v101, 0
  %v137 = vsel %vm132, %v102, 0
  %139 = vmatprep.subr.bf16.mxu0 %v98
  %140 = vmatpush1.bf16.msra.mxu0 %v97
  %141 = vmatprep.subr.bf16.mxu0 %v100
  %142 = vmatpush1.bf16.msra.mxu0 %v99
  %143 = vmatprep.subr.bf16.mxu0 %v137
  %144 = vmatpush1.bf16.msra.mxu0 %v134
  %145 = vmatprep.subr.bf16.mxu0 0
  %146 = vmatpush1.bf16.msra.mxu0 0
  %147 = vmatprep.subr.bf16.mxu0 0
  %148 = vmatpush1.bf16.msra.mxu0 0
  %149 = vmatprep.subr.bf16.mxu0 0
  %150 = vmatpush1.bf16.msra.mxu0 0
  %151 = vmatprep.subr.bf16.mxu0 0
  %152 = vmatpush1.bf16.msra.mxu0 0
  %153 = vmatprep.subr.bf16.mxu0 0
  %154 = vmatpush1.bf16.msra.mxu0 0
  %155 = vmatprep.subr.bf16.mxu0 0
  %156 = vmatpush1.bf16.msra.mxu0 0
  %157 = vmatprep.subr.bf16.mxu0 0
  %158 = vmatpush1.bf16.msra.mxu0 0
  %159 = vmatprep.subr.bf16.mxu0 0
  %160 = vmatpush1.bf16.msra.mxu0 0
  %161 = vmatprep.subr.bf16.mxu0 0
  %162 = vmatpush1.bf16.msra.mxu0 0
  %163 = vmatprep.subr.bf16.mxu0 0
  %164 = vmatpush1.bf16.msra.mxu0 0
  %165 = vmatprep.subr.bf16.mxu0 0
  %166 = vmatpush1.bf16.msra.mxu0 0
  %167 = vmatprep.subr.bf16.mxu0 0
  %168 = vmatpush1.bf16.msra.mxu0 0
  %169 = vmatprep.subr.bf16.mxu0 0
  %170 = vmatpush1.bf16.msra.mxu0 0
  %171 = vmatprep.mubr.bf16.mxu0 0
  %172 = vmatmul.mubr.bf16.gmra.mrb[0].mxu0 %v109
  %v173 = vpop.f32.mrb[0].mxu0
  %v174 = vadd.f32 0.0, %v173
  %v175 = vpop.f32.mrb[0].mxu0
  %v176 = vadd.f32 0.0, %v175
  %v177 = vpop.f32.mrb[0].mxu0
  %v178 = vadd.f32 0.0, %v177
  %v179 = vpop.f32.mrb[0].mxu0
  %v180 = vadd.f32 0.0, %v179
  %181 = vmatprep.mubr.bf16.mxu0 0
  %182 = vmatmul.mubr.bf16.gmra.mrb[0].mxu0 %v112
  %v183 = vpop.f32.mrb[0].mxu0
  %v184 = vadd.f32 0.0, %v183
  %v185 = vpop.f32.mrb[0].mxu0
  %v186 = vadd.f32 0.0, %v185
  %v187 = vpop.f32.mrb[0].mxu0
  %v188 = vadd.f32 0.0, %v187
  %v189 = vpop.f32.mrb[0].mxu0
  %v190 = vadd.f32 0.0, %v189
  %191 = vmatprep.mubr.bf16.mxu0 0
  %192 = vmatmul.mubr.bf16.gmra.mrb[0].mxu0 %v115
  %v193 = vpop.f32.mrb[0].mxu0
  %v194 = vadd.f32 0.0, %v193
  %v195 = vpop.f32.mrb[0].mxu0
  %v196 = vadd.f32 0.0, %v195
  %v197 = vpop.f32.mrb[0].mxu0
  %v198 = vadd.f32 0.0, %v197
  %v199 = vpop.f32.mrb[0].mxu0
  %v200 = vadd.f32 0.0, %v199
  %201 = vmatprep.mubr.bf16.mxu0 0
  %202 = vmatmul.mubr.bf16.gmra.mrb[0].mxu0 %v118
  %v203 = vpop.f32.mrb[0].mxu0
  %v204 = vadd.f32 0.0, %v203
  %v205 = vpop.f32.mrb[0].mxu0
  %v206 = vadd.f32 0.0, %v205
  %v207 = vpop.f32.mrb[0].mxu0
  %v208 = vadd.f32 0.0, %v207
  %v209 = vpop.f32.mrb[0].mxu0
  %v210 = vadd.f32 0.0, %v209
  %211 = vmatprep.mubr.bf16.mxu0 0
  %212 = vmatmul.mubr.bf16.gmra.mrb[0].mxu0 %v121
  %v213 = vpop.f32.mrb[0].mxu0
  %v214 = vadd.f32 0.0, %v213
  %v215 = vpop.f32.mrb[0].mxu0
  %v216 = vadd.f32 0.0, %v215
  %v217 = vpop.f32.mrb[0].mxu0
  %v218 = vadd.f32 0.0, %v217
  %v219 = vpop.f32.mrb[0].mxu0
  %v220 = vadd.f32 0.0, %v219
  %221 = vmatprep.mubr.bf16.mxu0 0
  %222 = vmatmul.mubr.bf16.gmra.mrb[0].mxu0 %v124
  %v223 = vpop.f32.mrb[0].mxu0
  %v224 = vadd.f32 0.0, %v223
  %v225 = vpop.f32.mrb[0].mxu0
  %v226 = vadd.f32 0.0, %v225
  %v227 = vpop.f32.mrb[0].mxu0
  %v228 = vadd.f32 0.0, %v227
  %v229 = vpop.f32.mrb[0].mxu0
  %v230 = vadd.f32 0.0, %v229
  %231 = vmatprep.mubr.bf16.mxu0 0
  %232 = vmatmul.mubr.bf16.gmra.mrb[0].mxu0 %v127
  %v233 = vpop.f32.mrb[0].mxu0
  %v234 = vadd.f32 0.0, %v233
  %v235 = vpop.f32.mrb[0].mxu0
  %v236 = vadd.f32 0.0, %v235
  %v237 = vpop.f32.mrb[0].mxu0
  %v238 = vadd.f32 0.0, %v237
  %v239 = vpop.f32.mrb[0].mxu0
  %v240 = vadd.f32 0.0, %v239
  %241 = vmatprep.mubr.bf16.mxu0 0
  %242 = vmatmul.mubr.bf16.gmra.mrb[0].mxu0 %v130
  %v243 = vpop.f32.mrb[0].mxu0
  %v244 = vadd.f32 0.0, %v243
  %v245 = vpop.f32.mrb[0].mxu0
  %v246 = vadd.f32 0.0, %v245
  %v247 = vpop.f32.mrb[0].mxu0
  %v248 = vadd.f32 0.0, %v247
  %v249 = vpop.f32.mrb[0].mxu0
  %v250 = vadd.f32 0.0, %v249
  %251 = vdwg.mxu0
  %v252 = vld [vmem:[%s4] sm:$0x1]
  %v254 = vlaneseq
  %v255 = vshrl.u32 %v254, 7
  %v256 = vsub.s32 0, %v255
  %v257 = vrot.slane %v252, %v256
  %v259 = vadd.f32 %v174, %v257
  %v260 = vadd.f32 %v178, %v257
  %v261 = vadd.f32 %v184, %v257
  %v262 = vadd.f32 %v188, %v257
  %v263 = vadd.f32 %v194, %v257
  %v264 = vadd.f32 %v198, %v257
  %v265 = vadd.f32 %v204, %v257
  %v266 = vadd.f32 %v208, %v257
  %v267 = vadd.f32 %v214, %v257
  %v268 = vadd.f32 %v218, %v257
  %v269 = vadd.f32 %v224, %v257
  %v270 = vadd.f32 %v228, %v257
  %v271 = vadd.f32 %v234, %v257
  %v272 = vadd.f32 %v238, %v257
  %v273 = vadd.f32 %v244, %v257
  %v274 = vadd.f32 %v248, %v257
  %275 = vst [vmem:[#allocation3] sm:$0xff] %v259
  %276 = vst [vmem:[#allocation3 + $0x8] sm:$0xff] %v260
  %277 = vst [vmem:[#allocation3 + $0x10] sm:$0xff] %v261
  %278 = vst [vmem:[#allocation3 + $0x18] sm:$0xff] %v262
  %279 = vst [vmem:[#allocation3 + $0x20] sm:$0xff] %v263
  %280 = vst [vmem:[#allocation3 + $0x28] sm:$0xff] %v264
  %281 = vst [vmem:[#allocation3 + $0x30] sm:$0xff] %v265
  %282 = vst [vmem:[#allocation3 + $0x38] sm:$0xff] %v266
  %283 = vst [vmem:[#allocation3 + $0x40] sm:$0xff] %v267
  %284 = vst [vmem:[#allocation3 + $0x48] sm:$0xff] %v268
  %285 = vst [vmem:[#allocation3 + $0x50] sm:$0xff] %v269
  %286 = vst [vmem:[#allocation3 + $0x58] sm:$0xff] %v270
  %287 = vst [vmem:[#allocation3 + $0x60] sm:$0xff] %v271
  %288 = vst [vmem:[#allocation3 + $0x68] sm:$0xff] %v272
  %289 = vst [vmem:[#allocation3 + $0x70] sm:$0xff] %v273
  %290 = vst [vmem:[#allocation3 + $0x78] sm:$0xff] %v274
  %v291 = vld [vmem:[%s2] sm:$0x1]
  %v293 = vlaneseq
  %v294 = vshrl.u32 %v293, 7
  %v295 = vsub.s32 0, %v294
  %v296 = vrot.slane %v291, %v295
  %v298 = vadd.f32 %v176, %v296
  %v299 = vadd.f32 %v180, %v296
  %v300 = vadd.f32 %v186, %v296
  %v301 = vadd.f32 %v190, %v296
  %v302 = vadd.f32 %v196, %v296
  %v303 = vadd.f32 %v200, %v296
  %v304 = vadd.f32 %v206, %v296
  %v305 = vadd.f32 %v210, %v296
  %v306 = vadd.f32 %v216, %v296
  %v307 = vadd.f32 %v220, %v296
  %v308 = vadd.f32 %v226, %v296
  %v309 = vadd.f32 %v230, %v296
  %v310 = vadd.f32 %v236, %v296
  %v311 = vadd.f32 %v240, %v296
  %v312 = vadd.f32 %v246, %v296
  %v313 = vadd.f32 %v250, %v296
  %v314 = vmax.f32 %v298, 0.0
  %v315 = vmax.f32 %v299, 0.0
  %v316 = vmax.f32 %v300, 0.0
  %v317 = vmax.f32 %v301, 0.0
  %v318 = vmax.f32 %v302, 0.0
  %v319 = vmax.f32 %v303, 0.0
  %v320 = vmax.f32 %v304, 0.0
  %v321 = vmax.f32 %v305, 0.0
  %v322 = vmax.f32 %v306, 0.0
  %v323 = vmax.f32 %v307, 0.0
  %v324 = vmax.f32 %v308, 0.0
  %v325 = vmax.f32 %v309, 0.0
  %v326 = vmax.f32 %v310, 0.0
  %v327 = vmax.f32 %v311, 0.0
  %v328 = vmax.f32 %v312, 0.0
  %v329 = vmax.f32 %v313, 0.0
  %v330 = vpack.c.bf16 %v315, %v314
  %v331 = vpack.c.bf16 %v317, %v316
  %v332 = vpack.c.bf16 %v319, %v318
  %v333 = vpack.c.bf16 %v321, %v320
  %v334 = vpack.c.bf16 %v323, %v322
  %v335 = vpack.c.bf16 %v325, %v324
  %v336 = vpack.c.bf16 %v327, %v326
  %v337 = vpack.c.bf16 %v329, %v328
  %vm338 = vcmask 125952
  %339 = vst.msk [vmem:[#allocation2] sm:$0xf] %vm338, 0
  %vm340 = vcmask 122880
  %341 = vst.msk [vmem:[#allocation2 + $0x4] sm:$0x1] %vm340, 0
  %342 = vst.msk [vmem:[#allocation2 + $0x8] sm:$0xf] %vm338, 0
  %343 = vst.msk [vmem:[#allocation2 + $0xc] sm:$0x1] %vm340, 0
  %344 = vst.msk [vmem:[#allocation2 + $0x10] sm:$0xf] %vm338, 0
  %345 = vst.msk [vmem:[#allocation2 + $0x14] sm:$0x1] %vm340, 0
  %346 = vst.msk [vmem:[#allocation2 + $0x18] sm:$0xf] %vm338, 0
  %347 = vst.msk [vmem:[#allocation2 + $0x1c] sm:$0x1] %vm340, 0
  %348 = vst.msk [vmem:[#allocation2 + $0x20] sm:$0xf] %vm338, 0
  %349 = vst.msk [vmem:[#allocation2 + $0x24] sm:$0x1] %vm340, 0
  %350 = vst.msk [vmem:[#allocation2 + $0x28] sm:$0xf] %vm338, 0
  %351 = vst.msk [vmem:[#allocation2 + $0x2c] sm:$0x1] %vm340, 0
  %352 = vst.msk [vmem:[#allocation2 + $0x30] sm:$0xf] %vm338, 0
  %353 = vst.msk [vmem:[#allocation2 + $0x34] sm:$0x1] %vm340, 0
  %354 = vst.msk [vmem:[#allocation2 + $0x38] sm:$0xf] %vm338, 0
  %355 = vst.msk [vmem:[#allocation2 + $0x3c] sm:$0x1] %vm340, 0
  %356 = vst.msk [vmem:[#allocation2 + $0x40] sm:$0xf] %vm338, 0
  %357 = vst.msk [vmem:[#allocation2 + $0x44] sm:$0x1] %vm340, 0
  %358 = vst.msk [vmem:[#allocation2 + $0x48] sm:$0xf] %vm338, 0
  %359 = vst.msk [vmem:[#allocation2 + $0x4c] sm:$0x1] %vm340, 0
  %360 = vst.msk [vmem:[#allocation2 + $0x50] sm:$0xf] %vm338, 0
  %361 = vst.msk [vmem:[#allocation2 + $0x54] sm:$0x1] %vm340, 0
  %362 = vst.msk [vmem:[#allocation2 + $0x58] sm:$0xf] %vm338, 0
  %363 = vst.msk [vmem:[#allocation2 + $0x5c] sm:$0x1] %vm340, 0
  %364 = vst.msk [vmem:[#allocation2 + $0x60] sm:$0xf] %vm338, 0
  %365 = vst.msk [vmem:[#allocation2 + $0x64] sm:$0x1] %vm340, 0
  %366 = vst.msk [vmem:[#allocation2 + $0x68] sm:$0xf] %vm338, 0
  %367 = vst.msk [vmem:[#allocation2 + $0x6c] sm:$0x1] %vm340, 0
  %368 = vst.msk [vmem:[#allocation2 + $0x70] sm:$0xf] %vm338, 0
  %369 = vst.msk [vmem:[#allocation2 + $0x74] sm:$0x1] %vm340, 0
  %370 = vst.msk [vmem:[#allocation2 + $0x78] sm:$0xf] %vm338, 0
  %371 = vst.msk [vmem:[#allocation2 + $0x7c] sm:$0x1] %vm340, 0
  %372 = vst.msk [vmem:[#allocation2 + $0x80] sm:$0xf] %vm338, 0
  %373 = vst.msk [vmem:[#allocation2 + $0x84] sm:$0x1] %vm340, 0
  %374 = vst.msk [vmem:[#allocation2 + $0x88] sm:$0xf] %vm338, 0
  %375 = vst.msk [vmem:[#allocation2 + $0x8c] sm:$0x1] %vm340, 0
  %376 = vst.msk [vmem:[#allocation2 + $0x90] sm:$0xf] %vm338, 0
  %377 = vst.msk [vmem:[#allocation2 + $0x94] sm:$0x1] %vm340, 0
  %378 = vst.msk [vmem:[#allocation2 + $0x98] sm:$0xf] %vm338, 0
  %379 = vst.msk [vmem:[#allocation2 + $0x9c] sm:$0x1] %vm340, 0
  %v388 = vunpack.c.l.b16 %v330
  %v389 = vunpack.c.h.b16 %v330
  %v390 = vunpack.c.l.b16 %v331
  %v391 = vunpack.c.h.b16 %v331
  %v392 = vunpack.c.l.b16 %v332
  %v393 = vunpack.c.h.b16 %v332
  %v394 = vunpack.c.l.b16 %v333
  %v395 = vunpack.c.h.b16 %v333
  %v396 = vunpack.c.l.b16 %v334
  %v397 = vunpack.c.h.b16 %v334
  %v398 = vunpack.c.l.b16 %v335
  %v399 = vunpack.c.h.b16 %v335
  %v400 = vunpack.c.l.b16 %v336
  %v401 = vunpack.c.h.b16 %v336
  %v402 = vunpack.c.l.b16 %v337
  %v403 = vunpack.c.h.b16 %v337
  %v404 = vpack.c.b16 %v388, %v388
  %v405 = vpack.c.b16 %v389, %v389
  %v406 = vpack.c.b16 %v390, %v390
  %v407 = vpack.c.b16 %v391, %v391
  %v408 = vpack.c.b16 %v392, %v392
  %v409 = vpack.c.b16 %v393, %v393
  %v410 = vpack.c.b16 %v394, %v394
  %v411 = vpack.c.b16 %v395, %v395
  %v412 = vpack.c.b16 %v396, %v396
  %v413 = vpack.c.b16 %v397, %v397
  %v414 = vpack.c.b16 %v398, %v398
  %v415 = vpack.c.b16 %v399, %v399
  %v416 = vpack.c.b16 %v400, %v400
  %v417 = vpack.c.b16 %v401, %v401
  %v418 = vpack.c.b16 %v402, %v402
  %v419 = vpack.c.b16 %v403, %v403
  %v421 = vshrl.u32 %v404, 16
  %v423 = vrot.slane %v421, 7
  %v424 = vshll.u32 %v404, 16
  %v426 = vor.u32 %v423, %v424
  %v427 = vrot.slane %v423, 4
  %v429 = vshrl.u32 %v405, 16
  %v431 = vrot.slane %v429, 7
  %v432 = vshll.u32 %v405, 16
  %v434 = vor.u32 %v431, %v432
  %v435 = vrot.slane %v431, 4
  %v437 = vshrl.u32 %v406, 16
  %v439 = vrot.slane %v437, 7
  %v440 = vshll.u32 %v406, 16
  %v442 = vor.u32 %v439, %v440
  %v443 = vrot.slane %v439, 4
  %v445 = vshrl.u32 %v407, 16
  %v447 = vrot.slane %v445, 7
  %v448 = vshll.u32 %v407, 16
  %v450 = vor.u32 %v447, %v448
  %v451 = vrot.slane %v447, 4
  %v453 = vshrl.u32 %v408, 16
  %v455 = vrot.slane %v453, 7
  %v456 = vshll.u32 %v408, 16
  %v458 = vor.u32 %v455, %v456
  %v459 = vrot.slane %v455, 4
  %v461 = vshrl.u32 %v409, 16
  %v463 = vrot.slane %v461, 7
  %v464 = vshll.u32 %v409, 16
  %v466 = vor.u32 %v463, %v464
  %v467 = vrot.slane %v463, 4
  %v469 = vshrl.u32 %v410, 16
  %v471 = vrot.slane %v469, 7
  %v472 = vshll.u32 %v410, 16
  %v474 = vor.u32 %v471, %v472
  %v475 = vrot.slane %v471, 4
  %v477 = vshrl.u32 %v411, 16
  %v479 = vrot.slane %v477, 7
  %v480 = vshll.u32 %v411, 16
  %v482 = vor.u32 %v479, %v480
  %v483 = vrot.slane %v479, 4
  %v485 = vshrl.u32 %v412, 16
  %v487 = vrot.slane %v485, 7
  %v488 = vshll.u32 %v412, 16
  %v490 = vor.u32 %v487, %v488
  %v491 = vrot.slane %v487, 4
  %v493 = vshrl.u32 %v413, 16
  %v495 = vrot.slane %v493, 7
  %v496 = vshll.u32 %v413, 16
  %v498 = vor.u32 %v495, %v496
  %v499 = vrot.slane %v495, 4
  %v501 = vshrl.u32 %v414, 16
  %v503 = vrot.slane %v501, 7
  %v504 = vshll.u32 %v414, 16
  %v506 = vor.u32 %v503, %v504
  %v507 = vrot.slane %v503, 4
  %v509 = vshrl.u32 %v415, 16
  %v511 = vrot.slane %v509, 7
  %v512 = vshll.u32 %v415, 16
  %v514 = vor.u32 %v511, %v512
  %v515 = vrot.slane %v511, 4
  %v517 = vshrl.u32 %v416, 16
  %v519 = vrot.slane %v517, 7
  %v520 = vshll.u32 %v416, 16
  %v522 = vor.u32 %v519, %v520
  %v523 = vrot.slane %v519, 4
  %v525 = vshrl.u32 %v417, 16
  %v527 = vrot.slane %v525, 7
  %v528 = vshll.u32 %v417, 16
  %v530 = vor.u32 %v527, %v528
  %v531 = vrot.slane %v527, 4
  %v533 = vshrl.u32 %v418, 16
  %v535 = vrot.slane %v533, 7
  %v536 = vshll.u32 %v418, 16
  %v538 = vor.u32 %v535, %v536
  %v539 = vrot.slane %v535, 4
  %v541 = vshrl.u32 %v419, 16
  %v543 = vrot.slane %v541, 7
  %v544 = vshll.u32 %v419, 16
  %v546 = vor.u32 %v543, %v544
  %v547 = vrot.slane %v543, 4
  %s580 = scalar_lea.vmem [#allocation2], 8
  %vm581 = vcmask 125952
  %vm582 = vsmask.f32 7938
  %vm583 = vmand %vm581, %vm582
  %v584 = vld [vmem:[%s580] sm:$0xf]
  %v585 = vsel %vm583, %v426, %v584
  %586 = vst [vmem:[%s580] sm:$0xf] %v585
  %vm587 = vcmask 122880
  %vm588 = vsmask.f32 256
  %vm589 = vmand %vm587, %vm588
  %v590 = vld [vmem:[%s580 + $0x4] sm:$0x1]
  %v591 = vsel %vm589, %v427, %v590
  %592 = vst [vmem:[%s580 + $0x4] sm:$0x1] %v591
  %v593 = vld [vmem:[%s580 + $0x8] sm:$0xf]
  %v594 = vsel %vm583, %v434, %v593
  %595 = vst [vmem:[%s580 + $0x8] sm:$0xf] %v594
  %v596 = vld [vmem:[%s580 + $0xc] sm:$0x1]
  %v597 = vsel %vm589, %v435, %v596
  %598 = vst [vmem:[%s580 + $0xc] sm:$0x1] %v597
  %v599 = vld [vmem:[%s580 + $0x10] sm:$0xf]
  %v600 = vsel %vm583, %v442, %v599
  %601 = vst [vmem:[%s580 + $0x10] sm:$0xf] %v600
  %v602 = vld [vmem:[%s580 + $0x14] sm:$0x1]
  %v603 = vsel %vm589, %v443, %v602
  %604 = vst [vmem:[%s580 + $0x14] sm:$0x1] %v603
  %v605 = vld [vmem:[%s580 + $0x18] sm:$0xf]
  %v606 = vsel %vm583, %v450, %v605
  %607 = vst [vmem:[%s580 + $0x18] sm:$0xf] %v606
  %v608 = vld [vmem:[%s580 + $0x1c] sm:$0x1]
  %v609 = vsel %vm589, %v451, %v608
  %610 = vst [vmem:[%s580 + $0x1c] sm:$0x1] %v609
  %v611 = vld [vmem:[%s580 + $0x20] sm:$0xf]
  %v612 = vsel %vm583, %v458, %v611
  %613 = vst [vmem:[%s580 + $0x20] sm:$0xf] %v612
  %v614 = vld [vmem:[%s580 + $0x24] sm:$0x1]
  %v615 = vsel %vm589, %v459, %v614
  %616 = vst [vmem:[%s580 + $0x24] sm:$0x1] %v615
  %v617 = vld [vmem:[%s580 + $0x28] sm:$0xf]
  %v618 = vsel %vm583, %v466, %v617
  %619 = vst [vmem:[%s580 + $0x28] sm:$0xf] %v618
  %v620 = vld [vmem:[%s580 + $0x2c] sm:$0x1]
  %v621 = vsel %vm589, %v467, %v620
  %622 = vst [vmem:[%s580 + $0x2c] sm:$0x1] %v621
  %v623 = vld [vmem:[%s580 + $0x30] sm:$0xf]
  %v624 = vsel %vm583, %v474, %v623
  %625 = vst [vmem:[%s580 + $0x30] sm:$0xf] %v624
  %v626 = vld [vmem:[%s580 + $0x34] sm:$0x1]
  %v627 = vsel %vm589, %v475, %v626
  %628 = vst [vmem:[%s580 + $0x34] sm:$0x1] %v627
  %v629 = vld [vmem:[%s580 + $0x38] sm:$0xf]
  %v630 = vsel %vm583, %v482, %v629
  %631 = vst [vmem:[%s580 + $0x38] sm:$0xf] %v630
  %v632 = vld [vmem:[%s580 + $0x3c] sm:$0x1]
  %v633 = vsel %vm589, %v483, %v632
  %634 = vst [vmem:[%s580 + $0x3c] sm:$0x1] %v633
  %v635 = vld [vmem:[%s580 + $0x50] sm:$0xf]
  %v636 = vsel %vm583, %v490, %v635
  %637 = vst [vmem:[%s580 + $0x50] sm:$0xf] %v636
  %v638 = vld [vmem:[%s580 + $0x54] sm:$0x1]
  %v639 = vsel %vm589, %v491, %v638
  %640 = vst [vmem:[%s580 + $0x54] sm:$0x1] %v639
  %v641 = vld [vmem:[%s580 + $0x58] sm:$0xf]
  %v642 = vsel %vm583, %v498, %v641
  %643 = vst [vmem:[%s580 + $0x58] sm:$0xf] %v642
  %v644 = vld [vmem:[%s580 + $0x5c] sm:$0x1]
  %v645 = vsel %vm589, %v499, %v644
  %646 = vst [vmem:[%s580 + $0x5c] sm:$0x1] %v645
  %v647 = vld [vmem:[%s580 + $0x60] sm:$0xf]
  %v648 = vsel %vm583, %v506, %v647
  %649 = vst [vmem:[%s580 + $0x60] sm:$0xf] %v648
  %v650 = vld [vmem:[%s580 + $0x64] sm:$0x1]
  %v651 = vsel %vm589, %v507, %v650
  %652 = vst [vmem:[%s580 + $0x64] sm:$0x1] %v651
  %v653 = vld [vmem:[%s580 + $0x68] sm:$0xf]
  %v654 = vsel %vm583, %v514, %v653
  %655 = vst [vmem:[%s580 + $0x68] sm:$0xf] %v654
  %v656 = vld [vmem:[%s580 + $0x6c] sm:$0x1]
  %v657 = vsel %vm589, %v515, %v656
  %658 = vst [vmem:[%s580 + $0x6c] sm:$0x1] %v657
  %v659 = vld [vmem:[%s580 + $0x70] sm:$0xf]
  %v660 = vsel %vm583, %v522, %v659
  %661 = vst [vmem:[%s580 + $0x70] sm:$0xf] %v660
  %v662 = vld [vmem:[%s580 + $0x74] sm:$0x1]
  %v663 = vsel %vm589, %v523, %v662
  %664 = vst [vmem:[%s580 + $0x74] sm:$0x1] %v663
  %v665 = vld [vmem:[%s580 + $0x78] sm:$0xf]
  %v666 = vsel %vm583, %v530, %v665
  %667 = vst [vmem:[%s580 + $0x78] sm:$0xf] %v666
  %v668 = vld [vmem:[%s580 + $0x7c] sm:$0x1]
  %v669 = vsel %vm589, %v531, %v668
  %670 = vst [vmem:[%s580 + $0x7c] sm:$0x1] %v669
  %v671 = vld [vmem:[%s580 + $0x80] sm:$0xf]
  %v672 = vsel %vm583, %v538, %v671
  %673 = vst [vmem:[%s580 + $0x80] sm:$0xf] %v672
  %v674 = vld [vmem:[%s580 + $0x84] sm:$0x1]
  %v675 = vsel %vm589, %v539, %v674
  %676 = vst [vmem:[%s580 + $0x84] sm:$0x1] %v675
  %v677 = vld [vmem:[%s580 + $0x88] sm:$0xf]
  %v678 = vsel %vm583, %v546, %v677
  %679 = vst [vmem:[%s580 + $0x88] sm:$0xf] %v678
  %v680 = vld [vmem:[%s580 + $0x8c] sm:$0x1]
  %v681 = vsel %vm589, %v547, %v680
  %682 = vst [vmem:[%s580 + $0x8c] sm:$0x1] %v681
  %v683 = vld [vmem:[#allocation2] sm:$0xf]
  %v684 = vld [vmem:[#allocation2 + $0x8] sm:$0xf]
  %v685 = vld [vmem:[#allocation2 + $0x10] sm:$0xf]
  %v686 = vld [vmem:[#allocation2 + $0x18] sm:$0xf]
  %v687 = vld [vmem:[#allocation2 + $0x20] sm:$0xf]
  %v688 = vld [vmem:[#allocation2 + $0x28] sm:$0xf]
  %v689 = vld [vmem:[#allocation2 + $0x30] sm:$0xf]
  %v690 = vld [vmem:[#allocation2 + $0x38] sm:$0xf]
  %v691 = vld [vmem:[#allocation2 + $0x50] sm:$0xf]
  %v692 = vld [vmem:[#allocation2 + $0x58] sm:$0xf]
  %v693 = vld [vmem:[#allocation2 + $0x60] sm:$0xf]
  %v694 = vld [vmem:[#allocation2 + $0x68] sm:$0xf]
  %v695 = vld [vmem:[#allocation2 + $0x70] sm:$0xf]
  %v696 = vld [vmem:[#allocation2 + $0x78] sm:$0xf]
  %v697 = vld [vmem:[#allocation2 + $0x80] sm:$0xf]
  %v698 = vld [vmem:[#allocation2 + $0x88] sm:$0xf]
  %v699 = vld [vmem:[#allocation3] sm:$0xff]
  %v700 = vld [vmem:[#allocation3 + $0x8] sm:$0xff]
  %v701 = vld [vmem:[#allocation3 + $0x10] sm:$0xff]
  %v702 = vld [vmem:[#allocation3 + $0x18] sm:$0xff]
  %v703 = vld [vmem:[#allocation3 + $0x20] sm:$0xff]
  %v704 = vld [vmem:[#allocation3 + $0x28] sm:$0xff]
  %v705 = vld [vmem:[#allocation3 + $0x30] sm:$0xff]
  %v706 = vld [vmem:[#allocation3 + $0x38] sm:$0xff]
  %v707 = vld [vmem:[#allocation3 + $0x40] sm:$0xff]
  %v708 = vld [vmem:[#allocation3 + $0x48] sm:$0xff]
  %v709 = vld [vmem:[#allocation3 + $0x50] sm:$0xff]
  %v710 = vld [vmem:[#allocation3 + $0x58] sm:$0xff]
  %v711 = vld [vmem:[#allocation3 + $0x60] sm:$0xff]
  %v712 = vld [vmem:[#allocation3 + $0x68] sm:$0xff]
  %v713 = vld [vmem:[#allocation3 + $0x70] sm:$0xff]
  %v714 = vld [vmem:[#allocation3 + $0x78] sm:$0xff]
  %v715 = vld [vmem:[%s3] sm:$0xf]
  %v716 = vld [vmem:[%s3 + $0x4] sm:$0xf]
  %v733 = vunpack.c.l.b16 %v683
  %v734 = vunpack.c.l.b16 %v684
  %v735 = vunpack.c.l.b16 %v685
  %v736 = vunpack.c.l.b16 %v686
  %v737 = vunpack.c.l.b16 %v687
  %v738 = vunpack.c.l.b16 %v688
  %v739 = vunpack.c.l.b16 %v689
  %v740 = vunpack.c.l.b16 %v690
  %v741 = vunpack.c.l.b16 %v691
  %v742 = vunpack.c.l.b16 %v692
  %v743 = vunpack.c.l.b16 %v693
  %v744 = vunpack.c.l.b16 %v694
  %v745 = vunpack.c.l.b16 %v695
  %v746 = vunpack.c.l.b16 %v696
  %v747 = vunpack.c.l.b16 %v697
  %v748 = vunpack.c.l.b16 %v698
  %v749 = vpack.c.b16 %v734, %v733
  %v750 = vpack.c.b16 %v736, %v735
  %v751 = vpack.c.b16 %v738, %v737
  %v752 = vpack.c.b16 %v740, %v739
  %v753 = vpack.c.b16 %v742, %v741
  %v754 = vpack.c.b16 %v744, %v743
  %v755 = vpack.c.b16 %v746, %v745
  %v756 = vpack.c.b16 %v748, %v747
  %v759 = vunpack.c.l.b16 %v715
  %v760 = vunpack.c.l.b16 %v716
  %v761 = vpack.c.b16 %v760, %v759
  %vm763 = vcmask 130048
  %v765 = vsel %vm763, %v749, 0
  %v768 = vsel %vm763, %v750, 0
  %v771 = vsel %vm763, %v751, 0
  %v774 = vsel %vm763, %v752, 0
  %v777 = vsel %vm763, %v753, 0
  %v780 = vsel %vm763, %v754, 0
  %v783 = vsel %vm763, %v755, 0
  %v786 = vsel %vm763, %v756, 0
  %788 = vmatprep.subr.bf16.mxu0 0
  %789 = vmatpush1.bf16.msra.mxu0 %v761
  %790 = vmatprep.subr.bf16.mxu0 0
  %791 = vmatpush1.bf16.msra.mxu0 0
  %792 = vmatprep.subr.bf16.mxu0 0
  %793 = vmatpush1.bf16.msra.mxu0 0
  %794 = vmatprep.subr.bf16.mxu0 0
  %795 = vmatpush1.bf16.msra.mxu0 0
  %796 = vmatprep.subr.bf16.mxu0 0
  %797 = vmatpush1.bf16.msra.mxu0 0
  %798 = vmatprep.subr.bf16.mxu0 0
  %799 = vmatpush1.bf16.msra.mxu0 0
  %800 = vmatprep.subr.bf16.mxu0 0
  %801 = vmatpush1.bf16.msra.mxu0 0
  %802 = vmatprep.subr.bf16.mxu0 0
  %803 = vmatpush1.bf16.msra.mxu0 0
  %804 = vmatprep.subr.bf16.mxu0 0
  %805 = vmatpush1.bf16.msra.mxu0 0
  %806 = vmatprep.subr.bf16.mxu0 0
  %807 = vmatpush1.bf16.msra.mxu0 0
  %808 = vmatprep.subr.bf16.mxu0 0
  %809 = vmatpush1.bf16.msra.mxu0 0
  %810 = vmatprep.subr.bf16.mxu0 0
  %811 = vmatpush1.bf16.msra.mxu0 0
  %812 = vmatprep.subr.bf16.mxu0 0
  %813 = vmatpush1.bf16.msra.mxu0 0
  %814 = vmatprep.subr.bf16.mxu0 0
  %815 = vmatpush1.bf16.msra.mxu0 0
  %816 = vmatprep.subr.bf16.mxu0 0
  %817 = vmatpush1.bf16.msra.mxu0 0
  %818 = vmatprep.subr.bf16.mxu0 0
  %819 = vmatpush1.bf16.msra.mxu0 0
  %820 = vmatprep.mubr.bf16.mxu0 0
  %821 = vmatmul.mubr.bf16.gmra.mrb[0].mxu0 %v765
  %v822 = vpop.f32.mrb[0].mxu0
  %v823 = vadd.f32 0.0, %v822
  %v824 = vpop.f32.mrb[0].mxu0
  %v825 = vpop.f32.mrb[0].mxu0
  %v826 = vadd.f32 0.0, %v825
  %v827 = vpop.f32.mrb[0].mxu0
  %828 = vmatprep.mubr.bf16.mxu0 0
  %829 = vmatmul.mubr.bf16.gmra.mrb[0].mxu0 %v768
  %v830 = vpop.f32.mrb[0].mxu0
  %v831 = vadd.f32 0.0, %v830
  %v832 = vpop.f32.mrb[0].mxu0
  %v833 = vpop.f32.mrb[0].mxu0
  %v834 = vadd.f32 0.0, %v833
  %v835 = vpop.f32.mrb[0].mxu0
  %836 = vmatprep.mubr.bf16.mxu0 0
  %837 = vmatmul.mubr.bf16.gmra.mrb[0].mxu0 %v771
  %v838 = vpop.f32.mrb[0].mxu0
  %v839 = vadd.f32 0.0, %v838
  %v840 = vpop.f32.mrb[0].mxu0
  %v841 = vpop.f32.mrb[0].mxu0
  %v842 = vadd.f32 0.0, %v841
  %v843 = vpop.f32.mrb[0].mxu0
  %844 = vmatprep.mubr.bf16.mxu0 0
  %845 = vmatmul.mubr.bf16.gmra.mrb[0].mxu0 %v774
  %v846 = vpop.f32.mrb[0].mxu0
  %v847 = vadd.f32 0.0, %v846
  %v848 = vpop.f32.mrb[0].mxu0
  %v849 = vpop.f32.mrb[0].mxu0
  %v850 = vadd.f32 0.0, %v849
  %v851 = vpop.f32.mrb[0].mxu0
  %852 = vmatprep.mubr.bf16.mxu0 0
  %853 = vmatmul.mubr.bf16.gmra.mrb[0].mxu0 %v777
  %v854 = vpop.f32.mrb[0].mxu0
  %v855 = vadd.f32 0.0, %v854
  %v856 = vpop.f32.mrb[0].mxu0
  %v857 = vpop.f32.mrb[0].mxu0
  %v858 = vadd.f32 0.0, %v857
  %v859 = vpop.f32.mrb[0].mxu0
  %860 = vmatprep.mubr.bf16.mxu0 0
  %861 = vmatmul.mubr.bf16.gmra.mrb[0].mxu0 %v780
  %v862 = vpop.f32.mrb[0].mxu0
  %v863 = vadd.f32 0.0, %v862
  %v864 = vpop.f32.mrb[0].mxu0
  %v865 = vpop.f32.mrb[0].mxu0
  %v866 = vadd.f32 0.0, %v865
  %v867 = vpop.f32.mrb[0].mxu0
  %868 = vmatprep.mubr.bf16.mxu0 0
  %869 = vmatmul.mubr.bf16.gmra.mrb[0].mxu0 %v783
  %v870 = vpop.f32.mrb[0].mxu0
  %v871 = vadd.f32 0.0, %v870
  %v872 = vpop.f32.mrb[0].mxu0
  %v873 = vpop.f32.mrb[0].mxu0
  %v874 = vadd.f32 0.0, %v873
  %v875 = vpop.f32.mrb[0].mxu0
  %876 = vmatprep.mubr.bf16.mxu0 0
  %877 = vmatmul.mubr.bf16.gmra.mrb[0].mxu0 %v786
  %v878 = vpop.f32.mrb[0].mxu0
  %v879 = vadd.f32 0.0, %v878
  %v880 = vpop.f32.mrb[0].mxu0
  %v881 = vpop.f32.mrb[0].mxu0
  %v882 = vadd.f32 0.0, %v881
  %v883 = vpop.f32.mrb[0].mxu0
  %884 = vdwg.mxu0
  %v885 = vadd.f32 %v699, %v823
  %v886 = vadd.f32 %v700, %v826
  %v887 = vadd.f32 %v701, %v831
  %v888 = vadd.f32 %v702, %v834
  %v889 = vadd.f32 %v703, %v839
  %v890 = vadd.f32 %v704, %v842
  %v891 = vadd.f32 %v705, %v847
  %v892 = vadd.f32 %v706, %v850
  %v893 = vadd.f32 %v707, %v855
  %v894 = vadd.f32 %v708, %v858
  %v895 = vadd.f32 %v709, %v863
  %v896 = vadd.f32 %v710, %v866
  %v897 = vadd.f32 %v711, %v871
  %v898 = vadd.f32 %v712, %v874
  %v899 = vadd.f32 %v713, %v879
  %v900 = vadd.f32 %v714, %v882
  %901 = vst [vmem:[#allocation3] sm:$0xff] %v885
  %902 = vst [vmem:[#allocation3 + $0x8] sm:$0xff] %v886
  %903 = vst [vmem:[#allocation3 + $0x10] sm:$0xff] %v887
  %904 = vst [vmem:[#allocation3 + $0x18] sm:$0xff] %v888
  %905 = vst [vmem:[#allocation3 + $0x20] sm:$0xff] %v889
  %906 = vst [vmem:[#allocation3 + $0x28] sm:$0xff] %v890
  %907 = vst [vmem:[#allocation3 + $0x30] sm:$0xff] %v891
  %908 = vst [vmem:[#allocation3 + $0x38] sm:$0xff] %v892
  %909 = vst [vmem:[#allocation3 + $0x40] sm:$0xff] %v893
  %910 = vst [vmem:[#allocation3 + $0x48] sm:$0xff] %v894
  %911 = vst [vmem:[#allocation3 + $0x50] sm:$0xff] %v895
  %912 = vst [vmem:[#allocation3 + $0x58] sm:$0xff] %v896
  %913 = vst [vmem:[#allocation3 + $0x60] sm:$0xff] %v897
  %914 = vst [vmem:[#allocation3 + $0x68] sm:$0xff] %v898
  %915 = vst [vmem:[#allocation3 + $0x70] sm:$0xff] %v899
  %916 = vst [vmem:[#allocation3 + $0x78] sm:$0xff] %v900
  %v917 = vld [vmem:[#allocation2] sm:$0xf]
  %v918 = vld [vmem:[#allocation2 + $0x4] sm:$0x1]
  %v919 = vld [vmem:[#allocation2 + $0x8] sm:$0xf]
  %v920 = vld [vmem:[#allocation2 + $0xc] sm:$0x1]
  %v921 = vld [vmem:[#allocation2 + $0x10] sm:$0xf]
  %v922 = vld [vmem:[#allocation2 + $0x14] sm:$0x1]
  %v923 = vld [vmem:[#allocation2 + $0x18] sm:$0xf]
  %v924 = vld [vmem:[#allocation2 + $0x1c] sm:$0x1]
  %v925 = vld [vmem:[#allocation2 + $0x20] sm:$0xf]
  %v926 = vld [vmem:[#allocation2 + $0x24] sm:$0x1]
  %v927 = vld [vmem:[#allocation2 + $0x28] sm:$0xf]
  %v928 = vld [vmem:[#allocation2 + $0x2c] sm:$0x1]
  %v929 = vld [vmem:[#allocation2 + $0x30] sm:$0xf]
  %v930 = vld [vmem:[#allocation2 + $0x34] sm:$0x1]
  %v931 = vld [vmem:[#allocation2 + $0x38] sm:$0xf]
  %v932 = vld [vmem:[#allocation2 + $0x3c] sm:$0x1]
  %v933 = vld [vmem:[#allocation2 + $0x50] sm:$0xf]
  %v934 = vld [vmem:[#allocation2 + $0x54] sm:$0x1]
  %v935 = vld [vmem:[#allocation2 + $0x58] sm:$0xf]
  %v936 = vld [vmem:[#allocation2 + $0x5c] sm:$0x1]
  %v937 = vld [vmem:[#allocation2 + $0x60] sm:$0xf]
  %v938 = vld [vmem:[#allocation2 + $0x64] sm:$0x1]
  %v939 = vld [vmem:[#allocation2 + $0x68] sm:$0xf]
  %v940 = vld [vmem:[#allocation2 + $0x6c] sm:$0x1]
  %v941 = vld [vmem:[#allocation2 + $0x70] sm:$0xf]
  %v942 = vld [vmem:[#allocation2 + $0x74] sm:$0x1]
  %v943 = vld [vmem:[#allocation2 + $0x78] sm:$0xf]
  %v944 = vld [vmem:[#allocation2 + $0x7c] sm:$0x1]
  %v945 = vld [vmem:[#allocation2 + $0x80] sm:$0xf]
  %v946 = vld [vmem:[#allocation2 + $0x84] sm:$0x1]
  %v947 = vld [vmem:[#allocation2 + $0x88] sm:$0xf]
  %v948 = vld [vmem:[#allocation2 + $0x8c] sm:$0x1]
  %vm949 = vsmask.f32 3328
  %vm950 = vsmask.f32 7440
  %vm951 = vmor %vm949, %vm950
  %v953 = vshrl.u32 %v917, 16
  %v955 = vrot.slane %v953, 4
  %v956 = vshll.u32 %v917, 16
  %v958 = vrot.slane %v956, 5
  %v959 = vor.u32 %v955, %v958
  %v960 = vrot.slane %v959, 4
  %v962 = vshll.u32 %v918, 16
  %v964 = vrot.slane %v962, 5
  %v965 = vsel %vm951, %v960, %v964
  %v967 = vshrl.u32 %v919, 16
  %v969 = vrot.slane %v967, 4
  %v970 = vshll.u32 %v919, 16
  %v972 = vrot.slane %v970, 5
  %v973 = vor.u32 %v969, %v972
  %v974 = vrot.slane %v973, 4
  %v976 = vshll.u32 %v920, 16
  %v978 = vrot.slane %v976, 5
  %v979 = vsel %vm951, %v974, %v978
  %v981 = vshrl.u32 %v921, 16
  %v983 = vrot.slane %v981, 4
  %v984 = vshll.u32 %v921, 16
  %v986 = vrot.slane %v984, 5
  %v987 = vor.u32 %v983, %v986
  %v988 = vrot.slane %v987, 4
  %v990 = vshll.u32 %v922, 16
  %v992 = vrot.slane %v990, 5
  %v993 = vsel %vm951, %v988, %v992
  %v995 = vshrl.u32 %v923, 16
  %v997 = vrot.slane %v995, 4
  %v998 = vshll.u32 %v923, 16
  %v1000 = vrot.slane %v998, 5
  %v1001 = vor.u32 %v997, %v1000
  %v1002 = vrot.slane %v1001, 4
  %v1004 = vshll.u32 %v924, 16
  %v1006 = vrot.slane %v1004, 5
  %v1007 = vsel %vm951, %v1002, %v1006
  %v1009 = vshrl.u32 %v925, 16
  %v1011 = vrot.slane %v1009, 4
  %v1012 = vshll.u32 %v925, 16
  %v1014 = vrot.slane %v1012, 5
  %v1015 = vor.u32 %v1011, %v1014
  %v1016 = vrot.slane %v1015, 4
  %v1018 = vshll.u32 %v926, 16
  %v1020 = vrot.slane %v1018, 5
  %v1021 = vsel %vm951, %v1016, %v1020
  %v1023 = vshrl.u32 %v927, 16
  %v1025 = vrot.slane %v1023, 4
  %v1026 = vshll.u32 %v927, 16
  %v1028 = vrot.slane %v1026, 5
  %v1029 = vor.u32 %v1025, %v1028
  %v1030 = vrot.slane %v1029, 4
  %v1032 = vshll.u32 %v928, 16
  %v1034 = vrot.slane %v1032, 5
  %v1035 = vsel %vm951, %v1030, %v1034
  %v1037 = vshrl.u32 %v929, 16
  %v1039 = vrot.slane %v1037, 4
  %v1040 = vshll.u32 %v929, 16
  %v1042 = vrot.slane %v1040, 5
  %v1043 = vor.u32 %v1039, %v1042
  %v1044 = vrot.slane %v1043, 4
  %v1046 = vshll.u32 %v930, 16
  %v1048 = vrot.slane %v1046, 5
  %v1049 = vsel %vm951, %v1044, %v1048
  %v1051 = vshrl.u32 %v931, 16
  %v1053 = vrot.slane %v1051, 4
  %v1054 = vshll.u32 %v931, 16
  %v1056 = vrot.slane %v1054, 5
  %v1057 = vor.u32 %v1053, %v1056
  %v1058 = vrot.slane %v1057, 4
  %v1060 = vshll.u32 %v932, 16
  %v1062 = vrot.slane %v1060, 5
  %v1063 = vsel %vm951, %v1058, %v1062
  %v1065 = vshrl.u32 %v933, 16
  %v1067 = vrot.slane %v1065, 4
  %v1068 = vshll.u32 %v933, 16
  %v1070 = vrot.slane %v1068, 5
  %v1071 = vor.u32 %v1067, %v1070
  %v1072 = vrot.slane %v1071, 4
  %v1074 = vshll.u32 %v934, 16
  %v1076 = vrot.slane %v1074, 5
  %v1077 = vsel %vm951, %v1072, %v1076
  %v1079 = vshrl.u32 %v935, 16
  %v1081 = vrot.slane %v1079, 4
  %v1082 = vshll.u32 %v935, 16
  %v1084 = vrot.slane %v1082, 5
  %v1085 = vor.u32 %v1081, %v1084
  %v1086 = vrot.slane %v1085, 4
  %v1088 = vshll.u32 %v936, 16
  %v1090 = vrot.slane %v1088, 5
  %v1091 = vsel %vm951, %v1086, %v1090
  %v1093 = vshrl.u32 %v937, 16
  %v1095 = vrot.slane %v1093, 4
  %v1096 = vshll.u32 %v937, 16
  %v1098 = vrot.slane %v1096, 5
  %v1099 = vor.u32 %v1095, %v1098
  %v1100 = vrot.slane %v1099, 4
  %v1102 = vshll.u32 %v938, 16
  %v1104 = vrot.slane %v1102, 5
  %v1105 = vsel %vm951, %v1100, %v1104
  %v1107 = vshrl.u32 %v939, 16
  %v1109 = vrot.slane %v1107, 4
  %v1110 = vshll.u32 %v939, 16
  %v1112 = vrot.slane %v1110, 5
  %v1113 = vor.u32 %v1109, %v1112
  %v1114 = vrot.slane %v1113, 4
  %v1116 = vshll.u32 %v940, 16
  %v1118 = vrot.slane %v1116, 5
  %v1119 = vsel %vm951, %v1114, %v1118
  %v1121 = vshrl.u32 %v941, 16
  %v1123 = vrot.slane %v1121, 4
  %v1124 = vshll.u32 %v941, 16
  %v1126 = vrot.slane %v1124, 5
  %v1127 = vor.u32 %v1123, %v1126
  %v1128 = vrot.slane %v1127, 4
  %v1130 = vshll.u32 %v942, 16
  %v1132 = vrot.slane %v1130, 5
  %v1133 = vsel %vm951, %v1128, %v1132
  %v1135 = vshrl.u32 %v943, 16
  %v1137 = vrot.slane %v1135, 4
  %v1138 = vshll.u32 %v943, 16
  %v1140 = vrot.slane %v1138, 5
  %v1141 = vor.u32 %v1137, %v1140
  %v1142 = vrot.slane %v1141, 4
  %v1144 = vshll.u32 %v944, 16
  %v1146 = vrot.slane %v1144, 5
  %v1147 = vsel %vm951, %v1142, %v1146
  %v1149 = vshrl.u32 %v945, 16
  %v1151 = vrot.slane %v1149, 4
  %v1152 = vshll.u32 %v945, 16
  %v1154 = vrot.slane %v1152, 5
  %v1155 = vor.u32 %v1151, %v1154
  %v1156 = vrot.slane %v1155, 4
  %v1158 = vshll.u32 %v946, 16
  %v1160 = vrot.slane %v1158, 5
  %v1161 = vsel %vm951, %v1156, %v1160
  %v1163 = vshrl.u32 %v947, 16
  %v1165 = vrot.slane %v1163, 4
  %v1166 = vshll.u32 %v947, 16
  %v1168 = vrot.slane %v1166, 5
  %v1169 = vor.u32 %v1165, %v1168
  %v1170 = vrot.slane %v1169, 4
  %v1172 = vshll.u32 %v948, 16
  %v1174 = vrot.slane %v1172, 5
  %v1175 = vsel %vm951, %v1170, %v1174
  %v1176 = vld [vmem:[#allocation3] sm:$0xff]
  %v1177 = vld [vmem:[#allocation3 + $0x8] sm:$0xff]
  %v1178 = vld [vmem:[#allocation3 + $0x10] sm:$0xff]
  %v1179 = vld [vmem:[#allocation3 + $0x18] sm:$0xff]
  %v1180 = vld [vmem:[#allocation3 + $0x20] sm:$0xff]
  %v1181 = vld [vmem:[#allocation3 + $0x28] sm:$0xff]
  %v1182 = vld [vmem:[#allocation3 + $0x30] sm:$0xff]
  %v1183 = vld [vmem:[#allocation3 + $0x38] sm:$0xff]
  %v1184 = vld [vmem:[#allocation3 + $0x40] sm:$0xff]
  %v1185 = vld [vmem:[#allocation3 + $0x48] sm:$0xff]
  %v1186 = vld [vmem:[#allocation3 + $0x50] sm:$0xff]
  %v1187 = vld [vmem:[#allocation3 + $0x58] sm:$0xff]
  %v1188 = vld [vmem:[#allocation3 + $0x60] sm:$0xff]
  %v1189 = vld [vmem:[#allocation3 + $0x68] sm:$0xff]
  %v1190 = vld [vmem:[#allocation3 + $0x70] sm:$0xff]
  %v1191 = vld [vmem:[#allocation3 + $0x78] sm:$0xff]
  %s1192 = scalar_lea.vmem %s3, 8
  %v1193 = vld [vmem:[%s1192] sm:$0xf]
  %v1194 = vld [vmem:[%s1192 + $0x4] sm:$0xf]
  %v1195 = vunpack.c.l.b16 %v965
  %v1196 = vunpack.c.l.b16 %v979
  %v1197 = vunpack.c.l.b16 %v993
  %v1198 = vunpack.c.l.b16 %v1007
  %v1199 = vunpack.c.l.b16 %v1021
  %v1200 = vunpack.c.l.b16 %v1035
  %v1201 = vunpack.c.l.b16 %v1049
  %v1202 = vunpack.c.l.b16 %v1063
  %v1203 = vunpack.c.l.b16 %v1077
  %v1204 = vunpack.c.l.b16 %v1091
  %v1205 = vunpack.c.l.b16 %v1105
  %v1206 = vunpack.c.l.b16 %v1119
  %v1207 = vunpack.c.l.b16 %v1133
  %v1208 = vunpack.c.l.b16 %v1147
  %v1209 = vunpack.c.l.b16 %v1161
  %v1210 = vunpack.c.l.b16 %v1175
  %v1211 = vpack.c.b16 %v1196, %v1195
  %v1212 = vpack.c.b16 %v1198, %v1197
  %v1213 = vpack.c.b16 %v1200, %v1199
  %v1214 = vpack.c.b16 %v1202, %v1201
  %v1215 = vpack.c.b16 %v1204, %v1203
  %v1216 = vpack.c.b16 %v1206, %v1205
  %v1217 = vpack.c.b16 %v1208, %v1207
  %v1218 = vpack.c.b16 %v1210, %v1209
  %v1221 = vunpack.c.l.b16 %v1193
  %v1222 = vunpack.c.l.b16 %v1194
  %v1223 = vpack.c.b16 %v1222, %v1221
  %v1226 = vsel %vm763, %v1211, 0
  %v1229 = vsel %vm763, %v1212, 0
  %v1232 = vsel %vm763, %v1213, 0
  %v1235 = vsel %vm763, %v1214, 0
  %v1238 = vsel %vm763, %v1215, 0
  %v1241 = vsel %vm763, %v1216, 0
  %v1244 = vsel %vm763, %v1217, 0
  %v1247 = vsel %vm763, %v1218, 0
  %1249 = vmatprep.subr.bf16.mxu0 0
  %1250 = vmatpush1.bf16.msra.mxu0 %v1223
  %1251 = vmatprep.subr.bf16.mxu0 0
  %1252 = vmatpush1.bf16.msra.mxu0 0
  %1253 = vmatprep.subr.bf16.mxu0 0
  %1254 = vmatpush1.bf16.msra.mxu0 0
  %1255 = vmatprep.subr.bf16.mxu0 0
  %1256 = vmatpush1.bf16.msra.mxu0 0
  %1257 = vmatprep.subr.bf16.mxu0 0
  %1258 = vmatpush1.bf16.msra.mxu0 0
  %1259 = vmatprep.subr.bf16.mxu0 0
  %1260 = vmatpush1.bf16.msra.mxu0 0
  %1261 = vmatprep.subr.bf16.mxu0 0
  %1262 = vmatpush1.bf16.msra.mxu0 0
  %1263 = vmatprep.subr.bf16.mxu0 0
  %1264 = vmatpush1.bf16.msra.mxu0 0
  %1265 = vmatprep.subr.bf16.mxu0 0
  %1266 = vmatpush1.bf16.msra.mxu0 0
  %1267 = vmatprep.subr.bf16.mxu0 0
  %1268 = vmatpush1.bf16.msra.mxu0 0
  %1269 = vmatprep.subr.bf16.mxu0 0
  %1270 = vmatpush1.bf16.msra.mxu0 0
  %1271 = vmatprep.subr.bf16.mxu0 0
  %1272 = vmatpush1.bf16.msra.mxu0 0
  %1273 = vmatprep.subr.bf16.mxu0 0
  %1274 = vmatpush1.bf16.msra.mxu0 0
  %1275 = vmatprep.subr.bf16.mxu0 0
  %1276 = vmatpush1.bf16.msra.mxu0 0
  %1277 = vmatprep.subr.bf16.mxu0 0
  %1278 = vmatpush1.bf16.msra.mxu0 0
  %1279 = vmatprep.subr.bf16.mxu0 0
  %1280 = vmatpush1.bf16.msra.mxu0 0
  %1281 = vmatprep.mubr.bf16.mxu0 0
  %1282 = vmatmul.mubr.bf16.gmra.mrb[0].mxu0 %v1226
  %v1283 = vpop.f32.mrb[0].mxu0
  %v1284 = vadd.f32 0.0, %v1283
  %v1285 = vpop.f32.mrb[0].mxu0
  %v1286 = vpop.f32.mrb[0].mxu0
  %v1287 = vadd.f32 0.0, %v1286
  %v1288 = vpop.f32.mrb[0].mxu0
  %1289 = vmatprep.mubr.bf16.mxu0 0
  %1290 = vmatmul.mubr.bf16.gmra.mrb[0].mxu0 %v1229
  %v1291 = vpop.f32.mrb[0].mxu0
  %v1292 = vadd.f32 0.0, %v1291
  %v1293 = vpop.f32.mrb[0].mxu0
  %v1294 = vpop.f32.mrb[0].mxu0
  %v1295 = vadd.f32 0.0, %v1294
  %v1296 = vpop.f32.mrb[0].mxu0
  %1297 = vmatprep.mubr.bf16.mxu0 0
  %1298 = vmatmul.mubr.bf16.gmra.mrb[0].mxu0 %v1232
  %v1299 = vpop.f32.mrb[0].mxu0
  %v1300 = vadd.f32 0.0, %v1299
  %v1301 = vpop.f32.mrb[0].mxu0
  %v1302 = vpop.f32.mrb[0].mxu0
  %v1303 = vadd.f32 0.0, %v1302
  %v1304 = vpop.f32.mrb[0].mxu0
  %1305 = vmatprep.mubr.bf16.mxu0 0
  %1306 = vmatmul.mubr.bf16.gmra.mrb[0].mxu0 %v1235
  %v1307 = vpop.f32.mrb[0].mxu0
  %v1308 = vadd.f32 0.0, %v1307
  %v1309 = vpop.f32.mrb[0].mxu0
  %v1310 = vpop.f32.mrb[0].mxu0
  %v1311 = vadd.f32 0.0, %v1310
  %v1312 = vpop.f32.mrb[0].mxu0
  %1313 = vmatprep.mubr.bf16.mxu0 0
  %1314 = vmatmul.mubr.bf16.gmra.mrb[0].mxu0 %v1238
  %v1315 = vpop.f32.mrb[0].mxu0
  %v1316 = vadd.f32 0.0, %v1315
  %v1317 = vpop.f32.mrb[0].mxu0
  %v1318 = vpop.f32.mrb[0].mxu0
  %v1319 = vadd.f32 0.0, %v1318
  %v1320 = vpop.f32.mrb[0].mxu0
  %1321 = vmatprep.mubr.bf16.mxu0 0
  %1322 = vmatmul.mubr.bf16.gmra.mrb[0].mxu0 %v1241
  %v1323 = vpop.f32.mrb[0].mxu0
  %v1324 = vadd.f32 0.0, %v1323
  %v1325 = vpop.f32.mrb[0].mxu0
  %v1326 = vpop.f32.mrb[0].mxu0
  %v1327 = vadd.f32 0.0, %v1326
  %v1328 = vpop.f32.mrb[0].mxu0
  %1329 = vmatprep.mubr.bf16.mxu0 0
  %1330 = vmatmul.mubr.bf16.gmra.mrb[0].mxu0 %v1244
  %v1331 = vpop.f32.mrb[0].mxu0
  %v1332 = vadd.f32 0.0, %v1331
  %v1333 = vpop.f32.mrb[0].mxu0
  %v1334 = vpop.f32.mrb[0].mxu0
  %v1335 = vadd.f32 0.0, %v1334
  %v1336 = vpop.f32.mrb[0].mxu0
  %1337 = vmatprep.mubr.bf16.mxu0 0
  %1338 = vmatmul.mubr.bf16.gmra.mrb[0].mxu0 %v1247
  %v1339 = vpop.f32.mrb[0].mxu0
  %v1340 = vadd.f32 0.0, %v1339
  %v1341 = vpop.f32.mrb[0].mxu0
  %v1342 = vpop.f32.mrb[0].mxu0
  %v1343 = vadd.f32 0.0, %v1342
  %v1344 = vpop.f32.mrb[0].mxu0
  %1345 = vdwg.mxu0
  %v1346 = vadd.f32 %v1176, %v1284
  %v1347 = vadd.f32 %v1177, %v1287
  %v1348 = vadd.f32 %v1178, %v1292
  %v1349 = vadd.f32 %v1179, %v1295
  %v1350 = vadd.f32 %v1180, %v1300
  %v1351 = vadd.f32 %v1181, %v1303
  %v1352 = vadd.f32 %v1182, %v1308
  %v1353 = vadd.f32 %v1183, %v1311
  %v1354 = vadd.f32 %v1184, %v1316
  %v1355 = vadd.f32 %v1185, %v1319
  %v1356 = vadd.f32 %v1186, %v1324
  %v1357 = vadd.f32 %v1187, %v1327
  %v1358 = vadd.f32 %v1188, %v1332
  %v1359 = vadd.f32 %v1189, %v1335
  %v1360 = vadd.f32 %v1190, %v1340
  %v1361 = vadd.f32 %v1191, %v1343
  %1362 = vst [vmem:[#allocation3] sm:$0xff] %v1346
  %1363 = vst [vmem:[#allocation3 + $0x8] sm:$0xff] %v1347
  %1364 = vst [vmem:[#allocation3 + $0x10] sm:$0xff] %v1348
  %1365 = vst [vmem:[#allocation3 + $0x18] sm:$0xff] %v1349
  %1366 = vst [vmem:[#allocation3 + $0x20] sm:$0xff] %v1350
  %1367 = vst [vmem:[#allocation3 + $0x28] sm:$0xff] %v1351
  %1368 = vst [vmem:[#allocation3 + $0x30] sm:$0xff] %v1352
  %1369 = vst [vmem:[#allocation3 + $0x38] sm:$0xff] %v1353
  %1370 = vst [vmem:[#allocation3 + $0x40] sm:$0xff] %v1354
  %1371 = vst [vmem:[#allocation3 + $0x48] sm:$0xff] %v1355
  %1372 = vst [vmem:[#allocation3 + $0x50] sm:$0xff] %v1356
  %1373 = vst [vmem:[#allocation3 + $0x58] sm:$0xff] %v1357
  %1374 = vst [vmem:[#allocation3 + $0x60] sm:$0xff] %v1358
  %1375 = vst [vmem:[#allocation3 + $0x68] sm:$0xff] %v1359
  %1376 = vst [vmem:[#allocation3 + $0x70] sm:$0xff] %v1360
  %1377 = vst [vmem:[#allocation3 + $0x78] sm:$0xff] %v1361
  %v1378 = vld [vmem:[#allocation2] sm:$0xe]
  %v1379 = vld [vmem:[#allocation2 + $0x4] sm:$0x1]
  %v1380 = vld [vmem:[#allocation2 + $0x8] sm:$0xe]
  %v1381 = vld [vmem:[#allocation2 + $0xc] sm:$0x1]
  %v1382 = vld [vmem:[#allocation2 + $0x10] sm:$0xe]
  %v1383 = vld [vmem:[#allocation2 + $0x14] sm:$0x1]
  %v1384 = vld [vmem:[#allocation2 + $0x18] sm:$0xe]
  %v1385 = vld [vmem:[#allocation2 + $0x1c] sm:$0x1]
  %v1386 = vld [vmem:[#allocation2 + $0x20] sm:$0xe]
  %v1387 = vld [vmem:[#allocation2 + $0x24] sm:$0x1]
  %v1388 = vld [vmem:[#allocation2 + $0x28] sm:$0xe]
  %v1389 = vld [vmem:[#allocation2 + $0x2c] sm:$0x1]
  %v1390 = vld [vmem:[#allocation2 + $0x30] sm:$0xe]
  %v1391 = vld [vmem:[#allocation2 + $0x34] sm:$0x1]
  %v1392 = vld [vmem:[#allocation2 + $0x38] sm:$0xe]
  %v1393 = vld [vmem:[#allocation2 + $0x3c] sm:$0x1]
  %v1394 = vld [vmem:[#allocation2 + $0x50] sm:$0xe]
  %v1395 = vld [vmem:[#allocation2 + $0x54] sm:$0x1]
  %v1396 = vld [vmem:[#allocation2 + $0x58] sm:$0xe]
  %v1397 = vld [vmem:[#allocation2 + $0x5c] sm:$0x1]
  %v1398 = vld [vmem:[#allocation2 + $0x60] sm:$0xe]
  %v1399 = vld [vmem:[#allocation2 + $0x64] sm:$0x1]
  %v1400 = vld [vmem:[#allocation2 + $0x68] sm:$0xe]
  %v1401 = vld [vmem:[#allocation2 + $0x6c] sm:$0x1]
  %v1402 = vld [vmem:[#allocation2 + $0x70] sm:$0xe]
  %v1403 = vld [vmem:[#allocation2 + $0x74] sm:$0x1]
  %v1404 = vld [vmem:[#allocation2 + $0x78] sm:$0xe]
  %v1405 = vld [vmem:[#allocation2 + $0x7c] sm:$0x1]
  %v1406 = vld [vmem:[#allocation2 + $0x80] sm:$0xe]
  %v1407 = vld [vmem:[#allocation2 + $0x84] sm:$0x1]
  %v1408 = vld [vmem:[#allocation2 + $0x88] sm:$0xe]
  %v1409 = vld [vmem:[#allocation2 + $0x8c] sm:$0x1]
  %vm1442 = vcmask 1042432
  %vm1443 = vcmask 1046532
  %vm1444 = vmor %vm1442, %vm1443
  %v1445 = vrot.slane %v1378, 5
  %v1446 = vrot.slane %v1445, 4
  %v1447 = vrot.slane %v1379, 5
  %v1448 = vsel %vm1444, %v1446, %v1447
  %v1449 = vrot.slane %v1380, 5
  %v1450 = vrot.slane %v1449, 4
  %v1451 = vrot.slane %v1381, 5
  %v1452 = vsel %vm1444, %v1450, %v1451
  %v1453 = vrot.slane %v1382, 5
  %v1454 = vrot.slane %v1453, 4
  %v1455 = vrot.slane %v1383, 5
  %v1456 = vsel %vm1444, %v1454, %v1455
  %v1457 = vrot.slane %v1384, 5
  %v1458 = vrot.slane %v1457, 4
  %v1459 = vrot.slane %v1385, 5
  %v1460 = vsel %vm1444, %v1458, %v1459
  %v1461 = vrot.slane %v1386, 5
  %v1462 = vrot.slane %v1461, 4
  %v1463 = vrot.slane %v1387, 5
  %v1464 = vsel %vm1444, %v1462, %v1463
  %v1465 = vrot.slane %v1388, 5
  %v1466 = vrot.slane %v1465, 4
  %v1467 = vrot.slane %v1389, 5
  %v1468 = vsel %vm1444, %v1466, %v1467
  %v1469 = vrot.slane %v1390, 5
  %v1470 = vrot.slane %v1469, 4
  %v1471 = vrot.slane %v1391, 5
  %v1472 = vsel %vm1444, %v1470, %v1471
  %v1473 = vrot.slane %v1392, 5
  %v1474 = vrot.slane %v1473, 4
  %v1475 = vrot.slane %v1393, 5
  %v1476 = vsel %vm1444, %v1474, %v1475
  %v1477 = vrot.slane %v1394, 5
  %v1478 = vrot.slane %v1477, 4
  %v1479 = vrot.slane %v1395, 5
  %v1480 = vsel %vm1444, %v1478, %v1479
  %v1481 = vrot.slane %v1396, 5
  %v1482 = vrot.slane %v1481, 4
  %v1483 = vrot.slane %v1397, 5
  %v1484 = vsel %vm1444, %v1482, %v1483
  %v1485 = vrot.slane %v1398, 5
  %v1486 = vrot.slane %v1485, 4
  %v1487 = vrot.slane %v1399, 5
  %v1488 = vsel %vm1444, %v1486, %v1487
  %v1489 = vrot.slane %v1400, 5
  %v1490 = vrot.slane %v1489, 4
  %v1491 = vrot.slane %v1401, 5
  %v1492 = vsel %vm1444, %v1490, %v1491
  %v1493 = vrot.slane %v1402, 5
  %v1494 = vrot.slane %v1493, 4
  %v1495 = vrot.slane %v1403, 5
  %v1496 = vsel %vm1444, %v1494, %v1495
  %v1497 = vrot.slane %v1404, 5
  %v1498 = vrot.slane %v1497, 4
  %v1499 = vrot.slane %v1405, 5
  %v1500 = vsel %vm1444, %v1498, %v1499
  %v1501 = vrot.slane %v1406, 5
  %v1502 = vrot.slane %v1501, 4
  %v1503 = vrot.slane %v1407, 5
  %v1504 = vsel %vm1444, %v1502, %v1503
  %v1505 = vrot.slane %v1408, 5
  %v1506 = vrot.slane %v1505, 4
  %v1507 = vrot.slane %v1409, 5
  %v1508 = vsel %vm1444, %v1506, %v1507
  %v1509 = vld [vmem:[#allocation3] sm:$0xff]
  %v1510 = vld [vmem:[#allocation3 + $0x8] sm:$0xff]
  %v1511 = vld [vmem:[#allocation3 + $0x10] sm:$0xff]
  %v1512 = vld [vmem:[#allocation3 + $0x18] sm:$0xff]
  %v1513 = vld [vmem:[#allocation3 + $0x20] sm:$0xff]
  %v1514 = vld [vmem:[#allocation3 + $0x28] sm:$0xff]
  %v1515 = vld [vmem:[#allocation3 + $0x30] sm:$0xff]
  %v1516 = vld [vmem:[#allocation3 + $0x38] sm:$0xff]
  %v1517 = vld [vmem:[#allocation3 + $0x40] sm:$0xff]
  %v1518 = vld [vmem:[#allocation3 + $0x48] sm:$0xff]
  %v1519 = vld [vmem:[#allocation3 + $0x50] sm:$0xff]
  %v1520 = vld [vmem:[#allocation3 + $0x58] sm:$0xff]
  %v1521 = vld [vmem:[#allocation3 + $0x60] sm:$0xff]
  %v1522 = vld [vmem:[#allocation3 + $0x68] sm:$0xff]
  %v1523 = vld [vmem:[#allocation3 + $0x70] sm:$0xff]
  %v1524 = vld [vmem:[#allocation3 + $0x78] sm:$0xff]
  %s1525 = scalar_lea.vmem %s3, 16
  %v1526 = vld [vmem:[%s1525] sm:$0xf]
  %v1527 = vld [vmem:[%s1525 + $0x4] sm:$0xf]
  %v1528 = vunpack.c.l.b16 %v1448
  %v1529 = vunpack.c.l.b16 %v1452
  %v1530 = vunpack.c.l.b16 %v1456
  %v1531 = vunpack.c.l.b16 %v1460
  %v1532 = vunpack.c.l.b16 %v1464
  %v1533 = vunpack.c.l.b16 %v1468
  %v1534 = vunpack.c.l.b16 %v1472
  %v1535 = vunpack.c.l.b16 %v1476
  %v1536 = vunpack.c.l.b16 %v1480
  %v1537 = vunpack.c.l.b16 %v1484
  %v1538 = vunpack.c.l.b16 %v1488
  %v1539 = vunpack.c.l.b16 %v1492
  %v1540 = vunpack.c.l.b16 %v1496
  %v1541 = vunpack.c.l.b16 %v1500
  %v1542 = vunpack.c.l.b16 %v1504
  %v1543 = vunpack.c.l.b16 %v1508
  %v1544 = vpack.c.b16 %v1529, %v1528
  %v1545 = vpack.c.b16 %v1531, %v1530
  %v1546 = vpack.c.b16 %v1533, %v1532
  %v1547 = vpack.c.b16 %v1535, %v1534
  %v1548 = vpack.c.b16 %v1537, %v1536
  %v1549 = vpack.c.b16 %v1539, %v1538
  %v1550 = vpack.c.b16 %v1541, %v1540
  %v1551 = vpack.c.b16 %v1543, %v1542
  %v1554 = vunpack.c.l.b16 %v1526
  %v1555 = vunpack.c.l.b16 %v1527
  %v1556 = vpack.c.b16 %v1555, %v1554
  %v1559 = vsel %vm763, %v1544, 0
  %v1562 = vsel %vm763, %v1545, 0
  %v1565 = vsel %vm763, %v1546, 0
  %v1568 = vsel %vm763, %v1547, 0
  %v1571 = vsel %vm763, %v1548, 0
  %v1574 = vsel %vm763, %v1549, 0
  %v1577 = vsel %vm763, %v1550, 0
  %v1580 = vsel %vm763, %v1551, 0
  %1582 = vmatprep.subr.bf16.mxu0 0
  %1583 = vmatpush1.bf16.msra.mxu0 %v1556
  %1584 = vmatprep.subr.bf16.mxu0 0
  %1585 = vmatpush1.bf16.msra.mxu0 0
  %1586 = vmatprep.subr.bf16.mxu0 0
  %1587 = vmatpush1.bf16.msra.mxu0 0
  %1588 = vmatprep.subr.bf16.mxu0 0
  %1589 = vmatpush1.bf16.msra.mxu0 0
  %1590 = vmatprep.subr.bf16.mxu0 0
  %1591 = vmatpush1.bf16.msra.mxu0 0
  %1592 = vmatprep.subr.bf16.mxu0 0
  %1593 = vmatpush1.bf16.msra.mxu0 0
  %1594 = vmatprep.subr.bf16.mxu0 0
  %1595 = vmatpush1.bf16.msra.mxu0 0
  %1596 = vmatprep.subr.bf16.mxu0 0
  %1597 = vmatpush1.bf16.msra.mxu0 0
  %1598 = vmatprep.subr.bf16.mxu0 0
  %1599 = vmatpush1.bf16.msra.mxu0 0
  %1600 = vmatprep.subr.bf16.mxu0 0
  %1601 = vmatpush1.bf16.msra.mxu0 0
  %1602 = vmatprep.subr.bf16.mxu0 0
  %1603 = vmatpush1.bf16.msra.mxu0 0
  %1604 = vmatprep.subr.bf16.mxu0 0
  %1605 = vmatpush1.bf16.msra.mxu0 0
  %1606 = vmatprep.subr.bf16.mxu0 0
  %1607 = vmatpush1.bf16.msra.mxu0 0
  %1608 = vmatprep.subr.bf16.mxu0 0
  %1609 = vmatpush1.bf16.msra.mxu0 0
  %1610 = vmatprep.subr.bf16.mxu0 0
  %1611 = vmatpush1.bf16.msra.mxu0 0
  %1612 = vmatprep.subr.bf16.mxu0 0
  %1613 = vmatpush1.bf16.msra.mxu0 0
  %1614 = vmatprep.mubr.bf16.mxu0 0
  %1615 = vmatmul.mubr.bf16.gmra.mrb[0].mxu0 %v1559
  %v1616 = vpop.f32.mrb[0].mxu0
  %v1617 = vadd.f32 0.0, %v1616
  %v1618 = vpop.f32.mrb[0].mxu0
  %v1619 = vpop.f32.mrb[0].mxu0
  %v1620 = vadd.f32 0.0, %v1619
  %v1621 = vpop.f32.mrb[0].mxu0
  %1622 = vmatprep.mubr.bf16.mxu0 0
  %1623 = vmatmul.mubr.bf16.gmra.mrb[0].mxu0 %v1562
  %v1624 = vpop.f32.mrb[0].mxu0
  %v1625 = vadd.f32 0.0, %v1624
  %v1626 = vpop.f32.mrb[0].mxu0
  %v1627 = vpop.f32.mrb[0].mxu0
  %v1628 = vadd.f32 0.0, %v1627
  %v1629 = vpop.f32.mrb[0].mxu0
  %1630 = vmatprep.mubr.bf16.mxu0 0
  %1631 = vmatmul.mubr.bf16.gmra.mrb[0].mxu0 %v1565
  %v1632 = vpop.f32.mrb[0].mxu0
  %v1633 = vadd.f32 0.0, %v1632
  %v1634 = vpop.f32.mrb[0].mxu0
  %v1635 = vpop.f32.mrb[0].mxu0
  %v1636 = vadd.f32 0.0, %v1635
  %v1637 = vpop.f32.mrb[0].mxu0
  %1638 = vmatprep.mubr.bf16.mxu0 0
  %1639 = vmatmul.mubr.bf16.gmra.mrb[0].mxu0 %v1568
  %v1640 = vpop.f32.mrb[0].mxu0
  %v1641 = vadd.f32 0.0, %v1640
  %v1642 = vpop.f32.mrb[0].mxu0
  %v1643 = vpop.f32.mrb[0].mxu0
  %v1644 = vadd.f32 0.0, %v1643
  %v1645 = vpop.f32.mrb[0].mxu0
  %1646 = vmatprep.mubr.bf16.mxu0 0
  %1647 = vmatmul.mubr.bf16.gmra.mrb[0].mxu0 %v1571
  %v1648 = vpop.f32.mrb[0].mxu0
  %v1649 = vadd.f32 0.0, %v1648
  %v1650 = vpop.f32.mrb[0].mxu0
  %v1651 = vpop.f32.mrb[0].mxu0
  %v1652 = vadd.f32 0.0, %v1651
  %v1653 = vpop.f32.mrb[0].mxu0
  %1654 = vmatprep.mubr.bf16.mxu0 0
  %1655 = vmatmul.mubr.bf16.gmra.mrb[0].mxu0 %v1574
  %v1656 = vpop.f32.mrb[0].mxu0
  %v1657 = vadd.f32 0.0, %v1656
  %v1658 = vpop.f32.mrb[0].mxu0
  %v1659 = vpop.f32.mrb[0].mxu0
  %v1660 = vadd.f32 0.0, %v1659
  %v1661 = vpop.f32.mrb[0].mxu0
  %1662 = vmatprep.mubr.bf16.mxu0 0
  %1663 = vmatmul.mubr.bf16.gmra.mrb[0].mxu0 %v1577
  %v1664 = vpop.f32.mrb[0].mxu0
  %v1665 = vadd.f32 0.0, %v1664
  %v1666 = vpop.f32.mrb[0].mxu0
  %v1667 = vpop.f32.mrb[0].mxu0
  %v1668 = vadd.f32 0.0, %v1667
  %v1669 = vpop.f32.mrb[0].mxu0
  %1670 = vmatprep.mubr.bf16.mxu0 0
  %1671 = vmatmul.mubr.bf16.gmra.mrb[0].mxu0 %v1580
  %v1672 = vpop.f32.mrb[0].mxu0
  %v1673 = vadd.f32 0.0, %v1672
  %v1674 = vpop.f32.mrb[0].mxu0
  %v1675 = vpop.f32.mrb[0].mxu0
  %v1676 = vadd.f32 0.0, %v1675
  %v1677 = vpop.f32.mrb[0].mxu0
  %1678 = vdwg.mxu0
  %v1679 = vadd.f32 %v1509, %v1617
  %v1680 = vadd.f32 %v1510, %v1620
  %v1681 = vadd.f32 %v1511, %v1625
  %v1682 = vadd.f32 %v1512, %v1628
  %v1683 = vadd.f32 %v1513, %v1633
  %v1684 = vadd.f32 %v1514, %v1636
  %v1685 = vadd.f32 %v1515, %v1641
  %v1686 = vadd.f32 %v1516, %v1644
  %v1687 = vadd.f32 %v1517, %v1649
  %v1688 = vadd.f32 %v1518, %v1652
  %v1689 = vadd.f32 %v1519, %v1657
  %v1690 = vadd.f32 %v1520, %v1660
  %v1691 = vadd.f32 %v1521, %v1665
  %v1692 = vadd.f32 %v1522, %v1668
  %v1693 = vadd.f32 %v1523, %v1673
  %v1694 = vadd.f32 %v1524, %v1676
  %1695 = vst [vmem:[#allocation3] sm:$0xff] %v1679
  %1696 = vst [vmem:[#allocation3 + $0x8] sm:$0xff] %v1680
  %1697 = vst [vmem:[#allocation3 + $0x10] sm:$0xff] %v1681
  %1698 = vst [vmem:[#allocation3 + $0x18] sm:$0xff] %v1682
  %1699 = vst [vmem:[#allocation3 + $0x20] sm:$0xff] %v1683
  %1700 = vst [vmem:[#allocation3 + $0x28] sm:$0xff] %v1684
  %1701 = vst [vmem:[#allocation3 + $0x30] sm:$0xff] %v1685
  %1702 = vst [vmem:[#allocation3 + $0x38] sm:$0xff] %v1686
  %1703 = vst [vmem:[#allocation3 + $0x40] sm:$0xff] %v1687
  %1704 = vst [vmem:[#allocation3 + $0x48] sm:$0xff] %v1688
  %1705 = vst [vmem:[#allocation3 + $0x50] sm:$0xff] %v1689
  %1706 = vst [vmem:[#allocation3 + $0x58] sm:$0xff] %v1690
  %1707 = vst [vmem:[#allocation3 + $0x60] sm:$0xff] %v1691
  %1708 = vst [vmem:[#allocation3 + $0x68] sm:$0xff] %v1692
  %1709 = vst [vmem:[#allocation3 + $0x70] sm:$0xff] %v1693
  %1710 = vst [vmem:[#allocation3 + $0x78] sm:$0xff] %v1694
  %v1711 = vld [vmem:[%s580] sm:$0xf]
  %v1712 = vld [vmem:[%s580 + $0x8] sm:$0xf]
  %v1713 = vld [vmem:[%s580 + $0x10] sm:$0xf]
  %v1714 = vld [vmem:[%s580 + $0x18] sm:$0xf]
  %v1715 = vld [vmem:[%s580 + $0x20] sm:$0xf]
  %v1716 = vld [vmem:[%s580 + $0x28] sm:$0xf]
  %v1717 = vld [vmem:[%s580 + $0x30] sm:$0xf]
  %v1718 = vld [vmem:[%s580 + $0x38] sm:$0xf]
  %v1719 = vld [vmem:[%s580 + $0x50] sm:$0xf]
  %v1720 = vld [vmem:[%s580 + $0x58] sm:$0xf]
  %v1721 = vld [vmem:[%s580 + $0x60] sm:$0xf]
  %v1722 = vld [vmem:[%s580 + $0x68] sm:$0xf]
  %v1723 = vld [vmem:[%s580 + $0x70] sm:$0xf]
  %v1724 = vld [vmem:[%s580 + $0x78] sm:$0xf]
  %v1725 = vld [vmem:[%s580 + $0x80] sm:$0xf]
  %v1726 = vld [vmem:[%s580 + $0x88] sm:$0xf]
  %v1727 = vld [vmem:[#allocation3] sm:$0xff]
  %v1728 = vld [vmem:[#allocation3 + $0x8] sm:$0xff]
  %v1729 = vld [vmem:[#allocation3 + $0x10] sm:$0xff]
  %v1730 = vld [vmem:[#allocation3 + $0x18] sm:$0xff]
  %v1731 = vld [vmem:[#allocation3 + $0x20] sm:$0xff]
  %v1732 = vld [vmem:[#allocation3 + $0x28] sm:$0xff]
  %v1733 = vld [vmem:[#allocation3 + $0x30] sm:$0xff]
  %v1734 = vld [vmem:[#allocation3 + $0x38] sm:$0xff]
  %v1735 = vld [vmem:[#allocation3 + $0x40] sm:$0xff]
  %v1736 = vld [vmem:[#allocation3 + $0x48] sm:$0xff]
  %v1737 = vld [vmem:[#allocation3 + $0x50] sm:$0xff]
  %v1738 = vld [vmem:[#allocation3 + $0x58] sm:$0xff]
  %v1739 = vld [vmem:[#allocation3 + $0x60] sm:$0xff]
  %v1740 = vld [vmem:[#allocation3 + $0x68] sm:$0xff]
  %v1741 = vld [vmem:[#allocation3 + $0x70] sm:$0xff]
  %v1742 = vld [vmem:[#allocation3 + $0x78] sm:$0xff]
  %s1743 = scalar_lea.vmem %s3, 24
  %v1744 = vld [vmem:[%s1743] sm:$0xf]
  %v1745 = vld [vmem:[%s1743 + $0x4] sm:$0xf]
  %v1762 = vunpack.c.l.b16 %v1711
  %v1763 = vunpack.c.l.b16 %v1712
  %v1764 = vunpack.c.l.b16 %v1713
  %v1765 = vunpack.c.l.b16 %v1714
  %v1766 = vunpack.c.l.b16 %v1715
  %v1767 = vunpack.c.l.b16 %v1716
  %v1768 = vunpack.c.l.b16 %v1717
  %v1769 = vunpack.c.l.b16 %v1718
  %v1770 = vunpack.c.l.b16 %v1719
  %v1771 = vunpack.c.l.b16 %v1720
  %v1772 = vunpack.c.l.b16 %v1721
  %v1773 = vunpack.c.l.b16 %v1722
  %v1774 = vunpack.c.l.b16 %v1723
  %v1775 = vunpack.c.l.b16 %v1724
  %v1776 = vunpack.c.l.b16 %v1725
  %v1777 = vunpack.c.l.b16 %v1726
  %v1778 = vpack.c.b16 %v1763, %v1762
  %v1779 = vpack.c.b16 %v1765, %v1764
  %v1780 = vpack.c.b16 %v1767, %v1766
  %v1781 = vpack.c.b16 %v1769, %v1768
  %v1782 = vpack.c.b16 %v1771, %v1770
  %v1783 = vpack.c.b16 %v1773, %v1772
  %v1784 = vpack.c.b16 %v1775, %v1774
  %v1785 = vpack.c.b16 %v1777, %v1776
  %v1788 = vunpack.c.l.b16 %v1744
  %v1789 = vunpack.c.l.b16 %v1745
  %v1790 = vpack.c.b16 %v1789, %v1788
  %v1793 = vsel %vm763, %v1778, 0
  %v1796 = vsel %vm763, %v1779, 0
  %v1799 = vsel %vm763, %v1780, 0
  %v1802 = vsel %vm763, %v1781, 0
  %v1805 = vsel %vm763, %v1782, 0
  %v1808 = vsel %vm763, %v1783, 0
  %v1811 = vsel %vm763, %v1784, 0
  %v1814 = vsel %vm763, %v1785, 0
  %1816 = vmatprep.subr.bf16.mxu0 0
  %1817 = vmatpush1.bf16.msra.mxu0 %v1790
  %1818 = vmatprep.subr.bf16.mxu0 0
  %1819 = vmatpush1.bf16.msra.mxu0 0
  %1820 = vmatprep.subr.bf16.mxu0 0
  %1821 = vmatpush1.bf16.msra.mxu0 0
  %1822 = vmatprep.subr.bf16.mxu0 0
  %1823 = vmatpush1.bf16.msra.mxu0 0
  %1824 = vmatprep.subr.bf16.mxu0 0
  %1825 = vmatpush1.bf16.msra.mxu0 0
  %1826 = vmatprep.subr.bf16.mxu0 0
  %1827 = vmatpush1.bf16.msra.mxu0 0
  %1828 = vmatprep.subr.bf16.mxu0 0
  %1829 = vmatpush1.bf16.msra.mxu0 0
  %1830 = vmatprep.subr.bf16.mxu0 0
  %1831 = vmatpush1.bf16.msra.mxu0 0
  %1832 = vmatprep.subr.bf16.mxu0 0
  %1833 = vmatpush1.bf16.msra.mxu0 0
  %1834 = vmatprep.subr.bf16.mxu0 0
  %1835 = vmatpush1.bf16.msra.mxu0 0
  %1836 = vmatprep.subr.bf16.mxu0 0
  %1837 = vmatpush1.bf16.msra.mxu0 0
  %1838 = vmatprep.subr.bf16.mxu0 0
  %1839 = vmatpush1.bf16.msra.mxu0 0
  %1840 = vmatprep.subr.bf16.mxu0 0
  %1841 = vmatpush1.bf16.msra.mxu0 0
  %1842 = vmatprep.subr.bf16.mxu0 0
  %1843 = vmatpush1.bf16.msra.mxu0 0
  %1844 = vmatprep.subr.bf16.mxu0 0
  %1845 = vmatpush1.bf16.msra.mxu0 0
  %1846 = vmatprep.subr.bf16.mxu0 0
  %1847 = vmatpush1.bf16.msra.mxu0 0
  %1848 = vmatprep.mubr.bf16.mxu0 0
  %1849 = vmatmul.mubr.bf16.gmra.mrb[0].mxu0 %v1793
  %v1850 = vpop.f32.mrb[0].mxu0
  %v1851 = vadd.f32 0.0, %v1850
  %v1852 = vpop.f32.mrb[0].mxu0
  %v1853 = vpop.f32.mrb[0].mxu0
  %v1854 = vadd.f32 0.0, %v1853
  %v1855 = vpop.f32.mrb[0].mxu0
  %1856 = vmatprep.mubr.bf16.mxu0 0
  %1857 = vmatmul.mubr.bf16.gmra.mrb[0].mxu0 %v1796
  %v1858 = vpop.f32.mrb[0].mxu0
  %v1859 = vadd.f32 0.0, %v1858
  %v1860 = vpop.f32.mrb[0].mxu0
  %v1861 = vpop.f32.mrb[0].mxu0
  %v1862 = vadd.f32 0.0, %v1861
  %v1863 = vpop.f32.mrb[0].mxu0
  %1864 = vmatprep.mubr.bf16.mxu0 0
  %1865 = vmatmul.mubr.bf16.gmra.mrb[0].mxu0 %v1799
  %v1866 = vpop.f32.mrb[0].mxu0
  %v1867 = vadd.f32 0.0, %v1866
  %v1868 = vpop.f32.mrb[0].mxu0
  %v1869 = vpop.f32.mrb[0].mxu0
  %v1870 = vadd.f32 0.0, %v1869
  %v1871 = vpop.f32.mrb[0].mxu0
  %1872 = vmatprep.mubr.bf16.mxu0 0
  %1873 = vmatmul.mubr.bf16.gmra.mrb[0].mxu0 %v1802
  %v1874 = vpop.f32.mrb[0].mxu0
  %v1875 = vadd.f32 0.0, %v1874
  %v1876 = vpop.f32.mrb[0].mxu0
  %v1877 = vpop.f32.mrb[0].mxu0
  %v1878 = vadd.f32 0.0, %v1877
  %v1879 = vpop.f32.mrb[0].mxu0
  %1880 = vmatprep.mubr.bf16.mxu0 0
  %1881 = vmatmul.mubr.bf16.gmra.mrb[0].mxu0 %v1805
  %v1882 = vpop.f32.mrb[0].mxu0
  %v1883 = vadd.f32 0.0, %v1882
  %v1884 = vpop.f32.mrb[0].mxu0
  %v1885 = vpop.f32.mrb[0].mxu0
  %v1886 = vadd.f32 0.0, %v1885
  %v1887 = vpop.f32.mrb[0].mxu0
  %1888 = vmatprep.mubr.bf16.mxu0 0
  %1889 = vmatmul.mubr.bf16.gmra.mrb[0].mxu0 %v1808
  %v1890 = vpop.f32.mrb[0].mxu0
  %v1891 = vadd.f32 0.0, %v1890
  %v1892 = vpop.f32.mrb[0].mxu0
  %v1893 = vpop.f32.mrb[0].mxu0
  %v1894 = vadd.f32 0.0, %v1893
  %v1895 = vpop.f32.mrb[0].mxu0
  %1896 = vmatprep.mubr.bf16.mxu0 0
  %1897 = vmatmul.mubr.bf16.gmra.mrb[0].mxu0 %v1811
  %v1898 = vpop.f32.mrb[0].mxu0
  %v1899 = vadd.f32 0.0, %v1898
  %v1900 = vpop.f32.mrb[0].mxu0
  %v1901 = vpop.f32.mrb[0].mxu0
  %v1902 = vadd.f32 0.0, %v1901
  %v1903 = vpop.f32.mrb[0].mxu0
  %1904 = vmatprep.mubr.bf16.mxu0 0
  %1905 = vmatmul.mubr.bf16.gmra.mrb[0].mxu0 %v1814
  %v1906 = vpop.f32.mrb[0].mxu0
  %v1907 = vadd.f32 0.0, %v1906
  %v1908 = vpop.f32.mrb[0].mxu0
  %v1909 = vpop.f32.mrb[0].mxu0
  %v1910 = vadd.f32 0.0, %v1909
  %v1911 = vpop.f32.mrb[0].mxu0
  %1912 = vdwg.mxu0
  %v1913 = vadd.f32 %v1727, %v1851
  %v1914 = vadd.f32 %v1728, %v1854
  %v1915 = vadd.f32 %v1729, %v1859
  %v1916 = vadd.f32 %v1730, %v1862
  %v1917 = vadd.f32 %v1731, %v1867
  %v1918 = vadd.f32 %v1732, %v1870
  %v1919 = vadd.f32 %v1733, %v1875
  %v1920 = vadd.f32 %v1734, %v1878
  %v1921 = vadd.f32 %v1735, %v1883
  %v1922 = vadd.f32 %v1736, %v1886
  %v1923 = vadd.f32 %v1737, %v1891
  %v1924 = vadd.f32 %v1738, %v1894
  %v1925 = vadd.f32 %v1739, %v1899
  %v1926 = vadd.f32 %v1740, %v1902
  %v1927 = vadd.f32 %v1741, %v1907
  %v1928 = vadd.f32 %v1742, %v1910
  %1929 = vst [vmem:[#allocation3] sm:$0xff] %v1913
  %1930 = vst [vmem:[#allocation3 + $0x8] sm:$0xff] %v1914
  %1931 = vst [vmem:[#allocation3 + $0x10] sm:$0xff] %v1915
  %1932 = vst [vmem:[#allocation3 + $0x18] sm:$0xff] %v1916
  %1933 = vst [vmem:[#allocation3 + $0x20] sm:$0xff] %v1917
  %1934 = vst [vmem:[#allocation3 + $0x28] sm:$0xff] %v1918
  %1935 = vst [vmem:[#allocation3 + $0x30] sm:$0xff] %v1919
  %1936 = vst [vmem:[#allocation3 + $0x38] sm:$0xff] %v1920
  %1937 = vst [vmem:[#allocation3 + $0x40] sm:$0xff] %v1921
  %1938 = vst [vmem:[#allocation3 + $0x48] sm:$0xff] %v1922
  %1939 = vst [vmem:[#allocation3 + $0x50] sm:$0xff] %v1923
  %1940 = vst [vmem:[#allocation3 + $0x58] sm:$0xff] %v1924
  %1941 = vst [vmem:[#allocation3 + $0x60] sm:$0xff] %v1925
  %1942 = vst [vmem:[#allocation3 + $0x68] sm:$0xff] %v1926
  %1943 = vst [vmem:[#allocation3 + $0x70] sm:$0xff] %v1927
  %1944 = vst [vmem:[#allocation3 + $0x78] sm:$0xff] %v1928
  %v1945 = vld [vmem:[%s580] sm:$0xf]
  %v1946 = vld [vmem:[%s580 + $0x4] sm:$0x1]
  %v1947 = vld [vmem:[%s580 + $0x8] sm:$0xf]
  %v1948 = vld [vmem:[%s580 + $0xc] sm:$0x1]
  %v1949 = vld [vmem:[%s580 + $0x10] sm:$0xf]
  %v1950 = vld [vmem:[%s580 + $0x14] sm:$0x1]
  %v1951 = vld [vmem:[%s580 + $0x18] sm:$0xf]
  %v1952 = vld [vmem:[%s580 + $0x1c] sm:$0x1]
  %v1953 = vld [vmem:[%s580 + $0x20] sm:$0xf]
  %v1954 = vld [vmem:[%s580 + $0x24] sm:$0x1]
  %v1955 = vld [vmem:[%s580 + $0x28] sm:$0xf]
  %v1956 = vld [vmem:[%s580 + $0x2c] sm:$0x1]
  %v1957 = vld [vmem:[%s580 + $0x30] sm:$0xf]
  %v1958 = vld [vmem:[%s580 + $0x34] sm:$0x1]
  %v1959 = vld [vmem:[%s580 + $0x38] sm:$0xf]
  %v1960 = vld [vmem:[%s580 + $0x3c] sm:$0x1]
  %v1961 = vld [vmem:[%s580 + $0x50] sm:$0xf]
  %v1962 = vld [vmem:[%s580 + $0x54] sm:$0x1]
  %v1963 = vld [vmem:[%s580 + $0x58] sm:$0xf]
  %v1964 = vld [vmem:[%s580 + $0x5c] sm:$0x1]
  %v1965 = vld [vmem:[%s580 + $0x60] sm:$0xf]
  %v1966 = vld [vmem:[%s580 + $0x64] sm:$0x1]
  %v1967 = vld [vmem:[%s580 + $0x68] sm:$0xf]
  %v1968 = vld [vmem:[%s580 + $0x6c] sm:$0x1]
  %v1969 = vld [vmem:[%s580 + $0x70] sm:$0xf]
  %v1970 = vld [vmem:[%s580 + $0x74] sm:$0x1]
  %v1971 = vld [vmem:[%s580 + $0x78] sm:$0xf]
  %v1972 = vld [vmem:[%s580 + $0x7c] sm:$0x1]
  %v1973 = vld [vmem:[%s580 + $0x80] sm:$0xf]
  %v1974 = vld [vmem:[%s580 + $0x84] sm:$0x1]
  %v1975 = vld [vmem:[%s580 + $0x88] sm:$0xf]
  %v1976 = vld [vmem:[%s580 + $0x8c] sm:$0x1]
  %v1978 = vshrl.u32 %v1945, 16
  %v1980 = vrot.slane %v1978, 4
  %v1981 = vshll.u32 %v1945, 16
  %v1983 = vrot.slane %v1981, 5
  %v1984 = vor.u32 %v1980, %v1983
  %v1985 = vrot.slane %v1984, 4
  %v1987 = vshll.u32 %v1946, 16
  %v1989 = vrot.slane %v1987, 5
  %v1990 = vsel %vm951, %v1985, %v1989
  %v1992 = vshrl.u32 %v1947, 16
  %v1994 = vrot.slane %v1992, 4
  %v1995 = vshll.u32 %v1947, 16
  %v1997 = vrot.slane %v1995, 5
  %v1998 = vor.u32 %v1994, %v1997
  %v1999 = vrot.slane %v1998, 4
  %v2001 = vshll.u32 %v1948, 16
  %v2003 = vrot.slane %v2001, 5
  %v2004 = vsel %vm951, %v1999, %v2003
  %v2006 = vshrl.u32 %v1949, 16
  %v2008 = vrot.slane %v2006, 4
  %v2009 = vshll.u32 %v1949, 16
  %v2011 = vrot.slane %v2009, 5
  %v2012 = vor.u32 %v2008, %v2011
  %v2013 = vrot.slane %v2012, 4
  %v2015 = vshll.u32 %v1950, 16
  %v2017 = vrot.slane %v2015, 5
  %v2018 = vsel %vm951, %v2013, %v2017
  %v2020 = vshrl.u32 %v1951, 16
  %v2022 = vrot.slane %v2020, 4
  %v2023 = vshll.u32 %v1951, 16
  %v2025 = vrot.slane %v2023, 5
  %v2026 = vor.u32 %v2022, %v2025
  %v2027 = vrot.slane %v2026, 4
  %v2029 = vshll.u32 %v1952, 16
  %v2031 = vrot.slane %v2029, 5
  %v2032 = vsel %vm951, %v2027, %v2031
  %v2034 = vshrl.u32 %v1953, 16
  %v2036 = vrot.slane %v2034, 4
  %v2037 = vshll.u32 %v1953, 16
  %v2039 = vrot.slane %v2037, 5
  %v2040 = vor.u32 %v2036, %v2039
  %v2041 = vrot.slane %v2040, 4
  %v2043 = vshll.u32 %v1954, 16
  %v2045 = vrot.slane %v2043, 5
  %v2046 = vsel %vm951, %v2041, %v2045
  %v2048 = vshrl.u32 %v1955, 16
  %v2050 = vrot.slane %v2048, 4
  %v2051 = vshll.u32 %v1955, 16
  %v2053 = vrot.slane %v2051, 5
  %v2054 = vor.u32 %v2050, %v2053
  %v2055 = vrot.slane %v2054, 4
  %v2057 = vshll.u32 %v1956, 16
  %v2059 = vrot.slane %v2057, 5
  %v2060 = vsel %vm951, %v2055, %v2059
  %v2062 = vshrl.u32 %v1957, 16
  %v2064 = vrot.slane %v2062, 4
  %v2065 = vshll.u32 %v1957, 16
  %v2067 = vrot.slane %v2065, 5
  %v2068 = vor.u32 %v2064, %v2067
  %v2069 = vrot.slane %v2068, 4
  %v2071 = vshll.u32 %v1958, 16
  %v2073 = vrot.slane %v2071, 5
  %v2074 = vsel %vm951, %v2069, %v2073
  %v2076 = vshrl.u32 %v1959, 16
  %v2078 = vrot.slane %v2076, 4
  %v2079 = vshll.u32 %v1959, 16
  %v2081 = vrot.slane %v2079, 5
  %v2082 = vor.u32 %v2078, %v2081
  %v2083 = vrot.slane %v2082, 4
  %v2085 = vshll.u32 %v1960, 16
  %v2087 = vrot.slane %v2085, 5
  %v2088 = vsel %vm951, %v2083, %v2087
  %v2090 = vshrl.u32 %v1961, 16
  %v2092 = vrot.slane %v2090, 4
  %v2093 = vshll.u32 %v1961, 16
  %v2095 = vrot.slane %v2093, 5
  %v2096 = vor.u32 %v2092, %v2095
  %v2097 = vrot.slane %v2096, 4
  %v2099 = vshll.u32 %v1962, 16
  %v2101 = vrot.slane %v2099, 5
  %v2102 = vsel %vm951, %v2097, %v2101
  %v2104 = vshrl.u32 %v1963, 16
  %v2106 = vrot.slane %v2104, 4
  %v2107 = vshll.u32 %v1963, 16
  %v2109 = vrot.slane %v2107, 5
  %v2110 = vor.u32 %v2106, %v2109
  %v2111 = vrot.slane %v2110, 4
  %v2113 = vshll.u32 %v1964, 16
  %v2115 = vrot.slane %v2113, 5
  %v2116 = vsel %vm951, %v2111, %v2115
  %v2118 = vshrl.u32 %v1965, 16
  %v2120 = vrot.slane %v2118, 4
  %v2121 = vshll.u32 %v1965, 16
  %v2123 = vrot.slane %v2121, 5
  %v2124 = vor.u32 %v2120, %v2123
  %v2125 = vrot.slane %v2124, 4
  %v2127 = vshll.u32 %v1966, 16
  %v2129 = vrot.slane %v2127, 5
  %v2130 = vsel %vm951, %v2125, %v2129
  %v2132 = vshrl.u32 %v1967, 16
  %v2134 = vrot.slane %v2132, 4
  %v2135 = vshll.u32 %v1967, 16
  %v2137 = vrot.slane %v2135, 5
  %v2138 = vor.u32 %v2134, %v2137
  %v2139 = vrot.slane %v2138, 4
  %v2141 = vshll.u32 %v1968, 16
  %v2143 = vrot.slane %v2141, 5
  %v2144 = vsel %vm951, %v2139, %v2143
  %v2146 = vshrl.u32 %v1969, 16
  %v2148 = vrot.slane %v2146, 4
  %v2149 = vshll.u32 %v1969, 16
  %v2151 = vrot.slane %v2149, 5
  %v2152 = vor.u32 %v2148, %v2151
  %v2153 = vrot.slane %v2152, 4
  %v2155 = vshll.u32 %v1970, 16
  %v2157 = vrot.slane %v2155, 5
  %v2158 = vsel %vm951, %v2153, %v2157
  %v2160 = vshrl.u32 %v1971, 16
  %v2162 = vrot.slane %v2160, 4
  %v2163 = vshll.u32 %v1971, 16
  %v2165 = vrot.slane %v2163, 5
  %v2166 = vor.u32 %v2162, %v2165
  %v2167 = vrot.slane %v2166, 4
  %v2169 = vshll.u32 %v1972, 16
  %v2171 = vrot.slane %v2169, 5
  %v2172 = vsel %vm951, %v2167, %v2171
  %v2174 = vshrl.u32 %v1973, 16
  %v2176 = vrot.slane %v2174, 4
  %v2177 = vshll.u32 %v1973, 16
  %v2179 = vrot.slane %v2177, 5
  %v2180 = vor.u32 %v2176, %v2179
  %v2181 = vrot.slane %v2180, 4
  %v2183 = vshll.u32 %v1974, 16
  %v2185 = vrot.slane %v2183, 5
  %v2186 = vsel %vm951, %v2181, %v2185
  %v2188 = vshrl.u32 %v1975, 16
  %v2190 = vrot.slane %v2188, 4
  %v2191 = vshll.u32 %v1975, 16
  %v2193 = vrot.slane %v2191, 5
  %v2194 = vor.u32 %v2190, %v2193
  %v2195 = vrot.slane %v2194, 4
  %v2197 = vshll.u32 %v1976, 16
  %v2199 = vrot.slane %v2197, 5
  %v2200 = vsel %vm951, %v2195, %v2199
  %v2201 = vld [vmem:[#allocation3] sm:$0xff]
  %v2202 = vld [vmem:[#allocation3 + $0x8] sm:$0xff]
  %v2203 = vld [vmem:[#allocation3 + $0x10] sm:$0xff]
  %v2204 = vld [vmem:[#allocation3 + $0x18] sm:$0xff]
  %v2205 = vld [vmem:[#allocation3 + $0x20] sm:$0xff]
  %v2206 = vld [vmem:[#allocation3 + $0x28] sm:$0xff]
  %v2207 = vld [vmem:[#allocation3 + $0x30] sm:$0xff]
  %v2208 = vld [vmem:[#allocation3 + $0x38] sm:$0xff]
  %v2209 = vld [vmem:[#allocation3 + $0x40] sm:$0xff]
  %v2210 = vld [vmem:[#allocation3 + $0x48] sm:$0xff]
  %v2211 = vld [vmem:[#allocation3 + $0x50] sm:$0xff]
  %v2212 = vld [vmem:[#allocation3 + $0x58] sm:$0xff]
  %v2213 = vld [vmem:[#allocation3 + $0x60] sm:$0xff]
  %v2214 = vld [vmem:[#allocation3 + $0x68] sm:$0xff]
  %v2215 = vld [vmem:[#allocation3 + $0x70] sm:$0xff]
  %v2216 = vld [vmem:[#allocation3 + $0x78] sm:$0xff]
  %s2217 = scalar_lea.vmem %s3, 32
  %v2218 = vld [vmem:[%s2217] sm:$0xf]
  %v2219 = vld [vmem:[%s2217 + $0x4] sm:$0xf]
  %v2220 = vunpack.c.l.b16 %v1990
  %v2221 = vunpack.c.l.b16 %v2004
  %v2222 = vunpack.c.l.b16 %v2018
  %v2223 = vunpack.c.l.b16 %v2032
  %v2224 = vunpack.c.l.b16 %v2046
  %v2225 = vunpack.c.l.b16 %v2060
  %v2226 = vunpack.c.l.b16 %v2074
  %v2227 = vunpack.c.l.b16 %v2088
  %v2228 = vunpack.c.l.b16 %v2102
  %v2229 = vunpack.c.l.b16 %v2116
  %v2230 = vunpack.c.l.b16 %v2130
  %v2231 = vunpack.c.l.b16 %v2144
  %v2232 = vunpack.c.l.b16 %v2158
  %v2233 = vunpack.c.l.b16 %v2172
  %v2234 = vunpack.c.l.b16 %v2186
  %v2235 = vunpack.c.l.b16 %v2200
  %v2236 = vpack.c.b16 %v2221, %v2220
  %v2237 = vpack.c.b16 %v2223, %v2222
  %v2238 = vpack.c.b16 %v2225, %v2224
  %v2239 = vpack.c.b16 %v2227, %v2226
  %v2240 = vpack.c.b16 %v2229, %v2228
  %v2241 = vpack.c.b16 %v2231, %v2230
  %v2242 = vpack.c.b16 %v2233, %v2232
  %v2243 = vpack.c.b16 %v2235, %v2234
  %v2246 = vunpack.c.l.b16 %v2218
  %v2247 = vunpack.c.l.b16 %v2219
  %v2248 = vpack.c.b16 %v2247, %v2246
  %v2251 = vsel %vm763, %v2236, 0
  %v2254 = vsel %vm763, %v2237, 0
  %v2257 = vsel %vm763, %v2238, 0
  %v2260 = vsel %vm763, %v2239, 0
  %v2263 = vsel %vm763, %v2240, 0
  %v2266 = vsel %vm763, %v2241, 0
  %v2269 = vsel %vm763, %v2242, 0
  %v2272 = vsel %vm763, %v2243, 0
  %2274 = vmatprep.subr.bf16.mxu0 0
  %2275 = vmatpush1.bf16.msra.mxu0 %v2248
  %2276 = vmatprep.subr.bf16.mxu0 0
  %2277 = vmatpush1.bf16.msra.mxu0 0
  %2278 = vmatprep.subr.bf16.mxu0 0
  %2279 = vmatpush1.bf16.msra.mxu0 0
  %2280 = vmatprep.subr.bf16.mxu0 0
  %2281 = vmatpush1.bf16.msra.mxu0 0
  %2282 = vmatprep.subr.bf16.mxu0 0
  %2283 = vmatpush1.bf16.msra.mxu0 0
  %2284 = vmatprep.subr.bf16.mxu0 0
  %2285 = vmatpush1.bf16.msra.mxu0 0
  %2286 = vmatprep.subr.bf16.mxu0 0
  %2287 = vmatpush1.bf16.msra.mxu0 0
  %2288 = vmatprep.subr.bf16.mxu0 0
  %2289 = vmatpush1.bf16.msra.mxu0 0
  %2290 = vmatprep.subr.bf16.mxu0 0
  %2291 = vmatpush1.bf16.msra.mxu0 0
  %2292 = vmatprep.subr.bf16.mxu0 0
  %2293 = vmatpush1.bf16.msra.mxu0 0
  %2294 = vmatprep.subr.bf16.mxu0 0
  %2295 = vmatpush1.bf16.msra.mxu0 0
  %2296 = vmatprep.subr.bf16.mxu0 0
  %2297 = vmatpush1.bf16.msra.mxu0 0
  %2298 = vmatprep.subr.bf16.mxu0 0
  %2299 = vmatpush1.bf16.msra.mxu0 0
  %2300 = vmatprep.subr.bf16.mxu0 0
  %2301 = vmatpush1.bf16.msra.mxu0 0
  %2302 = vmatprep.subr.bf16.mxu0 0
  %2303 = vmatpush1.bf16.msra.mxu0 0
  %2304 = vmatprep.subr.bf16.mxu0 0
  %2305 = vmatpush1.bf16.msra.mxu0 0
  %2306 = vmatprep.mubr.bf16.mxu0 0
  %2307 = vmatmul.mubr.bf16.gmra.mrb[0].mxu0 %v2251
  %v2308 = vpop.f32.mrb[0].mxu0
  %v2309 = vadd.f32 0.0, %v2308
  %v2310 = vpop.f32.mrb[0].mxu0
  %v2311 = vpop.f32.mrb[0].mxu0
  %v2312 = vadd.f32 0.0, %v2311
  %v2313 = vpop.f32.mrb[0].mxu0
  %2314 = vmatprep.mubr.bf16.mxu0 0
  %2315 = vmatmul.mubr.bf16.gmra.mrb[0].mxu0 %v2254
  %v2316 = vpop.f32.mrb[0].mxu0
  %v2317 = vadd.f32 0.0, %v2316
  %v2318 = vpop.f32.mrb[0].mxu0
  %v2319 = vpop.f32.mrb[0].mxu0
  %v2320 = vadd.f32 0.0, %v2319
  %v2321 = vpop.f32.mrb[0].mxu0
  %2322 = vmatprep.mubr.bf16.mxu0 0
  %2323 = vmatmul.mubr.bf16.gmra.mrb[0].mxu0 %v2257
  %v2324 = vpop.f32.mrb[0].mxu0
  %v2325 = vadd.f32 0.0, %v2324
  %v2326 = vpop.f32.mrb[0].mxu0
  %v2327 = vpop.f32.mrb[0].mxu0
  %v2328 = vadd.f32 0.0, %v2327
  %v2329 = vpop.f32.mrb[0].mxu0
  %2330 = vmatprep.mubr.bf16.mxu0 0
  %2331 = vmatmul.mubr.bf16.gmra.mrb[0].mxu0 %v2260
  %v2332 = vpop.f32.mrb[0].mxu0
  %v2333 = vadd.f32 0.0, %v2332
  %v2334 = vpop.f32.mrb[0].mxu0
  %v2335 = vpop.f32.mrb[0].mxu0
  %v2336 = vadd.f32 0.0, %v2335
  %v2337 = vpop.f32.mrb[0].mxu0
  %2338 = vmatprep.mubr.bf16.mxu0 0
  %2339 = vmatmul.mubr.bf16.gmra.mrb[0].mxu0 %v2263
  %v2340 = vpop.f32.mrb[0].mxu0
  %v2341 = vadd.f32 0.0, %v2340
  %v2342 = vpop.f32.mrb[0].mxu0
  %v2343 = vpop.f32.mrb[0].mxu0
  %v2344 = vadd.f32 0.0, %v2343
  %v2345 = vpop.f32.mrb[0].mxu0
  %2346 = vmatprep.mubr.bf16.mxu0 0
  %2347 = vmatmul.mubr.bf16.gmra.mrb[0].mxu0 %v2266
  %v2348 = vpop.f32.mrb[0].mxu0
  %v2349 = vadd.f32 0.0, %v2348
  %v2350 = vpop.f32.mrb[0].mxu0
  %v2351 = vpop.f32.mrb[0].mxu0
  %v2352 = vadd.f32 0.0, %v2351
  %v2353 = vpop.f32.mrb[0].mxu0
  %2354 = vmatprep.mubr.bf16.mxu0 0
  %2355 = vmatmul.mubr.bf16.gmra.mrb[0].mxu0 %v2269
  %v2356 = vpop.f32.mrb[0].mxu0
  %v2357 = vadd.f32 0.0, %v2356
  %v2358 = vpop.f32.mrb[0].mxu0
  %v2359 = vpop.f32.mrb[0].mxu0
  %v2360 = vadd.f32 0.0, %v2359
  %v2361 = vpop.f32.mrb[0].mxu0
  %2362 = vmatprep.mubr.bf16.mxu0 0
  %2363 = vmatmul.mubr.bf16.gmra.mrb[0].mxu0 %v2272
  %v2364 = vpop.f32.mrb[0].mxu0
  %v2365 = vadd.f32 0.0, %v2364
  %v2366 = vpop.f32.mrb[0].mxu0
  %v2367 = vpop.f32.mrb[0].mxu0
  %v2368 = vadd.f32 0.0, %v2367
  %v2369 = vpop.f32.mrb[0].mxu0
  %2370 = vdwg.mxu0
  %v2371 = vadd.f32 %v2201, %v2309
  %v2372 = vadd.f32 %v2202, %v2312
  %v2373 = vadd.f32 %v2203, %v2317
  %v2374 = vadd.f32 %v2204, %v2320
  %v2375 = vadd.f32 %v2205, %v2325
  %v2376 = vadd.f32 %v2206, %v2328
  %v2377 = vadd.f32 %v2207, %v2333
  %v2378 = vadd.f32 %v2208, %v2336
  %v2379 = vadd.f32 %v2209, %v2341
  %v2380 = vadd.f32 %v2210, %v2344
  %v2381 = vadd.f32 %v2211, %v2349
  %v2382 = vadd.f32 %v2212, %v2352
  %v2383 = vadd.f32 %v2213, %v2357
  %v2384 = vadd.f32 %v2214, %v2360
  %v2385 = vadd.f32 %v2215, %v2365
  %v2386 = vadd.f32 %v2216, %v2368
  %2387 = vst [vmem:[#allocation3] sm:$0xff] %v2371
  %2388 = vst [vmem:[#allocation3 + $0x8] sm:$0xff] %v2372
  %2389 = vst [vmem:[#allocation3 + $0x10] sm:$0xff] %v2373
  %2390 = vst [vmem:[#allocation3 + $0x18] sm:$0xff] %v2374
  %2391 = vst [vmem:[#allocation3 + $0x20] sm:$0xff] %v2375
  %2392 = vst [vmem:[#allocation3 + $0x28] sm:$0xff] %v2376
  %2393 = vst [vmem:[#allocation3 + $0x30] sm:$0xff] %v2377
  %2394 = vst [vmem:[#allocation3 + $0x38] sm:$0xff] %v2378
  %2395 = vst [vmem:[#allocation3 + $0x40] sm:$0xff] %v2379
  %2396 = vst [vmem:[#allocation3 + $0x48] sm:$0xff] %v2380
  %2397 = vst [vmem:[#allocation3 + $0x50] sm:$0xff] %v2381
  %2398 = vst [vmem:[#allocation3 + $0x58] sm:$0xff] %v2382
  %2399 = vst [vmem:[#allocation3 + $0x60] sm:$0xff] %v2383
  %2400 = vst [vmem:[#allocation3 + $0x68] sm:$0xff] %v2384
  %2401 = vst [vmem:[#allocation3 + $0x70] sm:$0xff] %v2385
  %2402 = vst [vmem:[#allocation3 + $0x78] sm:$0xff] %v2386
  %v2403 = vld [vmem:[%s580] sm:$0xe]
  %v2404 = vld [vmem:[%s580 + $0x4] sm:$0x1]
  %v2405 = vld [vmem:[%s580 + $0x8] sm:$0xe]
  %v2406 = vld [vmem:[%s580 + $0xc] sm:$0x1]
  %v2407 = vld [vmem:[%s580 + $0x10] sm:$0xe]
  %v2408 = vld [vmem:[%s580 + $0x14] sm:$0x1]
  %v2409 = vld [vmem:[%s580 + $0x18] sm:$0xe]
  %v2410 = vld [vmem:[%s580 + $0x1c] sm:$0x1]
  %v2411 = vld [vmem:[%s580 + $0x20] sm:$0xe]
  %v2412 = vld [vmem:[%s580 + $0x24] sm:$0x1]
  %v2413 = vld [vmem:[%s580 + $0x28] sm:$0xe]
  %v2414 = vld [vmem:[%s580 + $0x2c] sm:$0x1]
  %v2415 = vld [vmem:[%s580 + $0x30] sm:$0xe]
  %v2416 = vld [vmem:[%s580 + $0x34] sm:$0x1]
  %v2417 = vld [vmem:[%s580 + $0x38] sm:$0xe]
  %v2418 = vld [vmem:[%s580 + $0x3c] sm:$0x1]
  %v2419 = vld [vmem:[%s580 + $0x50] sm:$0xe]
  %v2420 = vld [vmem:[%s580 + $0x54] sm:$0x1]
  %v2421 = vld [vmem:[%s580 + $0x58] sm:$0xe]
  %v2422 = vld [vmem:[%s580 + $0x5c] sm:$0x1]
  %v2423 = vld [vmem:[%s580 + $0x60] sm:$0xe]
  %v2424 = vld [vmem:[%s580 + $0x64] sm:$0x1]
  %v2425 = vld [vmem:[%s580 + $0x68] sm:$0xe]
  %v2426 = vld [vmem:[%s580 + $0x6c] sm:$0x1]
  %v2427 = vld [vmem:[%s580 + $0x70] sm:$0xe]
  %v2428 = vld [vmem:[%s580 + $0x74] sm:$0x1]
  %v2429 = vld [vmem:[%s580 + $0x78] sm:$0xe]
  %v2430 = vld [vmem:[%s580 + $0x7c] sm:$0x1]
  %v2431 = vld [vmem:[%s580 + $0x80] sm:$0xe]
  %v2432 = vld [vmem:[%s580 + $0x84] sm:$0x1]
  %v2433 = vld [vmem:[%s580 + $0x88] sm:$0xe]
  %v2434 = vld [vmem:[%s580 + $0x8c] sm:$0x1]
  %v2467 = vrot.slane %v2403, 5
  %v2468 = vrot.slane %v2467, 4
  %v2469 = vrot.slane %v2404, 5
  %v2470 = vsel %vm1444, %v2468, %v2469
  %v2471 = vrot.slane %v2405, 5
  %v2472 = vrot.slane %v2471, 4
  %v2473 = vrot.slane %v2406, 5
  %v2474 = vsel %vm1444, %v2472, %v2473
  %v2475 = vrot.slane %v2407, 5
  %v2476 = vrot.slane %v2475, 4
  %v2477 = vrot.slane %v2408, 5
  %v2478 = vsel %vm1444, %v2476, %v2477
  %v2479 = vrot.slane %v2409, 5
  %v2480 = vrot.slane %v2479, 4
  %v2481 = vrot.slane %v2410, 5
  %v2482 = vsel %vm1444, %v2480, %v2481
  %v2483 = vrot.slane %v2411, 5
  %v2484 = vrot.slane %v2483, 4
  %v2485 = vrot.slane %v2412, 5
  %v2486 = vsel %vm1444, %v2484, %v2485
  %v2487 = vrot.slane %v2413, 5
  %v2488 = vrot.slane %v2487, 4
  %v2489 = vrot.slane %v2414, 5
  %v2490 = vsel %vm1444, %v2488, %v2489
  %v2491 = vrot.slane %v2415, 5
  %v2492 = vrot.slane %v2491, 4
  %v2493 = vrot.slane %v2416, 5
  %v2494 = vsel %vm1444, %v2492, %v2493
  %v2495 = vrot.slane %v2417, 5
  %v2496 = vrot.slane %v2495, 4
  %v2497 = vrot.slane %v2418, 5
  %v2498 = vsel %vm1444, %v2496, %v2497
  %v2499 = vrot.slane %v2419, 5
  %v2500 = vrot.slane %v2499, 4
  %v2501 = vrot.slane %v2420, 5
  %v2502 = vsel %vm1444, %v2500, %v2501
  %v2503 = vrot.slane %v2421, 5
  %v2504 = vrot.slane %v2503, 4
  %v2505 = vrot.slane %v2422, 5
  %v2506 = vsel %vm1444, %v2504, %v2505
  %v2507 = vrot.slane %v2423, 5
  %v2508 = vrot.slane %v2507, 4
  %v2509 = vrot.slane %v2424, 5
  %v2510 = vsel %vm1444, %v2508, %v2509
  %v2511 = vrot.slane %v2425, 5
  %v2512 = vrot.slane %v2511, 4
  %v2513 = vrot.slane %v2426, 5
  %v2514 = vsel %vm1444, %v2512, %v2513
  %v2515 = vrot.slane %v2427, 5
  %v2516 = vrot.slane %v2515, 4
  %v2517 = vrot.slane %v2428, 5
  %v2518 = vsel %vm1444, %v2516, %v2517
  %v2519 = vrot.slane %v2429, 5
  %v2520 = vrot.slane %v2519, 4
  %v2521 = vrot.slane %v2430, 5
  %v2522 = vsel %vm1444, %v2520, %v2521
  %v2523 = vrot.slane %v2431, 5
  %v2524 = vrot.slane %v2523, 4
  %v2525 = vrot.slane %v2432, 5
  %v2526 = vsel %vm1444, %v2524, %v2525
  %v2527 = vrot.slane %v2433, 5
  %v2528 = vrot.slane %v2527, 4
  %v2529 = vrot.slane %v2434, 5
  %v2530 = vsel %vm1444, %v2528, %v2529
  %v2531 = vld [vmem:[#allocation3] sm:$0xff]
  %v2532 = vld [vmem:[#allocation3 + $0x8] sm:$0xff]
  %v2533 = vld [vmem:[#allocation3 + $0x10] sm:$0xff]
  %v2534 = vld [vmem:[#allocation3 + $0x18] sm:$0xff]
  %v2535 = vld [vmem:[#allocation3 + $0x20] sm:$0xff]
  %v2536 = vld [vmem:[#allocation3 + $0x28] sm:$0xff]
  %v2537 = vld [vmem:[#allocation3 + $0x30] sm:$0xff]
  %v2538 = vld [vmem:[#allocation3 + $0x38] sm:$0xff]
  %v2539 = vld [vmem:[#allocation3 + $0x40] sm:$0xff]
  %v2540 = vld [vmem:[#allocation3 + $0x48] sm:$0xff]
  %v2541 = vld [vmem:[#allocation3 + $0x50] sm:$0xff]
  %v2542 = vld [vmem:[#allocation3 + $0x58] sm:$0xff]
  %v2543 = vld [vmem:[#allocation3 + $0x60] sm:$0xff]
  %v2544 = vld [vmem:[#allocation3 + $0x68] sm:$0xff]
  %v2545 = vld [vmem:[#allocation3 + $0x70] sm:$0xff]
  %v2546 = vld [vmem:[#allocation3 + $0x78] sm:$0xff]
  %s2547 = scalar_lea.vmem %s3, 40
  %v2548 = vld [vmem:[%s2547] sm:$0xf]
  %v2549 = vld [vmem:[%s2547 + $0x4] sm:$0xf]
  %v2550 = vunpack.c.l.b16 %v2470
  %v2551 = vunpack.c.l.b16 %v2474
  %v2552 = vunpack.c.l.b16 %v2478
  %v2553 = vunpack.c.l.b16 %v2482
  %v2554 = vunpack.c.l.b16 %v2486
  %v2555 = vunpack.c.l.b16 %v2490
  %v2556 = vunpack.c.l.b16 %v2494
  %v2557 = vunpack.c.l.b16 %v2498
  %v2558 = vunpack.c.l.b16 %v2502
  %v2559 = vunpack.c.l.b16 %v2506
  %v2560 = vunpack.c.l.b16 %v2510
  %v2561 = vunpack.c.l.b16 %v2514
  %v2562 = vunpack.c.l.b16 %v2518
  %v2563 = vunpack.c.l.b16 %v2522
  %v2564 = vunpack.c.l.b16 %v2526
  %v2565 = vunpack.c.l.b16 %v2530
  %v2566 = vpack.c.b16 %v2551, %v2550
  %v2567 = vpack.c.b16 %v2553, %v2552
  %v2568 = vpack.c.b16 %v2555, %v2554
  %v2569 = vpack.c.b16 %v2557, %v2556
  %v2570 = vpack.c.b16 %v2559, %v2558
  %v2571 = vpack.c.b16 %v2561, %v2560
  %v2572 = vpack.c.b16 %v2563, %v2562
  %v2573 = vpack.c.b16 %v2565, %v2564
  %v2576 = vunpack.c.l.b16 %v2548
  %v2577 = vunpack.c.l.b16 %v2549
  %v2578 = vpack.c.b16 %v2577, %v2576
  %v2581 = vsel %vm763, %v2566, 0
  %v2584 = vsel %vm763, %v2567, 0
  %v2587 = vsel %vm763, %v2568, 0
  %v2590 = vsel %vm763, %v2569, 0
  %v2593 = vsel %vm763, %v2570, 0
  %v2596 = vsel %vm763, %v2571, 0
  %v2599 = vsel %vm763, %v2572, 0
  %v2602 = vsel %vm763, %v2573, 0
  %2604 = vmatprep.subr.bf16.mxu0 0
  %2605 = vmatpush1.bf16.msra.mxu0 %v2578
  %2606 = vmatprep.subr.bf16.mxu0 0
  %2607 = vmatpush1.bf16.msra.mxu0 0
  %2608 = vmatprep.subr.bf16.mxu0 0
  %2609 = vmatpush1.bf16.msra.mxu0 0
  %2610 = vmatprep.subr.bf16.mxu0 0
  %2611 = vmatpush1.bf16.msra.mxu0 0
  %2612 = vmatprep.subr.bf16.mxu0 0
  %2613 = vmatpush1.bf16.msra.mxu0 0
  %2614 = vmatprep.subr.bf16.mxu0 0
  %2615 = vmatpush1.bf16.msra.mxu0 0
  %2616 = vmatprep.subr.bf16.mxu0 0
  %2617 = vmatpush1.bf16.msra.mxu0 0
  %2618 = vmatprep.subr.bf16.mxu0 0
  %2619 = vmatpush1.bf16.msra.mxu0 0
  %2620 = vmatprep.subr.bf16.mxu0 0
  %2621 = vmatpush1.bf16.msra.mxu0 0
  %2622 = vmatprep.subr.bf16.mxu0 0
  %2623 = vmatpush1.bf16.msra.mxu0 0
  %2624 = vmatprep.subr.bf16.mxu0 0
  %2625 = vmatpush1.bf16.msra.mxu0 0
  %2626 = vmatprep.subr.bf16.mxu0 0
  %2627 = vmatpush1.bf16.msra.mxu0 0
  %2628 = vmatprep.subr.bf16.mxu0 0
  %2629 = vmatpush1.bf16.msra.mxu0 0
  %2630 = vmatprep.subr.bf16.mxu0 0
  %2631 = vmatpush1.bf16.msra.mxu0 0
  %2632 = vmatprep.subr.bf16.mxu0 0
  %2633 = vmatpush1.bf16.msra.mxu0 0
  %2634 = vmatprep.subr.bf16.mxu0 0
  %2635 = vmatpush1.bf16.msra.mxu0 0
  %2636 = vmatprep.mubr.bf16.mxu0 0
  %2637 = vmatmul.mubr.bf16.gmra.mrb[0].mxu0 %v2581
  %v2638 = vpop.f32.mrb[0].mxu0
  %v2639 = vadd.f32 0.0, %v2638
  %v2640 = vpop.f32.mrb[0].mxu0
  %v2641 = vpop.f32.mrb[0].mxu0
  %v2642 = vadd.f32 0.0, %v2641
  %v2643 = vpop.f32.mrb[0].mxu0
  %2644 = vmatprep.mubr.bf16.mxu0 0
  %2645 = vmatmul.mubr.bf16.gmra.mrb[0].mxu0 %v2584
  %v2646 = vpop.f32.mrb[0].mxu0
  %v2647 = vadd.f32 0.0, %v2646
  %v2648 = vpop.f32.mrb[0].mxu0
  %v2649 = vpop.f32.mrb[0].mxu0
  %v2650 = vadd.f32 0.0, %v2649
  %v2651 = vpop.f32.mrb[0].mxu0
  %2652 = vmatprep.mubr.bf16.mxu0 0
  %2653 = vmatmul.mubr.bf16.gmra.mrb[0].mxu0 %v2587
  %v2654 = vpop.f32.mrb[0].mxu0
  %v2655 = vadd.f32 0.0, %v2654
  %v2656 = vpop.f32.mrb[0].mxu0
  %v2657 = vpop.f32.mrb[0].mxu0
  %v2658 = vadd.f32 0.0, %v2657
  %v2659 = vpop.f32.mrb[0].mxu0
  %2660 = vmatprep.mubr.bf16.mxu0 0
  %2661 = vmatmul.mubr.bf16.gmra.mrb[0].mxu0 %v2590
  %v2662 = vpop.f32.mrb[0].mxu0
  %v2663 = vadd.f32 0.0, %v2662
  %v2664 = vpop.f32.mrb[0].mxu0
  %v2665 = vpop.f32.mrb[0].mxu0
  %v2666 = vadd.f32 0.0, %v2665
  %v2667 = vpop.f32.mrb[0].mxu0
  %2668 = vmatprep.mubr.bf16.mxu0 0
  %2669 = vmatmul.mubr.bf16.gmra.mrb[0].mxu0 %v2593
  %v2670 = vpop.f32.mrb[0].mxu0
  %v2671 = vadd.f32 0.0, %v2670
  %v2672 = vpop.f32.mrb[0].mxu0
  %v2673 = vpop.f32.mrb[0].mxu0
  %v2674 = vadd.f32 0.0, %v2673
  %v2675 = vpop.f32.mrb[0].mxu0
  %2676 = vmatprep.mubr.bf16.mxu0 0
  %2677 = vmatmul.mubr.bf16.gmra.mrb[0].mxu0 %v2596
  %v2678 = vpop.f32.mrb[0].mxu0
  %v2679 = vadd.f32 0.0, %v2678
  %v2680 = vpop.f32.mrb[0].mxu0
  %v2681 = vpop.f32.mrb[0].mxu0
  %v2682 = vadd.f32 0.0, %v2681
  %v2683 = vpop.f32.mrb[0].mxu0
  %2684 = vmatprep.mubr.bf16.mxu0 0
  %2685 = vmatmul.mubr.bf16.gmra.mrb[0].mxu0 %v2599
  %v2686 = vpop.f32.mrb[0].mxu0
  %v2687 = vadd.f32 0.0, %v2686
  %v2688 = vpop.f32.mrb[0].mxu0
  %v2689 = vpop.f32.mrb[0].mxu0
  %v2690 = vadd.f32 0.0, %v2689
  %v2691 = vpop.f32.mrb[0].mxu0
  %2692 = vmatprep.mubr.bf16.mxu0 0
  %2693 = vmatmul.mubr.bf16.gmra.mrb[0].mxu0 %v2602
  %v2694 = vpop.f32.mrb[0].mxu0
  %v2695 = vadd.f32 0.0, %v2694
  %v2696 = vpop.f32.mrb[0].mxu0
  %v2697 = vpop.f32.mrb[0].mxu0
  %v2698 = vadd.f32 0.0, %v2697
  %v2699 = vpop.f32.mrb[0].mxu0
  %2700 = vdwg.mxu0
  %v2701 = vadd.f32 %v2531, %v2639
  %v2702 = vadd.f32 %v2532, %v2642
  %v2703 = vadd.f32 %v2533, %v2647
  %v2704 = vadd.f32 %v2534, %v2650
  %v2705 = vadd.f32 %v2535, %v2655
  %v2706 = vadd.f32 %v2536, %v2658
  %v2707 = vadd.f32 %v2537, %v2663
  %v2708 = vadd.f32 %v2538, %v2666
  %v2709 = vadd.f32 %v2539, %v2671
  %v2710 = vadd.f32 %v2540, %v2674
  %v2711 = vadd.f32 %v2541, %v2679
  %v2712 = vadd.f32 %v2542, %v2682
  %v2713 = vadd.f32 %v2543, %v2687
  %v2714 = vadd.f32 %v2544, %v2690
  %v2715 = vadd.f32 %v2545, %v2695
  %v2716 = vadd.f32 %v2546, %v2698
  %2717 = vst [vmem:[#allocation3] sm:$0xff] %v2701
  %2718 = vst [vmem:[#allocation3 + $0x8] sm:$0xff] %v2702
  %2719 = vst [vmem:[#allocation3 + $0x10] sm:$0xff] %v2703
  %2720 = vst [vmem:[#allocation3 + $0x18] sm:$0xff] %v2704
  %2721 = vst [vmem:[#allocation3 + $0x20] sm:$0xff] %v2705
  %2722 = vst [vmem:[#allocation3 + $0x28] sm:$0xff] %v2706
  %2723 = vst [vmem:[#allocation3 + $0x30] sm:$0xff] %v2707
  %2724 = vst [vmem:[#allocation3 + $0x38] sm:$0xff] %v2708
  %2725 = vst [vmem:[#allocation3 + $0x40] sm:$0xff] %v2709
  %2726 = vst [vmem:[#allocation3 + $0x48] sm:$0xff] %v2710
  %2727 = vst [vmem:[#allocation3 + $0x50] sm:$0xff] %v2711
  %2728 = vst [vmem:[#allocation3 + $0x58] sm:$0xff] %v2712
  %2729 = vst [vmem:[#allocation3 + $0x60] sm:$0xff] %v2713
  %2730 = vst [vmem:[#allocation3 + $0x68] sm:$0xff] %v2714
  %2731 = vst [vmem:[#allocation3 + $0x70] sm:$0xff] %v2715
  %2732 = vst [vmem:[#allocation3 + $0x78] sm:$0xff] %v2716
  %s2733 = scalar_lea.vmem [#allocation2], 16
  %v2734 = vld [vmem:[%s2733] sm:$0xf]
  %v2735 = vld [vmem:[%s2733 + $0x8] sm:$0xf]
  %v2736 = vld [vmem:[%s2733 + $0x10] sm:$0xf]
  %v2737 = vld [vmem:[%s2733 + $0x18] sm:$0xf]
  %v2738 = vld [vmem:[%s2733 + $0x20] sm:$0xf]
  %v2739 = vld [vmem:[%s2733 + $0x28] sm:$0xf]
  %v2740 = vld [vmem:[%s2733 + $0x30] sm:$0xf]
  %v2741 = vld [vmem:[%s2733 + $0x38] sm:$0xf]
  %v2742 = vld [vmem:[%s2733 + $0x50] sm:$0xf]
  %v2743 = vld [vmem:[%s2733 + $0x58] sm:$0xf]
  %v2744 = vld [vmem:[%s2733 + $0x60] sm:$0xf]
  %v2745 = vld [vmem:[%s2733 + $0x68] sm:$0xf]
  %v2746 = vld [vmem:[%s2733 + $0x70] sm:$0xf]
  %v2747 = vld [vmem:[%s2733 + $0x78] sm:$0xf]
  %v2748 = vld [vmem:[%s2733 + $0x80] sm:$0xf]
  %v2749 = vld [vmem:[%s2733 + $0x88] sm:$0xf]
  %v2750 = vld [vmem:[#allocation3] sm:$0xff]
  %v2751 = vld [vmem:[#allocation3 + $0x8] sm:$0xff]
  %v2752 = vld [vmem:[#allocation3 + $0x10] sm:$0xff]
  %v2753 = vld [vmem:[#allocation3 + $0x18] sm:$0xff]
  %v2754 = vld [vmem:[#allocation3 + $0x20] sm:$0xff]
  %v2755 = vld [vmem:[#allocation3 + $0x28] sm:$0xff]
  %v2756 = vld [vmem:[#allocation3 + $0x30] sm:$0xff]
  %v2757 = vld [vmem:[#allocation3 + $0x38] sm:$0xff]
  %v2758 = vld [vmem:[#allocation3 + $0x40] sm:$0xff]
  %v2759 = vld [vmem:[#allocation3 + $0x48] sm:$0xff]
  %v2760 = vld [vmem:[#allocation3 + $0x50] sm:$0xff]
  %v2761 = vld [vmem:[#allocation3 + $0x58] sm:$0xff]
  %v2762 = vld [vmem:[#allocation3 + $0x60] sm:$0xff]
  %v2763 = vld [vmem:[#allocation3 + $0x68] sm:$0xff]
  %v2764 = vld [vmem:[#allocation3 + $0x70] sm:$0xff]
  %v2765 = vld [vmem:[#allocation3 + $0x78] sm:$0xff]
  %s2766 = scalar_lea.vmem %s3, 48
  %v2767 = vld [vmem:[%s2766] sm:$0xf]
  %v2768 = vld [vmem:[%s2766 + $0x4] sm:$0xf]
  %v2785 = vunpack.c.l.b16 %v2734
  %v2786 = vunpack.c.l.b16 %v2735
  %v2787 = vunpack.c.l.b16 %v2736
  %v2788 = vunpack.c.l.b16 %v2737
  %v2789 = vunpack.c.l.b16 %v2738
  %v2790 = vunpack.c.l.b16 %v2739
  %v2791 = vunpack.c.l.b16 %v2740
  %v2792 = vunpack.c.l.b16 %v2741
  %v2793 = vunpack.c.l.b16 %v2742
  %v2794 = vunpack.c.l.b16 %v2743
  %v2795 = vunpack.c.l.b16 %v2744
  %v2796 = vunpack.c.l.b16 %v2745
  %v2797 = vunpack.c.l.b16 %v2746
  %v2798 = vunpack.c.l.b16 %v2747
  %v2799 = vunpack.c.l.b16 %v2748
  %v2800 = vunpack.c.l.b16 %v2749
  %v2801 = vpack.c.b16 %v2786, %v2785
  %v2802 = vpack.c.b16 %v2788, %v2787
  %v2803 = vpack.c.b16 %v2790, %v2789
  %v2804 = vpack.c.b16 %v2792, %v2791
  %v2805 = vpack.c.b16 %v2794, %v2793
  %v2806 = vpack.c.b16 %v2796, %v2795
  %v2807 = vpack.c.b16 %v2798, %v2797
  %v2808 = vpack.c.b16 %v2800, %v2799
  %v2811 = vunpack.c.l.b16 %v2767
  %v2812 = vunpack.c.l.b16 %v2768
  %v2813 = vpack.c.b16 %v2812, %v2811
  %v2816 = vsel %vm763, %v2801, 0
  %v2819 = vsel %vm763, %v2802, 0
  %v2822 = vsel %vm763, %v2803, 0
  %v2825 = vsel %vm763, %v2804, 0
  %v2828 = vsel %vm763, %v2805, 0
  %v2831 = vsel %vm763, %v2806, 0
  %v2834 = vsel %vm763, %v2807, 0
  %v2837 = vsel %vm763, %v2808, 0
  %2839 = vmatprep.subr.bf16.mxu0 0
  %2840 = vmatpush1.bf16.msra.mxu0 %v2813
  %2841 = vmatprep.subr.bf16.mxu0 0
  %2842 = vmatpush1.bf16.msra.mxu0 0
  %2843 = vmatprep.subr.bf16.mxu0 0
  %2844 = vmatpush1.bf16.msra.mxu0 0
  %2845 = vmatprep.subr.bf16.mxu0 0
  %2846 = vmatpush1.bf16.msra.mxu0 0
  %2847 = vmatprep.subr.bf16.mxu0 0
  %2848 = vmatpush1.bf16.msra.mxu0 0
  %2849 = vmatprep.subr.bf16.mxu0 0
  %2850 = vmatpush1.bf16.msra.mxu0 0
  %2851 = vmatprep.subr.bf16.mxu0 0
  %2852 = vmatpush1.bf16.msra.mxu0 0
  %2853 = vmatprep.subr.bf16.mxu0 0
  %2854 = vmatpush1.bf16.msra.mxu0 0
  %2855 = vmatprep.subr.bf16.mxu0 0
  %2856 = vmatpush1.bf16.msra.mxu0 0
  %2857 = vmatprep.subr.bf16.mxu0 0
  %2858 = vmatpush1.bf16.msra.mxu0 0
  %2859 = vmatprep.subr.bf16.mxu0 0
  %2860 = vmatpush1.bf16.msra.mxu0 0
  %2861 = vmatprep.subr.bf16.mxu0 0
  %2862 = vmatpush1.bf16.msra.mxu0 0
  %2863 = vmatprep.subr.bf16.mxu0 0
  %2864 = vmatpush1.bf16.msra.mxu0 0
  %2865 = vmatprep.subr.bf16.mxu0 0
  %2866 = vmatpush1.bf16.msra.mxu0 0
  %2867 = vmatprep.subr.bf16.mxu0 0
  %2868 = vmatpush1.bf16.msra.mxu0 0
  %2869 = vmatprep.subr.bf16.mxu0 0
  %2870 = vmatpush1.bf16.msra.mxu0 0
  %2871 = vmatprep.mubr.bf16.mxu0 0
  %2872 = vmatmul.mubr.bf16.gmra.mrb[0].mxu0 %v2816
  %v2873 = vpop.f32.mrb[0].mxu0
  %v2874 = vadd.f32 0.0, %v2873
  %v2875 = vpop.f32.mrb[0].mxu0
  %v2876 = vpop.f32.mrb[0].mxu0
  %v2877 = vadd.f32 0.0, %v2876
  %v2878 = vpop.f32.mrb[0].mxu0
  %2879 = vmatprep.mubr.bf16.mxu0 0
  %2880 = vmatmul.mubr.bf16.gmra.mrb[0].mxu0 %v2819
  %v2881 = vpop.f32.mrb[0].mxu0
  %v2882 = vadd.f32 0.0, %v2881
  %v2883 = vpop.f32.mrb[0].mxu0
  %v2884 = vpop.f32.mrb[0].mxu0
  %v2885 = vadd.f32 0.0, %v2884
  %v2886 = vpop.f32.mrb[0].mxu0
  %2887 = vmatprep.mubr.bf16.mxu0 0
  %2888 = vmatmul.mubr.bf16.gmra.mrb[0].mxu0 %v2822
  %v2889 = vpop.f32.mrb[0].mxu0
  %v2890 = vadd.f32 0.0, %v2889
  %v2891 = vpop.f32.mrb[0].mxu0
  %v2892 = vpop.f32.mrb[0].mxu0
  %v2893 = vadd.f32 0.0, %v2892
  %v2894 = vpop.f32.mrb[0].mxu0
  %2895 = vmatprep.mubr.bf16.mxu0 0
  %2896 = vmatmul.mubr.bf16.gmra.mrb[0].mxu0 %v2825
  %v2897 = vpop.f32.mrb[0].mxu0
  %v2898 = vadd.f32 0.0, %v2897
  %v2899 = vpop.f32.mrb[0].mxu0
  %v2900 = vpop.f32.mrb[0].mxu0
  %v2901 = vadd.f32 0.0, %v2900
  %v2902 = vpop.f32.mrb[0].mxu0
  %2903 = vmatprep.mubr.bf16.mxu0 0
  %2904 = vmatmul.mubr.bf16.gmra.mrb[0].mxu0 %v2828
  %v2905 = vpop.f32.mrb[0].mxu0
  %v2906 = vadd.f32 0.0, %v2905
  %v2907 = vpop.f32.mrb[0].mxu0
  %v2908 = vpop.f32.mrb[0].mxu0
  %v2909 = vadd.f32 0.0, %v2908
  %v2910 = vpop.f32.mrb[0].mxu0
  %2911 = vmatprep.mubr.bf16.mxu0 0
  %2912 = vmatmul.mubr.bf16.gmra.mrb[0].mxu0 %v2831
  %v2913 = vpop.f32.mrb[0].mxu0
  %v2914 = vadd.f32 0.0, %v2913
  %v2915 = vpop.f32.mrb[0].mxu0
  %v2916 = vpop.f32.mrb[0].mxu0
  %v2917 = vadd.f32 0.0, %v2916
  %v2918 = vpop.f32.mrb[0].mxu0
  %2919 = vmatprep.mubr.bf16.mxu0 0
  %2920 = vmatmul.mubr.bf16.gmra.mrb[0].mxu0 %v2834
  %v2921 = vpop.f32.mrb[0].mxu0
  %v2922 = vadd.f32 0.0, %v2921
  %v2923 = vpop.f32.mrb[0].mxu0
  %v2924 = vpop.f32.mrb[0].mxu0
  %v2925 = vadd.f32 0.0, %v2924
  %v2926 = vpop.f32.mrb[0].mxu0
  %2927 = vmatprep.mubr.bf16.mxu0 0
  %2928 = vmatmul.mubr.bf16.gmra.mrb[0].mxu0 %v2837
  %v2929 = vpop.f32.mrb[0].mxu0
  %v2930 = vadd.f32 0.0, %v2929
  %v2931 = vpop.f32.mrb[0].mxu0
  %v2932 = vpop.f32.mrb[0].mxu0
  %v2933 = vadd.f32 0.0, %v2932
  %v2934 = vpop.f32.mrb[0].mxu0
  %2935 = vdwg.mxu0
  %v2936 = vadd.f32 %v2750, %v2874
  %v2937 = vadd.f32 %v2751, %v2877
  %v2938 = vadd.f32 %v2752, %v2882
  %v2939 = vadd.f32 %v2753, %v2885
  %v2940 = vadd.f32 %v2754, %v2890
  %v2941 = vadd.f32 %v2755, %v2893
  %v2942 = vadd.f32 %v2756, %v2898
  %v2943 = vadd.f32 %v2757, %v2901
  %v2944 = vadd.f32 %v2758, %v2906
  %v2945 = vadd.f32 %v2759, %v2909
  %v2946 = vadd.f32 %v2760, %v2914
  %v2947 = vadd.f32 %v2761, %v2917
  %v2948 = vadd.f32 %v2762, %v2922
  %v2949 = vadd.f32 %v2763, %v2925
  %v2950 = vadd.f32 %v2764, %v2930
  %v2951 = vadd.f32 %v2765, %v2933
  %2952 = vst [vmem:[#allocation3] sm:$0xff] %v2936
  %2953 = vst [vmem:[#allocation3 + $0x8] sm:$0xff] %v2937
  %2954 = vst [vmem:[#allocation3 + $0x10] sm:$0xff] %v2938
  %2955 = vst [vmem:[#allocation3 + $0x18] sm:$0xff] %v2939
  %2956 = vst [vmem:[#allocation3 + $0x20] sm:$0xff] %v2940
  %2957 = vst [vmem:[#allocation3 + $0x28] sm:$0xff] %v2941
  %2958 = vst [vmem:[#allocation3 + $0x30] sm:$0xff] %v2942
  %2959 = vst [vmem:[#allocation3 + $0x38] sm:$0xff] %v2943
  %2960 = vst [vmem:[#allocation3 + $0x40] sm:$0xff] %v2944
  %2961 = vst [vmem:[#allocation3 + $0x48] sm:$0xff] %v2945
  %2962 = vst [vmem:[#allocation3 + $0x50] sm:$0xff] %v2946
  %2963 = vst [vmem:[#allocation3 + $0x58] sm:$0xff] %v2947
  %2964 = vst [vmem:[#allocation3 + $0x60] sm:$0xff] %v2948
  %2965 = vst [vmem:[#allocation3 + $0x68] sm:$0xff] %v2949
  %2966 = vst [vmem:[#allocation3 + $0x70] sm:$0xff] %v2950
  %2967 = vst [vmem:[#allocation3 + $0x78] sm:$0xff] %v2951
  %v2968 = vld [vmem:[%s2733] sm:$0xf]
  %v2969 = vld [vmem:[%s2733 + $0x4] sm:$0x1]
  %v2970 = vld [vmem:[%s2733 + $0x8] sm:$0xf]
  %v2971 = vld [vmem:[%s2733 + $0xc] sm:$0x1]
  %v2972 = vld [vmem:[%s2733 + $0x10] sm:$0xf]
  %v2973 = vld [vmem:[%s2733 + $0x14] sm:$0x1]
  %v2974 = vld [vmem:[%s2733 + $0x18] sm:$0xf]
  %v2975 = vld [vmem:[%s2733 + $0x1c] sm:$0x1]
  %v2976 = vld [vmem:[%s2733 + $0x20] sm:$0xf]
  %v2977 = vld [vmem:[%s2733 + $0x24] sm:$0x1]
  %v2978 = vld [vmem:[%s2733 + $0x28] sm:$0xf]
  %v2979 = vld [vmem:[%s2733 + $0x2c] sm:$0x1]
  %v2980 = vld [vmem:[%s2733 + $0x30] sm:$0xf]
  %v2981 = vld [vmem:[%s2733 + $0x34] sm:$0x1]
  %v2982 = vld [vmem:[%s2733 + $0x38] sm:$0xf]
  %v2983 = vld [vmem:[%s2733 + $0x3c] sm:$0x1]
  %v2984 = vld [vmem:[%s2733 + $0x50] sm:$0xf]
  %v2985 = vld [vmem:[%s2733 + $0x54] sm:$0x1]
  %v2986 = vld [vmem:[%s2733 + $0x58] sm:$0xf]
  %v2987 = vld [vmem:[%s2733 + $0x5c] sm:$0x1]
  %v2988 = vld [vmem:[%s2733 + $0x60] sm:$0xf]
  %v2989 = vld [vmem:[%s2733 + $0x64] sm:$0x1]
  %v2990 = vld [vmem:[%s2733 + $0x68] sm:$0xf]
  %v2991 = vld [vmem:[%s2733 + $0x6c] sm:$0x1]
  %v2992 = vld [vmem:[%s2733 + $0x70] sm:$0xf]
  %v2993 = vld [vmem:[%s2733 + $0x74] sm:$0x1]
  %v2994 = vld [vmem:[%s2733 + $0x78] sm:$0xf]
  %v2995 = vld [vmem:[%s2733 + $0x7c] sm:$0x1]
  %v2996 = vld [vmem:[%s2733 + $0x80] sm:$0xf]
  %v2997 = vld [vmem:[%s2733 + $0x84] sm:$0x1]
  %v2998 = vld [vmem:[%s2733 + $0x88] sm:$0xf]
  %v2999 = vld [vmem:[%s2733 + $0x8c] sm:$0x1]
  %v3001 = vshrl.u32 %v2968, 16
  %v3003 = vrot.slane %v3001, 4
  %v3004 = vshll.u32 %v2968, 16
  %v3006 = vrot.slane %v3004, 5
  %v3007 = vor.u32 %v3003, %v3006
  %v3008 = vrot.slane %v3007, 4
  %v3010 = vshll.u32 %v2969, 16
  %v3012 = vrot.slane %v3010, 5
  %v3013 = vsel %vm951, %v3008, %v3012
  %v3015 = vshrl.u32 %v2970, 16
  %v3017 = vrot.slane %v3015, 4
  %v3018 = vshll.u32 %v2970, 16
  %v3020 = vrot.slane %v3018, 5
  %v3021 = vor.u32 %v3017, %v3020
  %v3022 = vrot.slane %v3021, 4
  %v3024 = vshll.u32 %v2971, 16
  %v3026 = vrot.slane %v3024, 5
  %v3027 = vsel %vm951, %v3022, %v3026
  %v3029 = vshrl.u32 %v2972, 16
  %v3031 = vrot.slane %v3029, 4
  %v3032 = vshll.u32 %v2972, 16
  %v3034 = vrot.slane %v3032, 5
  %v3035 = vor.u32 %v3031, %v3034
  %v3036 = vrot.slane %v3035, 4
  %v3038 = vshll.u32 %v2973, 16
  %v3040 = vrot.slane %v3038, 5
  %v3041 = vsel %vm951, %v3036, %v3040
  %v3043 = vshrl.u32 %v2974, 16
  %v3045 = vrot.slane %v3043, 4
  %v3046 = vshll.u32 %v2974, 16
  %v3048 = vrot.slane %v3046, 5
  %v3049 = vor.u32 %v3045, %v3048
  %v3050 = vrot.slane %v3049, 4
  %v3052 = vshll.u32 %v2975, 16
  %v3054 = vrot.slane %v3052, 5
  %v3055 = vsel %vm951, %v3050, %v3054
  %v3057 = vshrl.u32 %v2976, 16
  %v3059 = vrot.slane %v3057, 4
  %v3060 = vshll.u32 %v2976, 16
  %v3062 = vrot.slane %v3060, 5
  %v3063 = vor.u32 %v3059, %v3062
  %v3064 = vrot.slane %v3063, 4
  %v3066 = vshll.u32 %v2977, 16
  %v3068 = vrot.slane %v3066, 5
  %v3069 = vsel %vm951, %v3064, %v3068
  %v3071 = vshrl.u32 %v2978, 16
  %v3073 = vrot.slane %v3071, 4
  %v3074 = vshll.u32 %v2978, 16
  %v3076 = vrot.slane %v3074, 5
  %v3077 = vor.u32 %v3073, %v3076
  %v3078 = vrot.slane %v3077, 4
  %v3080 = vshll.u32 %v2979, 16
  %v3082 = vrot.slane %v3080, 5
  %v3083 = vsel %vm951, %v3078, %v3082
  %v3085 = vshrl.u32 %v2980, 16
  %v3087 = vrot.slane %v3085, 4
  %v3088 = vshll.u32 %v2980, 16
  %v3090 = vrot.slane %v3088, 5
  %v3091 = vor.u32 %v3087, %v3090
  %v3092 = vrot.slane %v3091, 4
  %v3094 = vshll.u32 %v2981, 16
  %v3096 = vrot.slane %v3094, 5
  %v3097 = vsel %vm951, %v3092, %v3096
  %v3099 = vshrl.u32 %v2982, 16
  %v3101 = vrot.slane %v3099, 4
  %v3102 = vshll.u32 %v2982, 16
  %v3104 = vrot.slane %v3102, 5
  %v3105 = vor.u32 %v3101, %v3104
  %v3106 = vrot.slane %v3105, 4
  %v3108 = vshll.u32 %v2983, 16
  %v3110 = vrot.slane %v3108, 5
  %v3111 = vsel %vm951, %v3106, %v3110
  %v3113 = vshrl.u32 %v2984, 16
  %v3115 = vrot.slane %v3113, 4
  %v3116 = vshll.u32 %v2984, 16
  %v3118 = vrot.slane %v3116, 5
  %v3119 = vor.u32 %v3115, %v3118
  %v3120 = vrot.slane %v3119, 4
  %v3122 = vshll.u32 %v2985, 16
  %v3124 = vrot.slane %v3122, 5
  %v3125 = vsel %vm951, %v3120, %v3124
  %v3127 = vshrl.u32 %v2986, 16
  %v3129 = vrot.slane %v3127, 4
  %v3130 = vshll.u32 %v2986, 16
  %v3132 = vrot.slane %v3130, 5
  %v3133 = vor.u32 %v3129, %v3132
  %v3134 = vrot.slane %v3133, 4
  %v3136 = vshll.u32 %v2987, 16
  %v3138 = vrot.slane %v3136, 5
  %v3139 = vsel %vm951, %v3134, %v3138
  %v3141 = vshrl.u32 %v2988, 16
  %v3143 = vrot.slane %v3141, 4
  %v3144 = vshll.u32 %v2988, 16
  %v3146 = vrot.slane %v3144, 5
  %v3147 = vor.u32 %v3143, %v3146
  %v3148 = vrot.slane %v3147, 4
  %v3150 = vshll.u32 %v2989, 16
  %v3152 = vrot.slane %v3150, 5
  %v3153 = vsel %vm951, %v3148, %v3152
  %v3155 = vshrl.u32 %v2990, 16
  %v3157 = vrot.slane %v3155, 4
  %v3158 = vshll.u32 %v2990, 16
  %v3160 = vrot.slane %v3158, 5
  %v3161 = vor.u32 %v3157, %v3160
  %v3162 = vrot.slane %v3161, 4
  %v3164 = vshll.u32 %v2991, 16
  %v3166 = vrot.slane %v3164, 5
  %v3167 = vsel %vm951, %v3162, %v3166
  %v3169 = vshrl.u32 %v2992, 16
  %v3171 = vrot.slane %v3169, 4
  %v3172 = vshll.u32 %v2992, 16
  %v3174 = vrot.slane %v3172, 5
  %v3175 = vor.u32 %v3171, %v3174
  %v3176 = vrot.slane %v3175, 4
  %v3178 = vshll.u32 %v2993, 16
  %v3180 = vrot.slane %v3178, 5
  %v3181 = vsel %vm951, %v3176, %v3180
  %v3183 = vshrl.u32 %v2994, 16
  %v3185 = vrot.slane %v3183, 4
  %v3186 = vshll.u32 %v2994, 16
  %v3188 = vrot.slane %v3186, 5
  %v3189 = vor.u32 %v3185, %v3188
  %v3190 = vrot.slane %v3189, 4
  %v3192 = vshll.u32 %v2995, 16
  %v3194 = vrot.slane %v3192, 5
  %v3195 = vsel %vm951, %v3190, %v3194
  %v3197 = vshrl.u32 %v2996, 16
  %v3199 = vrot.slane %v3197, 4
  %v3200 = vshll.u32 %v2996, 16
  %v3202 = vrot.slane %v3200, 5
  %v3203 = vor.u32 %v3199, %v3202
  %v3204 = vrot.slane %v3203, 4
  %v3206 = vshll.u32 %v2997, 16
  %v3208 = vrot.slane %v3206, 5
  %v3209 = vsel %vm951, %v3204, %v3208
  %v3211 = vshrl.u32 %v2998, 16
  %v3213 = vrot.slane %v3211, 4
  %v3214 = vshll.u32 %v2998, 16
  %v3216 = vrot.slane %v3214, 5
  %v3217 = vor.u32 %v3213, %v3216
  %v3218 = vrot.slane %v3217, 4
  %v3220 = vshll.u32 %v2999, 16
  %v3222 = vrot.slane %v3220, 5
  %v3223 = vsel %vm951, %v3218, %v3222
  %v3224 = vld [vmem:[#allocation3] sm:$0xff]
  %v3225 = vld [vmem:[#allocation3 + $0x8] sm:$0xff]
  %v3226 = vld [vmem:[#allocation3 + $0x10] sm:$0xff]
  %v3227 = vld [vmem:[#allocation3 + $0x18] sm:$0xff]
  %v3228 = vld [vmem:[#allocation3 + $0x20] sm:$0xff]
  %v3229 = vld [vmem:[#allocation3 + $0x28] sm:$0xff]
  %v3230 = vld [vmem:[#allocation3 + $0x30] sm:$0xff]
  %v3231 = vld [vmem:[#allocation3 + $0x38] sm:$0xff]
  %v3232 = vld [vmem:[#allocation3 + $0x40] sm:$0xff]
  %v3233 = vld [vmem:[#allocation3 + $0x48] sm:$0xff]
  %v3234 = vld [vmem:[#allocation3 + $0x50] sm:$0xff]
  %v3235 = vld [vmem:[#allocation3 + $0x58] sm:$0xff]
  %v3236 = vld [vmem:[#allocation3 + $0x60] sm:$0xff]
  %v3237 = vld [vmem:[#allocation3 + $0x68] sm:$0xff]
  %v3238 = vld [vmem:[#allocation3 + $0x70] sm:$0xff]
  %v3239 = vld [vmem:[#allocation3 + $0x78] sm:$0xff]
  %s3240 = scalar_lea.vmem %s3, 56
  %v3241 = vld [vmem:[%s3240] sm:$0xf]
  %v3242 = vld [vmem:[%s3240 + $0x4] sm:$0xf]
  %v3243 = vunpack.c.l.b16 %v3013
  %v3244 = vunpack.c.l.b16 %v3027
  %v3245 = vunpack.c.l.b16 %v3041
  %v3246 = vunpack.c.l.b16 %v3055
  %v3247 = vunpack.c.l.b16 %v3069
  %v3248 = vunpack.c.l.b16 %v3083
  %v3249 = vunpack.c.l.b16 %v3097
  %v3250 = vunpack.c.l.b16 %v3111
  %v3251 = vunpack.c.l.b16 %v3125
  %v3252 = vunpack.c.l.b16 %v3139
  %v3253 = vunpack.c.l.b16 %v3153
  %v3254 = vunpack.c.l.b16 %v3167
  %v3255 = vunpack.c.l.b16 %v3181
  %v3256 = vunpack.c.l.b16 %v3195
  %v3257 = vunpack.c.l.b16 %v3209
  %v3258 = vunpack.c.l.b16 %v3223
  %v3259 = vpack.c.b16 %v3244, %v3243
  %v3260 = vpack.c.b16 %v3246, %v3245
  %v3261 = vpack.c.b16 %v3248, %v3247
  %v3262 = vpack.c.b16 %v3250, %v3249
  %v3263 = vpack.c.b16 %v3252, %v3251
  %v3264 = vpack.c.b16 %v3254, %v3253
  %v3265 = vpack.c.b16 %v3256, %v3255
  %v3266 = vpack.c.b16 %v3258, %v3257
  %v3269 = vunpack.c.l.b16 %v3241
  %v3270 = vunpack.c.l.b16 %v3242
  %v3271 = vpack.c.b16 %v3270, %v3269
  %v3274 = vsel %vm763, %v3259, 0
  %v3277 = vsel %vm763, %v3260, 0
  %v3280 = vsel %vm763, %v3261, 0
  %v3283 = vsel %vm763, %v3262, 0
  %v3286 = vsel %vm763, %v3263, 0
  %v3289 = vsel %vm763, %v3264, 0
  %v3292 = vsel %vm763, %v3265, 0
  %v3295 = vsel %vm763, %v3266, 0
  %3297 = vmatprep.subr.bf16.mxu0 0
  %3298 = vmatpush1.bf16.msra.mxu0 %v3271
  %3299 = vmatprep.subr.bf16.mxu0 0
  %3300 = vmatpush1.bf16.msra.mxu0 0
  %3301 = vmatprep.subr.bf16.mxu0 0
  %3302 = vmatpush1.bf16.msra.mxu0 0
  %3303 = vmatprep.subr.bf16.mxu0 0
  %3304 = vmatpush1.bf16.msra.mxu0 0
  %3305 = vmatprep.subr.bf16.mxu0 0
  %3306 = vmatpush1.bf16.msra.mxu0 0
  %3307 = vmatprep.subr.bf16.mxu0 0
  %3308 = vmatpush1.bf16.msra.mxu0 0
  %3309 = vmatprep.subr.bf16.mxu0 0
  %3310 = vmatpush1.bf16.msra.mxu0 0
  %3311 = vmatprep.subr.bf16.mxu0 0
  %3312 = vmatpush1.bf16.msra.mxu0 0
  %3313 = vmatprep.subr.bf16.mxu0 0
  %3314 = vmatpush1.bf16.msra.mxu0 0
  %3315 = vmatprep.subr.bf16.mxu0 0
  %3316 = vmatpush1.bf16.msra.mxu0 0
  %3317 = vmatprep.subr.bf16.mxu0 0
  %3318 = vmatpush1.bf16.msra.mxu0 0
  %3319 = vmatprep.subr.bf16.mxu0 0
  %3320 = vmatpush1.bf16.msra.mxu0 0
  %3321 = vmatprep.subr.bf16.mxu0 0
  %3322 = vmatpush1.bf16.msra.mxu0 0
  %3323 = vmatprep.subr.bf16.mxu0 0
  %3324 = vmatpush1.bf16.msra.mxu0 0
  %3325 = vmatprep.subr.bf16.mxu0 0
  %3326 = vmatpush1.bf16.msra.mxu0 0
  %3327 = vmatprep.subr.bf16.mxu0 0
  %3328 = vmatpush1.bf16.msra.mxu0 0
  %3329 = vmatprep.mubr.bf16.mxu0 0
  %3330 = vmatmul.mubr.bf16.gmra.mrb[0].mxu0 %v3274
  %v3331 = vpop.f32.mrb[0].mxu0
  %v3332 = vadd.f32 0.0, %v3331
  %v3333 = vpop.f32.mrb[0].mxu0
  %v3334 = vpop.f32.mrb[0].mxu0
  %v3335 = vadd.f32 0.0, %v3334
  %v3336 = vpop.f32.mrb[0].mxu0
  %3337 = vmatprep.mubr.bf16.mxu0 0
  %3338 = vmatmul.mubr.bf16.gmra.mrb[0].mxu0 %v3277
  %v3339 = vpop.f32.mrb[0].mxu0
  %v3340 = vadd.f32 0.0, %v3339
  %v3341 = vpop.f32.mrb[0].mxu0
  %v3342 = vpop.f32.mrb[0].mxu0
  %v3343 = vadd.f32 0.0, %v3342
  %v3344 = vpop.f32.mrb[0].mxu0
  %3345 = vmatprep.mubr.bf16.mxu0 0
  %3346 = vmatmul.mubr.bf16.gmra.mrb[0].mxu0 %v3280
  %v3347 = vpop.f32.mrb[0].mxu0
  %v3348 = vadd.f32 0.0, %v3347
  %v3349 = vpop.f32.mrb[0].mxu0
  %v3350 = vpop.f32.mrb[0].mxu0
  %v3351 = vadd.f32 0.0, %v3350
  %v3352 = vpop.f32.mrb[0].mxu0
  %3353 = vmatprep.mubr.bf16.mxu0 0
  %3354 = vmatmul.mubr.bf16.gmra.mrb[0].mxu0 %v3283
  %v3355 = vpop.f32.mrb[0].mxu0
  %v3356 = vadd.f32 0.0, %v3355
  %v3357 = vpop.f32.mrb[0].mxu0
  %v3358 = vpop.f32.mrb[0].mxu0
  %v3359 = vadd.f32 0.0, %v3358
  %v3360 = vpop.f32.mrb[0].mxu0
  %3361 = vmatprep.mubr.bf16.mxu0 0
  %3362 = vmatmul.mubr.bf16.gmra.mrb[0].mxu0 %v3286
  %v3363 = vpop.f32.mrb[0].mxu0
  %v3364 = vadd.f32 0.0, %v3363
  %v3365 = vpop.f32.mrb[0].mxu0
  %v3366 = vpop.f32.mrb[0].mxu0
  %v3367 = vadd.f32 0.0, %v3366
  %v3368 = vpop.f32.mrb[0].mxu0
  %3369 = vmatprep.mubr.bf16.mxu0 0
  %3370 = vmatmul.mubr.bf16.gmra.mrb[0].mxu0 %v3289
  %v3371 = vpop.f32.mrb[0].mxu0
  %v3372 = vadd.f32 0.0, %v3371
  %v3373 = vpop.f32.mrb[0].mxu0
  %v3374 = vpop.f32.mrb[0].mxu0
  %v3375 = vadd.f32 0.0, %v3374
  %v3376 = vpop.f32.mrb[0].mxu0
  %3377 = vmatprep.mubr.bf16.mxu0 0
  %3378 = vmatmul.mubr.bf16.gmra.mrb[0].mxu0 %v3292
  %v3379 = vpop.f32.mrb[0].mxu0
  %v3380 = vadd.f32 0.0, %v3379
  %v3381 = vpop.f32.mrb[0].mxu0
  %v3382 = vpop.f32.mrb[0].mxu0
  %v3383 = vadd.f32 0.0, %v3382
  %v3384 = vpop.f32.mrb[0].mxu0
  %3385 = vmatprep.mubr.bf16.mxu0 0
  %3386 = vmatmul.mubr.bf16.gmra.mrb[0].mxu0 %v3295
  %v3387 = vpop.f32.mrb[0].mxu0
  %v3388 = vadd.f32 0.0, %v3387
  %v3389 = vpop.f32.mrb[0].mxu0
  %v3390 = vpop.f32.mrb[0].mxu0
  %v3391 = vadd.f32 0.0, %v3390
  %v3392 = vpop.f32.mrb[0].mxu0
  %3393 = vdwg.mxu0
  %v3394 = vadd.f32 %v3224, %v3332
  %v3395 = vadd.f32 %v3225, %v3335
  %v3396 = vadd.f32 %v3226, %v3340
  %v3397 = vadd.f32 %v3227, %v3343
  %v3398 = vadd.f32 %v3228, %v3348
  %v3399 = vadd.f32 %v3229, %v3351
  %v3400 = vadd.f32 %v3230, %v3356
  %v3401 = vadd.f32 %v3231, %v3359
  %v3402 = vadd.f32 %v3232, %v3364
  %v3403 = vadd.f32 %v3233, %v3367
  %v3404 = vadd.f32 %v3234, %v3372
  %v3405 = vadd.f32 %v3235, %v3375
  %v3406 = vadd.f32 %v3236, %v3380
  %v3407 = vadd.f32 %v3237, %v3383
  %v3408 = vadd.f32 %v3238, %v3388
  %v3409 = vadd.f32 %v3239, %v3391
  %3410 = vst [vmem:[#allocation3] sm:$0xff] %v3394
  %3411 = vst [vmem:[#allocation3 + $0x8] sm:$0xff] %v3395
  %3412 = vst [vmem:[#allocation3 + $0x10] sm:$0xff] %v3396
  %3413 = vst [vmem:[#allocation3 + $0x18] sm:$0xff] %v3397
  %3414 = vst [vmem:[#allocation3 + $0x20] sm:$0xff] %v3398
  %3415 = vst [vmem:[#allocation3 + $0x28] sm:$0xff] %v3399
  %3416 = vst [vmem:[#allocation3 + $0x30] sm:$0xff] %v3400
  %3417 = vst [vmem:[#allocation3 + $0x38] sm:$0xff] %v3401
  %3418 = vst [vmem:[#allocation3 + $0x40] sm:$0xff] %v3402
  %3419 = vst [vmem:[#allocation3 + $0x48] sm:$0xff] %v3403
  %3420 = vst [vmem:[#allocation3 + $0x50] sm:$0xff] %v3404
  %3421 = vst [vmem:[#allocation3 + $0x58] sm:$0xff] %v3405
  %3422 = vst [vmem:[#allocation3 + $0x60] sm:$0xff] %v3406
  %3423 = vst [vmem:[#allocation3 + $0x68] sm:$0xff] %v3407
  %3424 = vst [vmem:[#allocation3 + $0x70] sm:$0xff] %v3408
  %3425 = vst [vmem:[#allocation3 + $0x78] sm:$0xff] %v3409
  %v3426 = vld [vmem:[%s2733] sm:$0xe]
  %v3427 = vld [vmem:[%s2733 + $0x4] sm:$0x1]
  %v3428 = vld [vmem:[%s2733 + $0x8] sm:$0xe]
  %v3429 = vld [vmem:[%s2733 + $0xc] sm:$0x1]
  %v3430 = vld [vmem:[%s2733 + $0x10] sm:$0xe]
  %v3431 = vld [vmem:[%s2733 + $0x14] sm:$0x1]
  %v3432 = vld [vmem:[%s2733 + $0x18] sm:$0xe]
  %v3433 = vld [vmem:[%s2733 + $0x1c] sm:$0x1]
  %v3434 = vld [vmem:[%s2733 + $0x20] sm:$0xe]
  %v3435 = vld [vmem:[%s2733 + $0x24] sm:$0x1]
  %v3436 = vld [vmem:[%s2733 + $0x28] sm:$0xe]
  %v3437 = vld [vmem:[%s2733 + $0x2c] sm:$0x1]
  %v3438 = vld [vmem:[%s2733 + $0x30] sm:$0xe]
  %v3439 = vld [vmem:[%s2733 + $0x34] sm:$0x1]
  %v3440 = vld [vmem:[%s2733 + $0x38] sm:$0xe]
  %v3441 = vld [vmem:[%s2733 + $0x3c] sm:$0x1]
  %v3442 = vld [vmem:[%s2733 + $0x50] sm:$0xe]
  %v3443 = vld [vmem:[%s2733 + $0x54] sm:$0x1]
  %v3444 = vld [vmem:[%s2733 + $0x58] sm:$0xe]
  %v3445 = vld [vmem:[%s2733 + $0x5c] sm:$0x1]
  %v3446 = vld [vmem:[%s2733 + $0x60] sm:$0xe]
  %v3447 = vld [vmem:[%s2733 + $0x64] sm:$0x1]
  %v3448 = vld [vmem:[%s2733 + $0x68] sm:$0xe]
  %v3449 = vld [vmem:[%s2733 + $0x6c] sm:$0x1]
  %v3450 = vld [vmem:[%s2733 + $0x70] sm:$0xe]
  %v3451 = vld [vmem:[%s2733 + $0x74] sm:$0x1]
  %v3452 = vld [vmem:[%s2733 + $0x78] sm:$0xe]
  %v3453 = vld [vmem:[%s2733 + $0x7c] sm:$0x1]
  %v3454 = vld [vmem:[%s2733 + $0x80] sm:$0xe]
  %v3455 = vld [vmem:[%s2733 + $0x84] sm:$0x1]
  %v3456 = vld [vmem:[%s2733 + $0x88] sm:$0xe]
  %v3457 = vld [vmem:[%s2733 + $0x8c] sm:$0x1]
  %v3490 = vrot.slane %v3426, 5
  %v3491 = vrot.slane %v3490, 4
  %v3492 = vrot.slane %v3427, 5
  %v3493 = vsel %vm1444, %v3491, %v3492
  %v3494 = vrot.slane %v3428, 5
  %v3495 = vrot.slane %v3494, 4
  %v3496 = vrot.slane %v3429, 5
  %v3497 = vsel %vm1444, %v3495, %v3496
  %v3498 = vrot.slane %v3430, 5
  %v3499 = vrot.slane %v3498, 4
  %v3500 = vrot.slane %v3431, 5
  %v3501 = vsel %vm1444, %v3499, %v3500
  %v3502 = vrot.slane %v3432, 5
  %v3503 = vrot.slane %v3502, 4
  %v3504 = vrot.slane %v3433, 5
  %v3505 = vsel %vm1444, %v3503, %v3504
  %v3506 = vrot.slane %v3434, 5
  %v3507 = vrot.slane %v3506, 4
  %v3508 = vrot.slane %v3435, 5
  %v3509 = vsel %vm1444, %v3507, %v3508
  %v3510 = vrot.slane %v3436, 5
  %v3511 = vrot.slane %v3510, 4
  %v3512 = vrot.slane %v3437, 5
  %v3513 = vsel %vm1444, %v3511, %v3512
  %v3514 = vrot.slane %v3438, 5
  %v3515 = vrot.slane %v3514, 4
  %v3516 = vrot.slane %v3439, 5
  %v3517 = vsel %vm1444, %v3515, %v3516
  %v3518 = vrot.slane %v3440, 5
  %v3519 = vrot.slane %v3518, 4
  %v3520 = vrot.slane %v3441, 5
  %v3521 = vsel %vm1444, %v3519, %v3520
  %v3522 = vrot.slane %v3442, 5
  %v3523 = vrot.slane %v3522, 4
  %v3524 = vrot.slane %v3443, 5
  %v3525 = vsel %vm1444, %v3523, %v3524
  %v3526 = vrot.slane %v3444, 5
  %v3527 = vrot.slane %v3526, 4
  %v3528 = vrot.slane %v3445, 5
  %v3529 = vsel %vm1444, %v3527, %v3528
  %v3530 = vrot.slane %v3446, 5
  %v3531 = vrot.slane %v3530, 4
  %v3532 = vrot.slane %v3447, 5
  %v3533 = vsel %vm1444, %v3531, %v3532
  %v3534 = vrot.slane %v3448, 5
  %v3535 = vrot.slane %v3534, 4
  %v3536 = vrot.slane %v3449, 5
  %v3537 = vsel %vm1444, %v3535, %v3536
  %v3538 = vrot.slane %v3450, 5
  %v3539 = vrot.slane %v3538, 4
  %v3540 = vrot.slane %v3451, 5
  %v3541 = vsel %vm1444, %v3539, %v3540
  %v3542 = vrot.slane %v3452, 5
  %v3543 = vrot.slane %v3542, 4
  %v3544 = vrot.slane %v3453, 5
  %v3545 = vsel %vm1444, %v3543, %v3544
  %v3546 = vrot.slane %v3454, 5
  %v3547 = vrot.slane %v3546, 4
  %v3548 = vrot.slane %v3455, 5
  %v3549 = vsel %vm1444, %v3547, %v3548
  %v3550 = vrot.slane %v3456, 5
  %v3551 = vrot.slane %v3550, 4
  %v3552 = vrot.slane %v3457, 5
  %v3553 = vsel %vm1444, %v3551, %v3552
  %v3554 = vld [vmem:[#allocation3] sm:$0xff]
  %v3555 = vld [vmem:[#allocation3 + $0x8] sm:$0xff]
  %v3556 = vld [vmem:[#allocation3 + $0x10] sm:$0xff]
  %v3557 = vld [vmem:[#allocation3 + $0x18] sm:$0xff]
  %v3558 = vld [vmem:[#allocation3 + $0x20] sm:$0xff]
  %v3559 = vld [vmem:[#allocation3 + $0x28] sm:$0xff]
  %v3560 = vld [vmem:[#allocation3 + $0x30] sm:$0xff]
  %v3561 = vld [vmem:[#allocation3 + $0x38] sm:$0xff]
  %v3562 = vld [vmem:[#allocation3 + $0x40] sm:$0xff]
  %v3563 = vld [vmem:[#allocation3 + $0x48] sm:$0xff]
  %v3564 = vld [vmem:[#allocation3 + $0x50] sm:$0xff]
  %v3565 = vld [vmem:[#allocation3 + $0x58] sm:$0xff]
  %v3566 = vld [vmem:[#allocation3 + $0x60] sm:$0xff]
  %v3567 = vld [vmem:[#allocation3 + $0x68] sm:$0xff]
  %v3568 = vld [vmem:[#allocation3 + $0x70] sm:$0xff]
  %v3569 = vld [vmem:[#allocation3 + $0x78] sm:$0xff]
  %s3570 = scalar_lea.vmem %s3, 64
  %v3571 = vld [vmem:[%s3570] sm:$0xf]
  %v3572 = vld [vmem:[%s3570 + $0x4] sm:$0xf]
  %v3573 = vunpack.c.l.b16 %v3493
  %v3574 = vunpack.c.l.b16 %v3497
  %v3575 = vunpack.c.l.b16 %v3501
  %v3576 = vunpack.c.l.b16 %v3505
  %v3577 = vunpack.c.l.b16 %v3509
  %v3578 = vunpack.c.l.b16 %v3513
  %v3579 = vunpack.c.l.b16 %v3517
  %v3580 = vunpack.c.l.b16 %v3521
  %v3581 = vunpack.c.l.b16 %v3525
  %v3582 = vunpack.c.l.b16 %v3529
  %v3583 = vunpack.c.l.b16 %v3533
  %v3584 = vunpack.c.l.b16 %v3537
  %v3585 = vunpack.c.l.b16 %v3541
  %v3586 = vunpack.c.l.b16 %v3545
  %v3587 = vunpack.c.l.b16 %v3549
  %v3588 = vunpack.c.l.b16 %v3553
  %v3589 = vpack.c.b16 %v3574, %v3573
  %v3590 = vpack.c.b16 %v3576, %v3575
  %v3591 = vpack.c.b16 %v3578, %v3577
  %v3592 = vpack.c.b16 %v3580, %v3579
  %v3593 = vpack.c.b16 %v3582, %v3581
  %v3594 = vpack.c.b16 %v3584, %v3583
  %v3595 = vpack.c.b16 %v3586, %v3585
  %v3596 = vpack.c.b16 %v3588, %v3587
  %v3599 = vunpack.c.l.b16 %v3571
  %v3600 = vunpack.c.l.b16 %v3572
  %v3601 = vpack.c.b16 %v3600, %v3599
  %v3604 = vsel %vm763, %v3589, 0
  %v3607 = vsel %vm763, %v3590, 0
  %v3610 = vsel %vm763, %v3591, 0
  %v3613 = vsel %vm763, %v3592, 0
  %v3616 = vsel %vm763, %v3593, 0
  %v3619 = vsel %vm763, %v3594, 0
  %v3622 = vsel %vm763, %v3595, 0
  %v3625 = vsel %vm763, %v3596, 0
  %3627 = vmatprep.subr.bf16.mxu0 0
  %3628 = vmatpush1.bf16.msra.mxu0 %v3601
  %3629 = vmatprep.subr.bf16.mxu0 0
  %3630 = vmatpush1.bf16.msra.mxu0 0
  %3631 = vmatprep.subr.bf16.mxu0 0
  %3632 = vmatpush1.bf16.msra.mxu0 0
  %3633 = vmatprep.subr.bf16.mxu0 0
  %3634 = vmatpush1.bf16.msra.mxu0 0
  %3635 = vmatprep.subr.bf16.mxu0 0
  %3636 = vmatpush1.bf16.msra.mxu0 0
  %3637 = vmatprep.subr.bf16.mxu0 0
  %3638 = vmatpush1.bf16.msra.mxu0 0
  %3639 = vmatprep.subr.bf16.mxu0 0
  %3640 = vmatpush1.bf16.msra.mxu0 0
  %3641 = vmatprep.subr.bf16.mxu0 0
  %3642 = vmatpush1.bf16.msra.mxu0 0
  %3643 = vmatprep.subr.bf16.mxu0 0
  %3644 = vmatpush1.bf16.msra.mxu0 0
  %3645 = vmatprep.subr.bf16.mxu0 0
  %3646 = vmatpush1.bf16.msra.mxu0 0
  %3647 = vmatprep.subr.bf16.mxu0 0
  %3648 = vmatpush1.bf16.msra.mxu0 0
  %3649 = vmatprep.subr.bf16.mxu0 0
  %3650 = vmatpush1.bf16.msra.mxu0 0
  %3651 = vmatprep.subr.bf16.mxu0 0
  %3652 = vmatpush1.bf16.msra.mxu0 0
  %3653 = vmatprep.subr.bf16.mxu0 0
  %3654 = vmatpush1.bf16.msra.mxu0 0
  %3655 = vmatprep.subr.bf16.mxu0 0
  %3656 = vmatpush1.bf16.msra.mxu0 0
  %3657 = vmatprep.subr.bf16.mxu0 0
  %3658 = vmatpush1.bf16.msra.mxu0 0
  %3659 = vmatprep.mubr.bf16.mxu0 0
  %3660 = vmatmul.mubr.bf16.gmra.mrb[0].mxu0 %v3604
  %v3661 = vpop.f32.mrb[0].mxu0
  %v3662 = vadd.f32 0.0, %v3661
  %v3663 = vpop.f32.mrb[0].mxu0
  %v3664 = vpop.f32.mrb[0].mxu0
  %v3665 = vadd.f32 0.0, %v3664
  %v3666 = vpop.f32.mrb[0].mxu0
  %3667 = vmatprep.mubr.bf16.mxu0 0
  %3668 = vmatmul.mubr.bf16.gmra.mrb[0].mxu0 %v3607
  %v3669 = vpop.f32.mrb[0].mxu0
  %v3670 = vadd.f32 0.0, %v3669
  %v3671 = vpop.f32.mrb[0].mxu0
  %v3672 = vpop.f32.mrb[0].mxu0
  %v3673 = vadd.f32 0.0, %v3672
  %v3674 = vpop.f32.mrb[0].mxu0
  %3675 = vmatprep.mubr.bf16.mxu0 0
  %3676 = vmatmul.mubr.bf16.gmra.mrb[0].mxu0 %v3610
  %v3677 = vpop.f32.mrb[0].mxu0
  %v3678 = vadd.f32 0.0, %v3677
  %v3679 = vpop.f32.mrb[0].mxu0
  %v3680 = vpop.f32.mrb[0].mxu0
  %v3681 = vadd.f32 0.0, %v3680
  %v3682 = vpop.f32.mrb[0].mxu0
  %3683 = vmatprep.mubr.bf16.mxu0 0
  %3684 = vmatmul.mubr.bf16.gmra.mrb[0].mxu0 %v3613
  %v3685 = vpop.f32.mrb[0].mxu0
  %v3686 = vadd.f32 0.0, %v3685
  %v3687 = vpop.f32.mrb[0].mxu0
  %v3688 = vpop.f32.mrb[0].mxu0
  %v3689 = vadd.f32 0.0, %v3688
  %v3690 = vpop.f32.mrb[0].mxu0
  %3691 = vmatprep.mubr.bf16.mxu0 0
  %3692 = vmatmul.mubr.bf16.gmra.mrb[0].mxu0 %v3616
  %v3693 = vpop.f32.mrb[0].mxu0
  %v3694 = vadd.f32 0.0, %v3693
  %v3695 = vpop.f32.mrb[0].mxu0
  %v3696 = vpop.f32.mrb[0].mxu0
  %v3697 = vadd.f32 0.0, %v3696
  %v3698 = vpop.f32.mrb[0].mxu0
  %3699 = vmatprep.mubr.bf16.mxu0 0
  %3700 = vmatmul.mubr.bf16.gmra.mrb[0].mxu0 %v3619
  %v3701 = vpop.f32.mrb[0].mxu0
  %v3702 = vadd.f32 0.0, %v3701
  %v3703 = vpop.f32.mrb[0].mxu0
  %v3704 = vpop.f32.mrb[0].mxu0
  %v3705 = vadd.f32 0.0, %v3704
  %v3706 = vpop.f32.mrb[0].mxu0
  %3707 = vmatprep.mubr.bf16.mxu0 0
  %3708 = vmatmul.mubr.bf16.gmra.mrb[0].mxu0 %v3622
  %v3709 = vpop.f32.mrb[0].mxu0
  %v3710 = vadd.f32 0.0, %v3709
  %v3711 = vpop.f32.mrb[0].mxu0
  %v3712 = vpop.f32.mrb[0].mxu0
  %v3713 = vadd.f32 0.0, %v3712
  %v3714 = vpop.f32.mrb[0].mxu0
  %3715 = vmatprep.mubr.bf16.mxu0 0
  %3716 = vmatmul.mubr.bf16.gmra.mrb[0].mxu0 %v3625
  %v3717 = vpop.f32.mrb[0].mxu0
  %v3718 = vadd.f32 0.0, %v3717
  %v3719 = vpop.f32.mrb[0].mxu0
  %v3720 = vpop.f32.mrb[0].mxu0
  %v3721 = vadd.f32 0.0, %v3720
  %v3722 = vpop.f32.mrb[0].mxu0
  %3723 = vdwg.mxu0
  %v3724 = vadd.f32 %v3554, %v3662
  %v3725 = vadd.f32 %v3555, %v3665
  %v3726 = vadd.f32 %v3556, %v3670
  %v3727 = vadd.f32 %v3557, %v3673
  %v3728 = vadd.f32 %v3558, %v3678
  %v3729 = vadd.f32 %v3559, %v3681
  %v3730 = vadd.f32 %v3560, %v3686
  %v3731 = vadd.f32 %v3561, %v3689
  %v3732 = vadd.f32 %v3562, %v3694
  %v3733 = vadd.f32 %v3563, %v3697
  %v3734 = vadd.f32 %v3564, %v3702
  %v3735 = vadd.f32 %v3565, %v3705
  %v3736 = vadd.f32 %v3566, %v3710
  %v3737 = vadd.f32 %v3567, %v3713
  %v3738 = vadd.f32 %v3568, %v3718
  %v3739 = vadd.f32 %v3569, %v3721
  %3740 = vst [vmem:[#allocation3] sm:$0xff] %v3724
  %3741 = vst [vmem:[#allocation3 + $0x8] sm:$0xff] %v3725
  %3742 = vst [vmem:[#allocation3 + $0x10] sm:$0xff] %v3726
  %3743 = vst [vmem:[#allocation3 + $0x18] sm:$0xff] %v3727
  %3744 = vst [vmem:[#allocation3 + $0x20] sm:$0xff] %v3728
  %3745 = vst [vmem:[#allocation3 + $0x28] sm:$0xff] %v3729
  %3746 = vst [vmem:[#allocation3 + $0x30] sm:$0xff] %v3730
  %3747 = vst [vmem:[#allocation3 + $0x38] sm:$0xff] %v3731
  %3748 = vst [vmem:[#allocation3 + $0x40] sm:$0xff] %v3732
  %3749 = vst [vmem:[#allocation3 + $0x48] sm:$0xff] %v3733
  %3750 = vst [vmem:[#allocation3 + $0x50] sm:$0xff] %v3734
  %3751 = vst [vmem:[#allocation3 + $0x58] sm:$0xff] %v3735
  %3752 = vst [vmem:[#allocation3 + $0x60] sm:$0xff] %v3736
  %3753 = vst [vmem:[#allocation3 + $0x68] sm:$0xff] %v3737
  %3754 = vst [vmem:[#allocation3 + $0x70] sm:$0xff] %v3738
  %3755 = vst [vmem:[#allocation3 + $0x78] sm:$0xff] %v3739
  %v3756 = vld [vmem:[#allocation3] sm:$0xff]
  %v3757 = vld [vmem:[#allocation3 + $0x8] sm:$0xff]
  %v3758 = vld [vmem:[#allocation3 + $0x10] sm:$0xff]
  %v3759 = vld [vmem:[#allocation3 + $0x18] sm:$0xff]
  %v3760 = vld [vmem:[#allocation3 + $0x20] sm:$0xff]
  %v3761 = vld [vmem:[#allocation3 + $0x28] sm:$0xff]
  %v3762 = vld [vmem:[#allocation3 + $0x30] sm:$0xff]
  %v3763 = vld [vmem:[#allocation3 + $0x38] sm:$0xff]
  %v3764 = vld [vmem:[#allocation3 + $0x40] sm:$0xff]
  %v3765 = vld [vmem:[#allocation3 + $0x48] sm:$0xff]
  %v3766 = vld [vmem:[#allocation3 + $0x50] sm:$0xff]
  %v3767 = vld [vmem:[#allocation3 + $0x58] sm:$0xff]
  %v3768 = vld [vmem:[#allocation3 + $0x60] sm:$0xff]
  %v3769 = vld [vmem:[#allocation3 + $0x68] sm:$0xff]
  %v3770 = vld [vmem:[#allocation3 + $0x70] sm:$0xff]
  %v3771 = vld [vmem:[#allocation3 + $0x78] sm:$0xff]
  %v3772 = vmax.f32 %v3756, 0.0
  %v3773 = vmax.f32 %v3757, 0.0
  %v3774 = vmax.f32 %v3758, 0.0
  %v3775 = vmax.f32 %v3759, 0.0
  %v3776 = vmax.f32 %v3760, 0.0
  %v3777 = vmax.f32 %v3761, 0.0
  %v3778 = vmax.f32 %v3762, 0.0
  %v3779 = vmax.f32 %v3763, 0.0
  %v3780 = vmax.f32 %v3764, 0.0
  %v3781 = vmax.f32 %v3765, 0.0
  %v3782 = vmax.f32 %v3766, 0.0
  %v3783 = vmax.f32 %v3767, 0.0
  %v3784 = vmax.f32 %v3768, 0.0
  %v3785 = vmax.f32 %v3769, 0.0
  %v3786 = vmax.f32 %v3770, 0.0
  %v3787 = vmax.f32 %v3771, 0.0
  %v3788 = vpack.c.bf16 %v3773, %v3772
  %v3789 = vpack.c.bf16 %v3775, %v3774
  %v3790 = vpack.c.bf16 %v3777, %v3776
  %v3791 = vpack.c.bf16 %v3779, %v3778
  %v3792 = vpack.c.bf16 %v3781, %v3780
  %v3793 = vpack.c.bf16 %v3783, %v3782
  %v3794 = vpack.c.bf16 %v3785, %v3784
  %v3795 = vpack.c.bf16 %v3787, %v3786
  %v3804 = vunpack.c.l.b16 %v3788
  %v3805 = vunpack.c.h.b16 %v3788
  %v3806 = vunpack.c.l.b16 %v3789
  %v3807 = vunpack.c.h.b16 %v3789
  %v3808 = vunpack.c.l.b16 %v3790
  %v3809 = vunpack.c.h.b16 %v3790
  %v3810 = vunpack.c.l.b16 %v3791
  %v3811 = vunpack.c.h.b16 %v3791
  %v3812 = vunpack.c.l.b16 %v3792
  %v3813 = vunpack.c.h.b16 %v3792
  %v3814 = vunpack.c.l.b16 %v3793
  %v3815 = vunpack.c.h.b16 %v3793
  %v3816 = vunpack.c.l.b16 %v3794
  %v3817 = vunpack.c.h.b16 %v3794
  %v3818 = vunpack.c.l.b16 %v3795
  %v3819 = vunpack.c.h.b16 %v3795
  %v3820 = vpack.c.b16 %v3804, %v3804
  %v3821 = vpack.c.b16 %v3805, %v3805
  %v3822 = vpack.c.b16 %v3806, %v3806
  %v3823 = vpack.c.b16 %v3807, %v3807
  %v3824 = vpack.c.b16 %v3808, %v3808
  %v3825 = vpack.c.b16 %v3809, %v3809
  %v3826 = vpack.c.b16 %v3810, %v3810
  %v3827 = vpack.c.b16 %v3811, %v3811
  %v3828 = vpack.c.b16 %v3812, %v3812
  %v3829 = vpack.c.b16 %v3813, %v3813
  %v3830 = vpack.c.b16 %v3814, %v3814
  %v3831 = vpack.c.b16 %v3815, %v3815
  %v3832 = vpack.c.b16 %v3816, %v3816
  %v3833 = vpack.c.b16 %v3817, %v3817
  %v3834 = vpack.c.b16 %v3818, %v3818
  %v3835 = vpack.c.b16 %v3819, %v3819
  %3852 = vst [vmem:[%s5] sm:$0xf] %v3820
  %3853 = vst [vmem:[%s5 + $0x4] sm:$0xf] %v3821
  %3854 = vst [vmem:[%s5 + $0x8] sm:$0xf] %v3822
  %3855 = vst [vmem:[%s5 + $0xc] sm:$0xf] %v3823
  %3856 = vst [vmem:[%s5 + $0x10] sm:$0xf] %v3824
  %3857 = vst [vmem:[%s5 + $0x14] sm:$0xf] %v3825
  %3858 = vst [vmem:[%s5 + $0x18] sm:$0xf] %v3826
  %3859 = vst [vmem:[%s5 + $0x1c] sm:$0xf] %v3827
  %3860 = vst [vmem:[%s5 + $0x20] sm:$0xf] %v3828
  %3861 = vst [vmem:[%s5 + $0x24] sm:$0xf] %v3829
  %3862 = vst [vmem:[%s5 + $0x28] sm:$0xf] %v3830
  %3863 = vst [vmem:[%s5 + $0x2c] sm:$0xf] %v3831
  %3864 = vst [vmem:[%s5 + $0x30] sm:$0xf] %v3832
  %3865 = vst [vmem:[%s5 + $0x34] sm:$0xf] %v3833
  %3866 = vst [vmem:[%s5 + $0x38] sm:$0xf] %v3834
  %3867 = vst [vmem:[%s5 + $0x3c] sm:$0xf] %v3835
  // Predicated region
  $region22: #{resblock_pallas.1} parent=0 // pred_check
    _
  $region23: #{resblock_pallas.1} parent=0 // pred_check_branch
    %3869 = sbr.rel (0) target = $region25
  $region24: #{resblock_pallas.1} parent=0 // pred_region
    _
  $region25: #{resblock_pallas.1} parent=0 // pred_fallthru
    _
  // Predicated region
  $region26: #{resblock_pallas.1} parent=0 // pred_check
    _
  $region27: #{resblock_pallas.1} parent=0 // pred_check_branch
    %3871 = sbr.rel (0) target = $region29
  $region28: #{resblock_pallas.1} parent=0 // pred_region
    _
  $region29: #{resblock_pallas.1} parent=0 // pred_fallthru
    _

</llo_original>
